<compile_context>
chip_gen: v7x
topology: tpu7x:2x2x1
jax: 0.10.0
libtpu: 0.0.40
codegen_flags: <defaults>
</compile_context>

<pallas_src>
import jax
import jax.numpy as jnp
from jax import lax
from jax.experimental import pallas as pl
from jax.experimental.pallas import tpu as pltpu

MODEL_HIDDEN = 768    # bert-base-uncased hidden size
EMBED_DIM = 128
HIDDEN_DIM = 512
LANE = 128


def _round_up(x, m):
    return (x + m - 1) // m * m


def _choose_tb(B):
    """Batch tile: large (up to 1024) and a multiple of 16; >= 2 grid steps
    whenever possible so v7x's two TensorCores both get work."""
    if B <= 16:
        # Single block exactly covering the tiny batch (block dim == array dim
        # is always legal and needs no padding at all).
        return B
    return min(1024, _round_up(pl.cdiv(B, 2), 16))


def _classifier_kernel(s_ref, t_ref, cat_ref, emb_ref,
                       w1s_ref, w1t_ref, w1c_ref, b1_ref,
                       w2_ref, b2_ref, o_ref):
    # f32 [CLS] activations are cast to bf16 in-kernel (free VPU filler under
    # MXU/DMA slack); all matmuls accumulate in f32 on the MXU.
    s = s_ref[...].astype(jnp.bfloat16)
    t = t_ref[...].astype(jnp.bfloat16)

    # Fused embedding lookup: one_hot(category) @ emb on the MXU.  Exact,
    # because each output row sums exactly one (bf16) table row.
    tb = cat_ref.shape[0]
    ncat = emb_ref.shape[0]
    eq = cat_ref[...] == lax.broadcasted_iota(jnp.int32, (tb, ncat), 1)
    onehot = jnp.where(eq, 1.0, 0.0).astype(jnp.bfloat16)
    c = jnp.dot(onehot, emb_ref[...],
                preferred_element_type=jnp.float32).astype(jnp.bfloat16)

    # h = ReLU(concat(s, t, c) @ W1 + b1), concat fused as three partial dots.
    h = jnp.dot(s, w1s_ref[...], preferred_element_type=jnp.float32)
    h = h + jnp.dot(t, w1t_ref[...], preferred_element_type=jnp.float32)
    h = h + jnp.dot(c, w1c_ref[...], preferred_element_type=jnp.float32)
    h = jnp.maximum(h + b1_ref[...], 0.0).astype(jnp.bfloat16)

    # logits (lane-padded to 128 cols), stored bf16 for a half-width writeback.
    o_ref[...] = (jnp.dot(h, w2_ref[...], preferred_element_type=jnp.float32)
                  + b2_ref[...]).astype(o_ref.dtype)


def baseline_head(sentence_cls, subject_cls, category, params):
    """JAX wrapper: batch-tiled Pallas classifier with fused embedding gather."""
    emb_p = params["emb_pad"]
    w1_s, w1_t, w1_c = params["w1_s"], params["w1_t"], params["w1_c"]
    b1, w2p, b2p = params["b1"], params["w2_pad"], params["b2_pad"]
    n_classes = params["n_classes"]
    n_pad = w2p.shape[1]
    ncat_pad = emb_p.shape[0]

    B = sentence_cls.shape[0]
    cat2d = category.astype(jnp.int32).reshape(B, 1)

    TB = _choose_tb(B)
    grid = (pl.cdiv(B, TB),)

    def row_spec(cols):
        return pl.BlockSpec((TB, cols), lambda i: (i, 0))

    def const_spec(rows, cols):
        return pl.BlockSpec((rows, cols), lambda i: (0, 0))

    flops = (2 * B * (2 * MODEL_HIDDEN + EMBED_DIM) * HIDDEN_DIM
             + 2 * B * HIDDEN_DIM * n_pad
             + 2 * B * ncat_pad * EMBED_DIM)
    bytes_accessed = (
        (sentence_cls.size + subject_cls.size) * 4                       # f32 acts
        + B * 4                                                          # int32 ids
        + (w1_s.size + w1_t.size + w1_c.size + w2p.size + emb_p.size) * 2
        + (b1.size + b2p.size) * 4
        + B * n_pad * 2)                                                 # bf16 logits

    out = pl.pallas_call(
        _classifier_kernel,
        out_shape=jax.ShapeDtypeStruct((B, n_pad), jnp.bfloat16),
        grid=grid,
        in_specs=[
            row_spec(MODEL_HIDDEN),                    # sentence [CLS] tile (f32)
            row_spec(MODEL_HIDDEN),                    # subject  [CLS] tile (f32)
            row_spec(1),                               # category id tile (int32)
            const_spec(ncat_pad, EMBED_DIM),           # embedding table (resident)
            const_spec(MODEL_HIDDEN, HIDDEN_DIM),      # W1[:768]   (resident)
            const_spec(MODEL_HIDDEN, HIDDEN_DIM),      # W1[768:1536]
            const_spec(EMBED_DIM, HIDDEN_DIM),         # W1[1536:]
            const_spec(1, HIDDEN_DIM),                 # b1
            const_spec(HIDDEN_DIM, n_pad),             # W2 (lane-padded)
            const_spec(1, n_pad),                      # b2 (lane-padded)
        ],
        out_specs=pl.BlockSpec((TB, n_pad), lambda i: (i, 0)),
        compiler_params=pltpu.CompilerParams(
            dimension_semantics=("parallel",)),
        cost_estimate=pl.CostEstimate(flops=flops, transcendentals=0,
                                      bytes_accessed=bytes_accessed),
    )(sentence_cls.astype(jnp.float32), subject_cls.astype(jnp.float32),
      cat2d, emb_p, w1_s, w1_t, w1_c, b1, w2p, b2p)

    # Ragged-tail rows (when B % TB != 0) never reach valid rows; slice the
    # real classes out of the lane-padded logits and return f32.
    return out[:, :n_classes].astype(jnp.float32)


def init_params(key, n_categories, n_classes):
    k_emb, k_w1, k_b1, k_w2, k_b2 = jax.random.split(key, 5)
    in_dim = EMBED_DIM + 2 * MODEL_HIDDEN                       # 1664

    emb = jax.random.normal(k_emb, (n_categories, EMBED_DIM), jnp.float32)
    w1 = jax.random.normal(k_w1, (in_dim, HIDDEN_DIM), jnp.float32) * 0.02
    b1 = jax.random.normal(k_b1, (HIDDEN_DIM,), jnp.float32) * 0.02
    w2 = jax.random.normal(k_w2, (HIDDEN_DIM, n_classes), jnp.float32) * 0.02
    b2 = jax.random.normal(k_b2, (n_classes,), jnp.float32) * 0.02

    n_pad = _round_up(n_classes, LANE)
    ncat_pad = _round_up(n_categories, LANE)
    params = {
        # Embedding table row-padded to a lane-aligned row count; it stays
        # VMEM-resident inside the kernel for the fused one_hot @ emb gather.
        "emb_pad": jnp.pad(emb, ((0, ncat_pad - n_categories), (0, 0))
                           ).astype(jnp.bfloat16),
        # Pre-split + bf16-cast once (avoids per-call HBM weight copies).
        "w1_s": w1[:MODEL_HIDDEN, :].astype(jnp.bfloat16),
        "w1_t": w1[MODEL_HIDDEN:2 * MODEL_HIDDEN, :].astype(jnp.bfloat16),
        "w1_c": w1[2 * MODEL_HIDDEN:, :].astype(jnp.bfloat16),
        "b1": b1.reshape(1, -1),
        # Lane-pad the tiny output dim to 128 columns.
        "w2_pad": jnp.pad(w2, ((0, 0), (0, n_pad - n_classes))).astype(jnp.bfloat16),
        "b2_pad": jnp.pad(b2, (0, n_pad - n_classes)).reshape(1, -1),
        "n_classes": n_classes,
        # Full-precision originals, only used for the reference check.
        "emb_f32": emb, "w1_f32": w1, "b1_f32": b1, "w2_f32": w2, "b2_f32": b2,
    }
    return params


if __name__ == "__main__":
    key = jax.random.PRNGKey(0)
    n_categories, n_classes = 10, 4
    k_p, k_data = jax.random.split(key)
    params = init_params(k_p, n_categories, n_classes)

    def reference(sentence_cls, subject_cls, category):
        cat_embed = jnp.take(params["emb_f32"], category, axis=0)
        x = jnp.concatenate([sentence_cls, subject_cls, cat_embed], axis=1)
        return (jnp.maximum(x @ params["w1_f32"] + params["b1_f32"], 0.0)
                @ params["w2_f32"] + params["b2_f32"])

    # B=2 : the spec's small shape (single block covers the whole batch).
    # B=40: exercises the multi-step grid and the ragged last batch block.
    for B in (2, 40):
        k_s, k_t, k_c = jax.random.split(jax.random.fold_in(k_data, B), 3)
        # Stand-ins for the two BERT [CLS] hidden states (see TODO(synk) above).
        sentence_cls = jax.random.normal(k_s, (B, MODEL_HIDDEN), jnp.float32)
        subject_cls = jax.random.normal(k_t, (B, MODEL_HIDDEN), jnp.float32)
        category = jax.random.randint(k_c, (B,), 0, n_categories, jnp.int32)

        out = baseline_head(sentence_cls, subject_cls, category, params)
        jax.block_until_ready(out)

        ref = reference(sentence_cls, subject_cls, category)
        assert out.shape == (B, n_classes)
        # bf16 weights/activations -> loosened tolerance vs the f32 reference.
        assert jnp.allclose(out, ref, atol=3e-2, rtol=3e-2), (
            B, float(jnp.max(jnp.abs(out - ref))))

    print("KERNEL_OK")
</pallas_src>

<mosaic_0001>
module attributes {stable_mosaic.version = 11 : i64} {
  func.func @_classifier_kernel(%arg0: i32, %arg1: memref<2x768xf32, #tpu.memory_space<vmem>>, %arg2: memref<2x768xf32, #tpu.memory_space<vmem>>, %arg3: memref<2x1xi32, #tpu.memory_space<vmem>>, %arg4: memref<128x128xbf16, #tpu.memory_space<vmem>>, %arg5: memref<768x512xbf16, #tpu.memory_space<vmem>>, %arg6: memref<768x512xbf16, #tpu.memory_space<vmem>>, %arg7: memref<128x512xbf16, #tpu.memory_space<vmem>>, %arg8: memref<1x512xf32, #tpu.memory_space<vmem>>, %arg9: memref<512x128xbf16, #tpu.memory_space<vmem>>, %arg10: memref<1x128xf32, #tpu.memory_space<vmem>>, %arg11: memref<2x128xbf16, #tpu.memory_space<vmem>>) attributes {dimension_semantics = [#tpu.dimension_semantics<parallel>], iteration_bounds = array<i64: 1>, scalar_prefetch = 0 : i64, scratch_operands = 0 : i64, tpu.core_type = #tpu.core_type<tc>, window_params = [{transform_indices = @transform_0, window_bounds = array<i64: 2, 768>}, {transform_indices = @transform_1, window_bounds = array<i64: 2, 768>}, {transform_indices = @transform_2, window_bounds = array<i64: 2, 1>}, {pipeline_mode = #tpu.pipeline_mode<synchronous>, transform_indices = @transform_3, window_bounds = array<i64: 128, 128>}, {pipeline_mode = #tpu.pipeline_mode<synchronous>, transform_indices = @transform_4, window_bounds = array<i64: 768, 512>}, {pipeline_mode = #tpu.pipeline_mode<synchronous>, transform_indices = @transform_5, window_bounds = array<i64: 768, 512>}, {pipeline_mode = #tpu.pipeline_mode<synchronous>, transform_indices = @transform_6, window_bounds = array<i64: 128, 512>}, {pipeline_mode = #tpu.pipeline_mode<synchronous>, transform_indices = @transform_7, window_bounds = array<i64: 1, 512>}, {pipeline_mode = #tpu.pipeline_mode<synchronous>, transform_indices = @transform_8, window_bounds = array<i64: 512, 128>}, {pipeline_mode = #tpu.pipeline_mode<synchronous>, transform_indices = @transform_9, window_bounds = array<i64: 1, 128>}, {transform_indices = @transform_10, window_bounds = array<i64: 2, 128>}]} {
    %c0 = arith.constant 0 : index
    %c0_0 = arith.constant 0 : index
    %0 = vector.load %arg1[%c0, %c0_0] : memref<2x768xf32, #tpu.memory_space<vmem>>, vector<2x768xf32>
    %1 = arith.truncf %0 : vector<2x768xf32> to vector<2x768xbf16>
    %c0_1 = arith.constant 0 : index
    %c0_2 = arith.constant 0 : index
    %2 = vector.load %arg2[%c0_1, %c0_2] : memref<2x768xf32, #tpu.memory_space<vmem>>, vector<2x768xf32>
    %3 = arith.truncf %2 : vector<2x768xf32> to vector<2x768xbf16>
    %c0_3 = arith.constant 0 : index
    %c0_4 = arith.constant 0 : index
    %4 = vector.load %arg3[%c0_3, %c0_4] : memref<2x1xi32, #tpu.memory_space<vmem>>, vector<2x1xi32>
    %5 = tpu.iota {dimensions = array<i32: 1>} : vector<2x128xi32>
    %6 = vector.broadcast %4 : vector<2x1xi32> to vector<2x128xi32>
    %7 = arith.cmpi eq, %6, %5 : vector<2x128xi32>
    %cst = arith.constant 1.000000e+00 : f32
    %cst_5 = arith.constant 0.000000e+00 : f32
    %8 = vector.broadcast %cst : f32 to vector<2x128xf32>
    %9 = vector.broadcast %cst_5 : f32 to vector<2x128xf32>
    %10 = arith.select %7, %8, %9 : vector<2x128xi1>, vector<2x128xf32>
    %11 = arith.truncf %10 : vector<2x128xf32> to vector<2x128xbf16>
    %c0_6 = arith.constant 0 : index
    %c0_7 = arith.constant 0 : index
    %12 = vector.load %arg4[%c0_6, %c0_7] : memref<128x128xbf16, #tpu.memory_space<vmem>>, vector<128x128xbf16>
    %cst_8 = arith.constant dense<0.000000e+00> : vector<2x128xf32>
    %13 = tpu.matmul %11, %12, %cst_8 {dimension_numbers = #tpu.dot_dimension_numbers<[1], [0], [0], [1], [0, 0, 1, 1], [], []>} : vector<2x128xbf16>, vector<128x128xbf16>, vector<2x128xf32> -> vector<2x128xf32>
    %14 = arith.truncf %13 : vector<2x128xf32> to vector<2x128xbf16>
    %c0_9 = arith.constant 0 : index
    %c0_10 = arith.constant 0 : index
    %15 = vector.load %arg5[%c0_9, %c0_10] : memref<768x512xbf16, #tpu.memory_space<vmem>>, vector<768x512xbf16>
    %cst_11 = arith.constant dense<0.000000e+00> : vector<2x512xf32>
    %16 = tpu.matmul %1, %15, %cst_11 {dimension_numbers = #tpu.dot_dimension_numbers<[1], [0], [0], [1], [0, 0, 1, 1], [], []>} : vector<2x768xbf16>, vector<768x512xbf16>, vector<2x512xf32> -> vector<2x512xf32>
    %c0_12 = arith.constant 0 : index
    %c0_13 = arith.constant 0 : index
    %17 = vector.load %arg6[%c0_12, %c0_13] : memref<768x512xbf16, #tpu.memory_space<vmem>>, vector<768x512xbf16>
    %cst_14 = arith.constant dense<0.000000e+00> : vector<2x512xf32>
    %18 = tpu.matmul %3, %17, %cst_14 {dimension_numbers = #tpu.dot_dimension_numbers<[1], [0], [0], [1], [0, 0, 1, 1], [], []>} : vector<2x768xbf16>, vector<768x512xbf16>, vector<2x512xf32> -> vector<2x512xf32>
    %19 = arith.addf %16, %18 : vector<2x512xf32>
    %c0_15 = arith.constant 0 : index
    %c0_16 = arith.constant 0 : index
    %20 = vector.load %arg7[%c0_15, %c0_16] : memref<128x512xbf16, #tpu.memory_space<vmem>>, vector<128x512xbf16>
    %cst_17 = arith.constant dense<0.000000e+00> : vector<2x512xf32>
    %21 = tpu.matmul %14, %20, %cst_17 {dimension_numbers = #tpu.dot_dimension_numbers<[1], [0], [0], [1], [0, 0, 1, 1], [], []>} : vector<2x128xbf16>, vector<128x512xbf16>, vector<2x512xf32> -> vector<2x512xf32>
    %22 = arith.addf %19, %21 : vector<2x512xf32>
    %c0_18 = arith.constant 0 : index
    %c0_19 = arith.constant 0 : index
    %23 = vector.load %arg8[%c0_18, %c0_19] : memref<1x512xf32, #tpu.memory_space<vmem>>, vector<1x512xf32>
    %24 = vector.broadcast %23 : vector<1x512xf32> to vector<2x512xf32>
    %25 = arith.addf %22, %24 : vector<2x512xf32>
    %cst_20 = arith.constant 0.000000e+00 : f32
    %26 = vector.broadcast %cst_20 : f32 to vector<2x512xf32>
    %27 = arith.maximumf %25, %26 : vector<2x512xf32>
    %28 = arith.truncf %27 : vector<2x512xf32> to vector<2x512xbf16>
    %c0_21 = arith.constant 0 : index
    %c0_22 = arith.constant 0 : index
    %29 = vector.load %arg9[%c0_21, %c0_22] : memref<512x128xbf16, #tpu.memory_space<vmem>>, vector<512x128xbf16>
    %cst_23 = arith.constant dense<0.000000e+00> : vector<2x128xf32>
    %30 = tpu.matmul %28, %29, %cst_23 {dimension_numbers = #tpu.dot_dimension_numbers<[1], [0], [0], [1], [0, 0, 1, 1], [], []>} : vector<2x512xbf16>, vector<512x128xbf16>, vector<2x128xf32> -> vector<2x128xf32>
    %c0_24 = arith.constant 0 : index
    %c0_25 = arith.constant 0 : index
    %31 = vector.load %arg10[%c0_24, %c0_25] : memref<1x128xf32, #tpu.memory_space<vmem>>, vector<1x128xf32>
    %32 = vector.broadcast %31 : vector<1x128xf32> to vector<2x128xf32>
    %33 = arith.addf %30, %32 : vector<2x128xf32>
    %34 = arith.truncf %33 : vector<2x128xf32> to vector<2x128xbf16>
    %c0_26 = arith.constant 0 : index
    %c0_27 = arith.constant 0 : index
    %35 = vector.load %arg11[%c0_26, %c0_27] : memref<2x128xbf16, #tpu.memory_space<vmem>>, vector<2x128xbf16>
    tpu.vector_store %arg11[%c0_26, %c0_27], %34 {strides = array<i32>} : memref<2x128xbf16, #tpu.memory_space<vmem>>, vector<2x128xbf16>,
    return
  }
  func.func @transform_0(%arg0: i32) -> (i32, i32) {
    %c0_i32 = arith.constant 0 : i32
    %c0_i32_0 = arith.constant 0 : i32
    return %arg0, %c0_i32 : i32, i32
  }
  func.func @transform_1(%arg0: i32) -> (i32, i32) {
    %c0_i32 = arith.constant 0 : i32
    %c0_i32_0 = arith.constant 0 : i32
    return %arg0, %c0_i32 : i32, i32
  }
  func.func @transform_2(%arg0: i32) -> (i32, i32) {
    %c0_i32 = arith.constant 0 : i32
    %c0_i32_0 = arith.constant 0 : i32
    return %arg0, %c0_i32 : i32, i32
  }
  func.func @transform_3(%arg0: i32) -> (i32, i32) {
    %c0_i32 = arith.constant 0 : i32
    %c0_i32_0 = arith.constant 0 : i32
    %c0_i32_1 = arith.constant 0 : i32
    return %c0_i32, %c0_i32_0 : i32, i32
  }
  func.func @transform_4(%arg0: i32) -> (i32, i32) {
    %c0_i32 = arith.constant 0 : i32
    %c0_i32_0 = arith.constant 0 : i32
    %c0_i32_1 = arith.constant 0 : i32
    return %c0_i32, %c0_i32_0 : i32, i32
  }
  func.func @transform_5(%arg0: i32) -> (i32, i32) {
    %c0_i32 = arith.constant 0 : i32
    %c0_i32_0 = arith.constant 0 : i32
    %c0_i32_1 = arith.constant 0 : i32
    return %c0_i32, %c0_i32_0 : i32, i32
  }
  func.func @transform_6(%arg0: i32) -> (i32, i32) {
    %c0_i32 = arith.constant 0 : i32
    %c0_i32_0 = arith.constant 0 : i32
    %c0_i32_1 = arith.constant 0 : i32
    return %c0_i32, %c0_i32_0 : i32, i32
  }
  func.func @transform_7(%arg0: i32) -> (i32, i32) {
    %c0_i32 = arith.constant 0 : i32
    %c0_i32_0 = arith.constant 0 : i32
    %c0_i32_1 = arith.constant 0 : i32
    return %c0_i32, %c0_i32_0 : i32, i32
  }
  func.func @transform_8(%arg0: i32) -> (i32, i32) {
    %c0_i32 = arith.constant 0 : i32
    %c0_i32_0 = arith.constant 0 : i32
    %c0_i32_1 = arith.constant 0 : i32
    return %c0_i32, %c0_i32_0 : i32, i32
  }
  func.func @transform_9(%arg0: i32) -> (i32, i32) {
    %c0_i32 = arith.constant 0 : i32
    %c0_i32_0 = arith.constant 0 : i32
    %c0_i32_1 = arith.constant 0 : i32
    return %c0_i32, %c0_i32_0 : i32, i32
  }
  func.func @transform_10(%arg0: i32) -> (i32, i32) {
    %c0_i32 = arith.constant 0 : i32
    %c0_i32_0 = arith.constant 0 : i32
    return %arg0, %c0_i32 : i32, i32
  }
}

</mosaic_0001>

<llo_original>
// kernel: tpu_custom_call.1
$region0: #{tpu_custom_call.1}
  #allocation0 [shape = 'u32[]', space=smem, size = 0x4, offset = 0x4, fixed_abs, tag = 'smem constant byte address 0x4 - core index']
  #allocation1 [shape = 'u32[144,128]{1,0:T(1,128)}', space=vmem, size = 0x12000, scoped, tag = 'internal scratch']
  %s0 = inlined_call_operand.hbm [shape: f32[2,768], index: 0, kind: input, shape index: {}]
  %s1 = inlined_call_operand.hbm [shape: f32[2,768], index: 1, kind: input, shape index: {}]
  %s2 = inlined_call_operand.vmem [shape: s32[2,1], index: 2, kind: input, shape index: {}]
  %s3 = inlined_call_operand.hbm [shape: bf16[128,128], index: 3, kind: input, shape index: {}]
  %s4 = inlined_call_operand.hbm [shape: bf16[768,512], index: 4, kind: input, shape index: {}]
  %s5 = inlined_call_operand.hbm [shape: bf16[768,512], index: 5, kind: input, shape index: {}]
  %s6 = inlined_call_operand.hbm [shape: bf16[128,512], index: 6, kind: input, shape index: {}]
  %s7 = inlined_call_operand.vmem [shape: f32[1,512], index: 7, kind: input, shape index: {}]
  %s8 = inlined_call_operand.hbm [shape: bf16[512,128], index: 8, kind: input, shape index: {}]
  %s9 = inlined_call_operand.vmem [shape: f32[1,128], index: 9, kind: input, shape index: {}]
  %s10 = inlined_call_operand.hbm [shape: bf16[2,128], index: 10, kind: output, shape index: {}]
  %s11 = sld [smem:[#allocation0]]
  $region78: #{tpu_custom_call.1} parent=0
    _
  %s13 = ssub.s32 1, %s11
  %s14 = scalar_select 0, %s13, %s11
  $region1: #{tpu_custom_call.1} parent=0
    #allocation2 [shape = 'u8[6144]{0}', space=vmem, size = 0x1800, scoped, tag = 'input window, operand 0, single buffered']
    #allocation3 [shape = 's32[1]{0}', space=sflag, size = 0x4, scoped, tag = 'scoped memory for tpu_custom_call.1']
    #allocation4 [shape = 's32[1]{0}', space=sflag, size = 0x4, scoped, tag = 'scoped memory for tpu_custom_call.1']
    #allocation5 [shape = 'u8[6144]{0}', space=vmem, size = 0x1800, scoped, tag = 'input window, operand 1, single buffered']
    #allocation6 [shape = 's32[1]{0}', space=sflag, size = 0x4, scoped, tag = 'scoped memory for tpu_custom_call.1']
    #allocation7 [shape = 'u8[32768]{0}', space=vmem, size = 0x8000, scoped, tag = 'input window, operand 3, single buffered']
    #allocation8 [shape = 'u8[786432]{0}', space=vmem, size = 0xc0000, scoped, tag = 'input window, operand 4, single buffered']
    #allocation9 [shape = 's32[1]{0}', space=sflag, size = 0x4, scoped, tag = 'scoped memory for tpu_custom_call.1']
    #allocation10 [shape = 'u8[786432]{0}', space=vmem, size = 0xc0000, scoped, tag = 'input window, operand 5, single buffered']
    #allocation11 [shape = 'u8[131072]{0}', space=vmem, size = 0x20000, scoped, tag = 'input window, operand 6, single buffered']
    #allocation12 [shape = 's32[1]{0}', space=sflag, size = 0x4, scoped, tag = 'scoped memory for tpu_custom_call.1']
    #allocation13 [shape = 'u8[131072]{0}', space=vmem, size = 0x20000, scoped, tag = 'input window, operand 8, single buffered']
    #allocation14 [shape = 'u8[512]{0}', space=vmem, size = 0x400, scoped, tag = 'output window, operand 0, single buffered']
    %15 = vsyncpa [#allocation3], 0
    %16 = vsyncpa [#allocation6], 0
    %17 = vsyncpa [#allocation9], 0
    %18 = vsyncpa [#allocation12], 0
    %19 = vsyncpa [#allocation4], 0
    // Predicated region
    $region2: #{tpu_custom_call.1} parent=1 // pred_check
      _
    $region3: #{tpu_custom_call.1} parent=1 // pred_check_branch
      %21 = sbr.rel (0) target = $region5
    $region4: #{tpu_custom_call.1} parent=1 // pred_region
      %s23 = ssub.s32 192, 192
      %24 = vsyncadd [#allocation3], %s23
      %s26 = sshll.u32 [#allocation2], 4
      %s27 = int_to_ptr.vmem [resolvable:$true] %s26
      %29 = dma.hbm_to_vmem [thread:$0]  %s0, 192, %s27, [#allocation3]
    $region5: #{tpu_custom_call.1} parent=1 // pred_fallthru
      _
    // Predicated region
    $region6: #{tpu_custom_call.1} parent=1 // pred_check
      _
    $region7: #{tpu_custom_call.1} parent=1 // pred_check_branch
      %31 = sbr.rel (0) target = $region9
    $region8: #{tpu_custom_call.1} parent=1 // pred_region
      %s33 = ssub.s32 192, 192
      %34 = vsyncadd [#allocation6], %s33
      %s36 = sshll.u32 [#allocation5], 4
      %s37 = int_to_ptr.vmem [resolvable:$true] %s36
      %39 = dma.hbm_to_vmem [thread:$0]  %s1, 192, %s37, [#allocation6]
    $region9: #{tpu_custom_call.1} parent=1 // pred_fallthru
      _
    // Predicated region
    $region10: #{tpu_custom_call.1} parent=1 // pred_check
      _
    $region11: #{tpu_custom_call.1} parent=1 // pred_check_branch
      %41 = sbr.rel (0) target = $region13
    $region12: #{tpu_custom_call.1} parent=1 // pred_region
      _
    $region13: #{tpu_custom_call.1} parent=1 // pred_fallthru
      _
    // Predicated region
    $region14: #{tpu_custom_call.1} parent=1 // pred_check
      _
    $region15: #{tpu_custom_call.1} parent=1 // pred_check_branch
      %43 = sbr.rel (0) target = $region17
    $region16: #{tpu_custom_call.1} parent=1 // pred_region
      %s45 = ssub.s32 1024, 1024
      %46 = vsyncadd [#allocation6], %s45
      %s47 = sshll.u32 [#allocation7], 4
      %s48 = int_to_ptr.vmem [resolvable:$true] %s47
      %53 = dma.hbm_to_vmem [thread:$0]  %s3, 1024, %s48, [#allocation6], 64, 64, 4
    $region17: #{tpu_custom_call.1} parent=1 // pred_fallthru
      _
    // Predicated region
    $region18: #{tpu_custom_call.1} parent=1 // pred_check
      _
    $region19: #{tpu_custom_call.1} parent=1 // pred_check_branch
      %55 = sbr.rel (0) target = $region21
    $region20: #{tpu_custom_call.1} parent=1 // pred_region
      %s57 = ssub.s32 24576, 24576
      %58 = vsyncadd [#allocation9], %s57
      %s59 = sshll.u32 [#allocation8], 4
      %s60 = int_to_ptr.vmem [resolvable:$true] %s59
      %65 = dma.hbm_to_vmem [thread:$0]  %s4, 24576, %s60, [#allocation9], 256, 256, 16
    $region21: #{tpu_custom_call.1} parent=1 // pred_fallthru
      _
    // Predicated region
    $region22: #{tpu_custom_call.1} parent=1 // pred_check
      _
    $region23: #{tpu_custom_call.1} parent=1 // pred_check_branch
      %67 = sbr.rel (0) target = $region25
    $region24: #{tpu_custom_call.1} parent=1 // pred_region
      %s69 = ssub.s32 24576, 24576
      %70 = vsyncadd [#allocation9], %s69
      %s71 = sshll.u32 [#allocation10], 4
      %s72 = int_to_ptr.vmem [resolvable:$true] %s71
      %77 = dma.hbm_to_vmem [thread:$0]  %s5, 24576, %s72, [#allocation9], 256, 256, 16
    $region25: #{tpu_custom_call.1} parent=1 // pred_fallthru
      _
    // Predicated region
    $region26: #{tpu_custom_call.1} parent=1 // pred_check
      _
    $region27: #{tpu_custom_call.1} parent=1 // pred_check_branch
      %79 = sbr.rel (0) target = $region29
    $region28: #{tpu_custom_call.1} parent=1 // pred_region
      %s81 = ssub.s32 4096, 4096
      %82 = vsyncadd [#allocation12], %s81
      %s83 = sshll.u32 [#allocation11], 4
      %s84 = int_to_ptr.vmem [resolvable:$true] %s83
      %89 = dma.hbm_to_vmem [thread:$0]  %s6, 4096, %s84, [#allocation12], 256, 256, 16
    $region29: #{tpu_custom_call.1} parent=1 // pred_fallthru
      _
    // Predicated region
    $region30: #{tpu_custom_call.1} parent=1 // pred_check
      _
    $region31: #{tpu_custom_call.1} parent=1 // pred_check_branch
      %91 = sbr.rel (0) target = $region33
    $region32: #{tpu_custom_call.1} parent=1 // pred_region
      _
    $region33: #{tpu_custom_call.1} parent=1 // pred_fallthru
      _
    // Predicated region
    $region34: #{tpu_custom_call.1} parent=1 // pred_check
      _
    $region35: #{tpu_custom_call.1} parent=1 // pred_check_branch
      %93 = sbr.rel (0) target = $region37
    $region36: #{tpu_custom_call.1} parent=1 // pred_region
      %s95 = ssub.s32 4096, 4096
      %96 = vsyncadd [#allocation12], %s95
      %s97 = sshll.u32 [#allocation13], 4
      %s98 = int_to_ptr.vmem [resolvable:$true] %s97
      %103 = dma.hbm_to_vmem [thread:$0]  %s8, 4096, %s98, [#allocation12], 64, 64, 4
    $region37: #{tpu_custom_call.1} parent=1 // pred_fallthru
      _
    // Predicated region
    $region38: #{tpu_custom_call.1} parent=1 // pred_check
      _
    $region39: #{tpu_custom_call.1} parent=1 // pred_check_branch
      %105 = sbr.rel (0) target = $region41
    $region40: #{tpu_custom_call.1} parent=1 // pred_region
      _
    $region41: #{tpu_custom_call.1} parent=1 // pred_fallthru
      _
    // Predicated region
    $region42: #{tpu_custom_call.1} parent=1 // pred_check
      _
    $region43: #{tpu_custom_call.1} parent=1 // pred_check_branch
      %107 = sbr.rel (0) target = $region45
    $region44: #{tpu_custom_call.1} parent=1 // pred_region
      %108 = dma.done [#allocation3], 192
    $region45: #{tpu_custom_call.1} parent=1 // pred_fallthru
      _
    // Predicated region
    $region46: #{tpu_custom_call.1} parent=1 // pred_check
      _
    $region47: #{tpu_custom_call.1} parent=1 // pred_check_branch
      %110 = sbr.rel (0) target = $region49
    $region48: #{tpu_custom_call.1} parent=1 // pred_region
      %111 = dma.done [#allocation6], 192
    $region49: #{tpu_custom_call.1} parent=1 // pred_fallthru
      _
    // Predicated region
    $region50: #{tpu_custom_call.1} parent=1 // pred_check
      _
    $region51: #{tpu_custom_call.1} parent=1 // pred_check_branch
      %113 = sbr.rel (0) target = $region53
    $region52: #{tpu_custom_call.1} parent=1 // pred_region
      %114 = dma.done [#allocation6], 1024
    $region53: #{tpu_custom_call.1} parent=1 // pred_fallthru
      _
    // Predicated region
    $region54: #{tpu_custom_call.1} parent=1 // pred_check
      _
    $region55: #{tpu_custom_call.1} parent=1 // pred_check_branch
      %116 = sbr.rel (0) target = $region57
    $region56: #{tpu_custom_call.1} parent=1 // pred_region
      %117 = dma.done [#allocation9], 24576
    $region57: #{tpu_custom_call.1} parent=1 // pred_fallthru
      _
    // Predicated region
    $region58: #{tpu_custom_call.1} parent=1 // pred_check
      _
    $region59: #{tpu_custom_call.1} parent=1 // pred_check_branch
      %119 = sbr.rel (0) target = $region61
    $region60: #{tpu_custom_call.1} parent=1 // pred_region
      %120 = dma.done [#allocation9], 24576
    $region61: #{tpu_custom_call.1} parent=1 // pred_fallthru
      _
    // Predicated region
    $region62: #{tpu_custom_call.1} parent=1 // pred_check
      _
    $region63: #{tpu_custom_call.1} parent=1 // pred_check_branch
      %122 = sbr.rel (0) target = $region65
    $region64: #{tpu_custom_call.1} parent=1 // pred_region
      %123 = dma.done [#allocation12], 4096
    $region65: #{tpu_custom_call.1} parent=1 // pred_fallthru
      _
    // Predicated region
    $region66: #{tpu_custom_call.1} parent=1 // pred_check
      _
    $region67: #{tpu_custom_call.1} parent=1 // pred_check_branch
      %125 = sbr.rel (0) target = $region69
    $region68: #{tpu_custom_call.1} parent=1 // pred_region
      %126 = dma.done [#allocation12], 4096
    $region69: #{tpu_custom_call.1} parent=1 // pred_fallthru
      _
    %v128 = vld [vmem:[#allocation2] sm:$0xff]
    %v129 = vld [vmem:[#allocation2 + $0x8] sm:$0xf]
    %v132 = vcombine.high %v128, %v128
    %v134 = vunpack.c.l.s4 1983009808
    %v135 = vunpack.c.0.s8 %v134
    %v136 = vlaneseq
    %v137 = vshrl.u32 %v136, 7
    %v138 = vsub.s32 %v135, %v137
    %v139 = vrot.slane %v128, %v138
    %v141 = vunpack.c.l.s4 1983009808
    %v142 = vunpack.c.0.s8 %v141
    %v143 = vlaneseq
    %v144 = vshrl.u32 %v143, 7
    %v145 = vsub.s32 %v142, %v144
    %v146 = vrot.slane %v132, %v145
    %v147 = vcombine.high %v139, %v139
    %v148 = vcombine.high %v146, %v146
    %v150 = vunpack.c.l.s4 1983009808
    %v151 = vunpack.c.0.s8 %v150
    %v152 = vlaneseq
    %v153 = vshrl.u32 %v152, 7
    %v154 = vsub.s32 %v151, %v153
    %v155 = vrot.slane %v129, %v154
    %v156 = vcombine.high %v155, %v155
    %v163 = vpack.c.bf16 %v139, %v139
    %v164 = vpack.c.bf16 %v147, %v147
    %v165 = vpack.c.bf16 %v146, %v146
    %v166 = vpack.c.bf16 %v148, %v148
    %v167 = vpack.c.bf16 %v155, %v155
    %v168 = vpack.c.bf16 %v156, %v156
    %v169 = vld [vmem:[#allocation5] sm:$0xff]
    %v170 = vld [vmem:[#allocation5 + $0x8] sm:$0xf]
    %v173 = vcombine.high %v169, %v169
    %v175 = vunpack.c.l.s4 1983009808
    %v176 = vunpack.c.0.s8 %v175
    %v177 = vlaneseq
    %v178 = vshrl.u32 %v177, 7
    %v179 = vsub.s32 %v176, %v178
    %v180 = vrot.slane %v169, %v179
    %v182 = vunpack.c.l.s4 1983009808
    %v183 = vunpack.c.0.s8 %v182
    %v184 = vlaneseq
    %v185 = vshrl.u32 %v184, 7
    %v186 = vsub.s32 %v183, %v185
    %v187 = vrot.slane %v173, %v186
    %v188 = vcombine.high %v180, %v180
    %v189 = vcombine.high %v187, %v187
    %v191 = vunpack.c.l.s4 1983009808
    %v192 = vunpack.c.0.s8 %v191
    %v193 = vlaneseq
    %v194 = vshrl.u32 %v193, 7
    %v195 = vsub.s32 %v192, %v194
    %v196 = vrot.slane %v170, %v195
    %v197 = vcombine.high %v196, %v196
    %v204 = vpack.c.bf16 %v180, %v180
    %v205 = vpack.c.bf16 %v188, %v188
    %v206 = vpack.c.bf16 %v187, %v187
    %v207 = vpack.c.bf16 %v189, %v189
    %v208 = vpack.c.bf16 %v196, %v196
    %v209 = vpack.c.bf16 %v197, %v197
    %v210 = vld [vmem:[%s2] sm:$0x3]
    %v211 = vlaneseq
    %v212 = vand.u32 %v211, 127
    %213 = vset.pattern.permute.xlu0 0
    %214 = vperm.xlu0 %213, %v210
    %v215 = vpop.permute.xlu0 %214
    %vm216 = vcmp.eq.s32.totalorder %v215, %v212
    %v217 = vsel %vm216, 1.0, 0.0
    %v218 = vpack.c.bf16 %v217, %v217
    %v219 = vld [vmem:[#allocation7] sm:$0xf]
    %v220 = vld [vmem:[#allocation7 + $0x4] sm:$0xf]
    %v221 = vld [vmem:[#allocation7 + $0x8] sm:$0xf]
    %v222 = vld [vmem:[#allocation7 + $0xc] sm:$0xf]
    %v223 = vld [vmem:[#allocation7 + $0x10] sm:$0xf]
    %v224 = vld [vmem:[#allocation7 + $0x14] sm:$0xf]
    %v225 = vld [vmem:[#allocation7 + $0x18] sm:$0xf]
    %v226 = vld [vmem:[#allocation7 + $0x1c] sm:$0xf]
    %v227 = vld [vmem:[#allocation7 + $0x20] sm:$0xf]
    %v228 = vld [vmem:[#allocation7 + $0x24] sm:$0xf]
    %v229 = vld [vmem:[#allocation7 + $0x28] sm:$0xf]
    %v230 = vld [vmem:[#allocation7 + $0x2c] sm:$0xf]
    %v231 = vld [vmem:[#allocation7 + $0x30] sm:$0xf]
    %v232 = vld [vmem:[#allocation7 + $0x34] sm:$0xf]
    %v233 = vld [vmem:[#allocation7 + $0x38] sm:$0xf]
    %v234 = vld [vmem:[#allocation7 + $0x3c] sm:$0xf]
    %v251 = vunpack.c.l.b16 %v219
    %v252 = vunpack.c.l.b16 %v220
    %v253 = vunpack.c.l.b16 %v221
    %v254 = vunpack.c.l.b16 %v222
    %v255 = vunpack.c.l.b16 %v223
    %v256 = vunpack.c.l.b16 %v224
    %v257 = vunpack.c.l.b16 %v225
    %v258 = vunpack.c.l.b16 %v226
    %v259 = vunpack.c.l.b16 %v227
    %v260 = vunpack.c.l.b16 %v228
    %v261 = vunpack.c.l.b16 %v229
    %v262 = vunpack.c.l.b16 %v230
    %v263 = vunpack.c.l.b16 %v231
    %v264 = vunpack.c.l.b16 %v232
    %v265 = vunpack.c.l.b16 %v233
    %v266 = vunpack.c.l.b16 %v234
    %v267 = vpack.c.b16 %v252, %v251
    %v268 = vpack.c.b16 %v254, %v253
    %v269 = vpack.c.b16 %v256, %v255
    %v270 = vpack.c.b16 %v258, %v257
    %v271 = vpack.c.b16 %v260, %v259
    %v272 = vpack.c.b16 %v262, %v261
    %v273 = vpack.c.b16 %v264, %v263
    %v274 = vpack.c.b16 %v266, %v265
    %283 = vmatprep.subr.bf16.mxu0 0
    %284 = vmatpush1.bf16.msra.mxu0 %v267
    %285 = vmatprep.subr.bf16.mxu0 0
    %286 = vmatpush1.bf16.msra.mxu0 %v268
    %287 = vmatprep.subr.bf16.mxu0 0
    %288 = vmatpush1.bf16.msra.mxu0 %v269
    %289 = vmatprep.subr.bf16.mxu0 0
    %290 = vmatpush1.bf16.msra.mxu0 %v270
    %291 = vmatprep.subr.bf16.mxu0 0
    %292 = vmatpush1.bf16.msra.mxu0 %v271
    %293 = vmatprep.subr.bf16.mxu0 0
    %294 = vmatpush1.bf16.msra.mxu0 %v272
    %295 = vmatprep.subr.bf16.mxu0 0
    %296 = vmatpush1.bf16.msra.mxu0 %v273
    %297 = vmatprep.subr.bf16.mxu0 0
    %298 = vmatpush1.bf16.msra.mxu0 %v274
    %299 = vmatprep.subr.bf16.mxu0 0
    %300 = vmatpush1.bf16.msra.mxu0 0
    %301 = vmatprep.subr.bf16.mxu0 0
    %302 = vmatpush1.bf16.msra.mxu0 0
    %303 = vmatprep.subr.bf16.mxu0 0
    %304 = vmatpush1.bf16.msra.mxu0 0
    %305 = vmatprep.subr.bf16.mxu0 0
    %306 = vmatpush1.bf16.msra.mxu0 0
    %307 = vmatprep.subr.bf16.mxu0 0
    %308 = vmatpush1.bf16.msra.mxu0 0
    %309 = vmatprep.subr.bf16.mxu0 0
    %310 = vmatpush1.bf16.msra.mxu0 0
    %311 = vmatprep.subr.bf16.mxu0 0
    %312 = vmatpush1.bf16.msra.mxu0 0
    %313 = vmatprep.subr.bf16.mxu0 0
    %314 = vmatpush1.bf16.msra.mxu0 0
    %315 = vmatprep.mubr.bf16.mxu0 0
    %316 = vmatmul.mubr.bf16.gmra.mrb[0].mxu0 %v218
    %v317 = vpop.f32.mrb[0].mxu0
    %v318 = vadd.f32 0.0, %v317
    %v319 = vpop.f32.mrb[0].mxu0
    %v320 = vpop.f32.mrb[0].mxu0
    %v321 = vpop.f32.mrb[0].mxu0
    %322 = vdwg.mxu0
    %v323 = vpack.c.bf16 %v318, %v318
    %v324 = vld [vmem:[#allocation8] sm:$0xff]
    %v325 = vld [vmem:[#allocation8 + $0x8] sm:$0xff]
    %v326 = vld [vmem:[#allocation8 + $0x10] sm:$0xff]
    %v327 = vld [vmem:[#allocation8 + $0x18] sm:$0xff]
    %v328 = vld [vmem:[#allocation8 + $0x20] sm:$0xff]
    %v329 = vld [vmem:[#allocation8 + $0x28] sm:$0xff]
    %v330 = vld [vmem:[#allocation8 + $0x30] sm:$0xff]
    %v331 = vld [vmem:[#allocation8 + $0x38] sm:$0xff]
    %v332 = vld [vmem:[#allocation8 + $0x40] sm:$0xff]
    %v333 = vld [vmem:[#allocation8 + $0x48] sm:$0xff]
    %v334 = vld [vmem:[#allocation8 + $0x50] sm:$0xff]
    %v335 = vld [vmem:[#allocation8 + $0x58] sm:$0xff]
    %v336 = vld [vmem:[#allocation8 + $0x60] sm:$0xff]
    %v337 = vld [vmem:[#allocation8 + $0x68] sm:$0xff]
    %v338 = vld [vmem:[#allocation8 + $0x70] sm:$0xff]
    %v339 = vld [vmem:[#allocation8 + $0x78] sm:$0xff]
    %v340 = vld [vmem:[#allocation8 + $0x80] sm:$0xff]
    %v341 = vld [vmem:[#allocation8 + $0x88] sm:$0xff]
    %v342 = vld [vmem:[#allocation8 + $0x90] sm:$0xff]
    %v343 = vld [vmem:[#allocation8 + $0x98] sm:$0xff]
    %v344 = vld [vmem:[#allocation8 + $0xa0] sm:$0xff]
    %v345 = vld [vmem:[#allocation8 + $0xa8] sm:$0xff]
    %v346 = vld [vmem:[#allocation8 + $0xb0] sm:$0xff]
    %v347 = vld [vmem:[#allocation8 + $0xb8] sm:$0xff]
    %v348 = vld [vmem:[#allocation8 + $0xc0] sm:$0xff]
    %v349 = vld [vmem:[#allocation8 + $0xc8] sm:$0xff]
    %v350 = vld [vmem:[#allocation8 + $0xd0] sm:$0xff]
    %v351 = vld [vmem:[#allocation8 + $0xd8] sm:$0xff]
    %v352 = vld [vmem:[#allocation8 + $0xe0] sm:$0xff]
    %v353 = vld [vmem:[#allocation8 + $0xe8] sm:$0xff]
    %v354 = vld [vmem:[#allocation8 + $0xf0] sm:$0xff]
    %v355 = vld [vmem:[#allocation8 + $0xf8] sm:$0xff]
    %v356 = vld [vmem:[#allocation8 + $0x100] sm:$0xff]
    %v357 = vld [vmem:[#allocation8 + $0x108] sm:$0xff]
    %v358 = vld [vmem:[#allocation8 + $0x110] sm:$0xff]
    %v359 = vld [vmem:[#allocation8 + $0x118] sm:$0xff]
    %v360 = vld [vmem:[#allocation8 + $0x120] sm:$0xff]
    %v361 = vld [vmem:[#allocation8 + $0x128] sm:$0xff]
    %v362 = vld [vmem:[#allocation8 + $0x130] sm:$0xff]
    %v363 = vld [vmem:[#allocation8 + $0x138] sm:$0xff]
    %v364 = vld [vmem:[#allocation8 + $0x140] sm:$0xff]
    %v365 = vld [vmem:[#allocation8 + $0x148] sm:$0xff]
    %v366 = vld [vmem:[#allocation8 + $0x150] sm:$0xff]
    %v367 = vld [vmem:[#allocation8 + $0x158] sm:$0xff]
    %v368 = vld [vmem:[#allocation8 + $0x160] sm:$0xff]
    %v369 = vld [vmem:[#allocation8 + $0x168] sm:$0xff]
    %v370 = vld [vmem:[#allocation8 + $0x170] sm:$0xff]
    %v371 = vld [vmem:[#allocation8 + $0x178] sm:$0xff]
    %v372 = vld [vmem:[#allocation8 + $0x180] sm:$0xff]
    %v373 = vld [vmem:[#allocation8 + $0x188] sm:$0xff]
    %v374 = vld [vmem:[#allocation8 + $0x190] sm:$0xff]
    %v375 = vld [vmem:[#allocation8 + $0x198] sm:$0xff]
    %v376 = vld [vmem:[#allocation8 + $0x1a0] sm:$0xff]
    %v377 = vld [vmem:[#allocation8 + $0x1a8] sm:$0xff]
    %v378 = vld [vmem:[#allocation8 + $0x1b0] sm:$0xff]
    %v379 = vld [vmem:[#allocation8 + $0x1b8] sm:$0xff]
    %v380 = vld [vmem:[#allocation8 + $0x1c0] sm:$0xff]
    %v381 = vld [vmem:[#allocation8 + $0x1c8] sm:$0xff]
    %v382 = vld [vmem:[#allocation8 + $0x1d0] sm:$0xff]
    %v383 = vld [vmem:[#allocation8 + $0x1d8] sm:$0xff]
    %v384 = vld [vmem:[#allocation8 + $0x1e0] sm:$0xff]
    %v385 = vld [vmem:[#allocation8 + $0x1e8] sm:$0xff]
    %v386 = vld [vmem:[#allocation8 + $0x1f0] sm:$0xff]
    %v387 = vld [vmem:[#allocation8 + $0x1f8] sm:$0xff]
    %v388 = vld [vmem:[#allocation8 + $0x200] sm:$0xff]
    %v389 = vld [vmem:[#allocation8 + $0x208] sm:$0xff]
    %v390 = vld [vmem:[#allocation8 + $0x210] sm:$0xff]
    %v391 = vld [vmem:[#allocation8 + $0x218] sm:$0xff]
    %v392 = vld [vmem:[#allocation8 + $0x220] sm:$0xff]
    %v393 = vld [vmem:[#allocation8 + $0x228] sm:$0xff]
    %v394 = vld [vmem:[#allocation8 + $0x230] sm:$0xff]
    %v395 = vld [vmem:[#allocation8 + $0x238] sm:$0xff]
    %v396 = vld [vmem:[#allocation8 + $0x240] sm:$0xff]
    %v397 = vld [vmem:[#allocation8 + $0x248] sm:$0xff]
    %v398 = vld [vmem:[#allocation8 + $0x250] sm:$0xff]
    %v399 = vld [vmem:[#allocation8 + $0x258] sm:$0xff]
    %v400 = vld [vmem:[#allocation8 + $0x260] sm:$0xff]
    %v401 = vld [vmem:[#allocation8 + $0x268] sm:$0xff]
    %v402 = vld [vmem:[#allocation8 + $0x270] sm:$0xff]
    %v403 = vld [vmem:[#allocation8 + $0x278] sm:$0xff]
    %v404 = vld [vmem:[#allocation8 + $0x280] sm:$0xff]
    %v405 = vld [vmem:[#allocation8 + $0x288] sm:$0xff]
    %v406 = vld [vmem:[#allocation8 + $0x290] sm:$0xff]
    %v407 = vld [vmem:[#allocation8 + $0x298] sm:$0xff]
    %v408 = vld [vmem:[#allocation8 + $0x2a0] sm:$0xff]
    %v409 = vld [vmem:[#allocation8 + $0x2a8] sm:$0xff]
    %v410 = vld [vmem:[#allocation8 + $0x2b0] sm:$0xff]
    %v411 = vld [vmem:[#allocation8 + $0x2b8] sm:$0xff]
    %v412 = vld [vmem:[#allocation8 + $0x2c0] sm:$0xff]
    %v413 = vld [vmem:[#allocation8 + $0x2c8] sm:$0xff]
    %v414 = vld [vmem:[#allocation8 + $0x2d0] sm:$0xff]
    %v415 = vld [vmem:[#allocation8 + $0x2d8] sm:$0xff]
    %v416 = vld [vmem:[#allocation8 + $0x2e0] sm:$0xff]
    %v417 = vld [vmem:[#allocation8 + $0x2e8] sm:$0xff]
    %v418 = vld [vmem:[#allocation8 + $0x2f0] sm:$0xff]
    %v419 = vld [vmem:[#allocation8 + $0x2f8] sm:$0xff]
    %v420 = vld [vmem:[#allocation8 + $0x300] sm:$0xff]
    %v421 = vld [vmem:[#allocation8 + $0x308] sm:$0xff]
    %v422 = vld [vmem:[#allocation8 + $0x310] sm:$0xff]
    %v423 = vld [vmem:[#allocation8 + $0x318] sm:$0xff]
    %v424 = vld [vmem:[#allocation8 + $0x320] sm:$0xff]
    %v425 = vld [vmem:[#allocation8 + $0x328] sm:$0xff]
    %v426 = vld [vmem:[#allocation8 + $0x330] sm:$0xff]
    %v427 = vld [vmem:[#allocation8 + $0x338] sm:$0xff]
    %v428 = vld [vmem:[#allocation8 + $0x340] sm:$0xff]
    %v429 = vld [vmem:[#allocation8 + $0x348] sm:$0xff]
    %v430 = vld [vmem:[#allocation8 + $0x350] sm:$0xff]
    %v431 = vld [vmem:[#allocation8 + $0x358] sm:$0xff]
    %v432 = vld [vmem:[#allocation8 + $0x360] sm:$0xff]
    %v433 = vld [vmem:[#allocation8 + $0x368] sm:$0xff]
    %v434 = vld [vmem:[#allocation8 + $0x370] sm:$0xff]
    %v435 = vld [vmem:[#allocation8 + $0x378] sm:$0xff]
    %v436 = vld [vmem:[#allocation8 + $0x380] sm:$0xff]
    %v437 = vld [vmem:[#allocation8 + $0x388] sm:$0xff]
    %v438 = vld [vmem:[#allocation8 + $0x390] sm:$0xff]
    %v439 = vld [vmem:[#allocation8 + $0x398] sm:$0xff]
    %v440 = vld [vmem:[#allocation8 + $0x3a0] sm:$0xff]
    %v441 = vld [vmem:[#allocation8 + $0x3a8] sm:$0xff]
    %v442 = vld [vmem:[#allocation8 + $0x3b0] sm:$0xff]
    %v443 = vld [vmem:[#allocation8 + $0x3b8] sm:$0xff]
    %v444 = vld [vmem:[#allocation8 + $0x3c0] sm:$0xff]
    %v445 = vld [vmem:[#allocation8 + $0x3c8] sm:$0xff]
    %v446 = vld [vmem:[#allocation8 + $0x3d0] sm:$0xff]
    %v447 = vld [vmem:[#allocation8 + $0x3d8] sm:$0xff]
    %v448 = vld [vmem:[#allocation8 + $0x3e0] sm:$0xff]
    %v449 = vld [vmem:[#allocation8 + $0x3e8] sm:$0xff]
    %v450 = vld [vmem:[#allocation8 + $0x3f0] sm:$0xff]
    %v451 = vld [vmem:[#allocation8 + $0x3f8] sm:$0xff]
    %v452 = vld [vmem:[#allocation8 + $0x400] sm:$0xff]
    %v453 = vld [vmem:[#allocation8 + $0x408] sm:$0xff]
    %v454 = vld [vmem:[#allocation8 + $0x410] sm:$0xff]
    %v455 = vld [vmem:[#allocation8 + $0x418] sm:$0xff]
    %v456 = vld [vmem:[#allocation8 + $0x420] sm:$0xff]
    %v457 = vld [vmem:[#allocation8 + $0x428] sm:$0xff]
    %v458 = vld [vmem:[#allocation8 + $0x430] sm:$0xff]
    %v459 = vld [vmem:[#allocation8 + $0x438] sm:$0xff]
    %v460 = vld [vmem:[#allocation8 + $0x440] sm:$0xff]
    %v461 = vld [vmem:[#allocation8 + $0x448] sm:$0xff]
    %v462 = vld [vmem:[#allocation8 + $0x450] sm:$0xff]
    %v463 = vld [vmem:[#allocation8 + $0x458] sm:$0xff]
    %v464 = vld [vmem:[#allocation8 + $0x460] sm:$0xff]
    %v465 = vld [vmem:[#allocation8 + $0x468] sm:$0xff]
    %v466 = vld [vmem:[#allocation8 + $0x470] sm:$0xff]
    %v467 = vld [vmem:[#allocation8 + $0x478] sm:$0xff]
    %v468 = vld [vmem:[#allocation8 + $0x480] sm:$0xff]
    %v469 = vld [vmem:[#allocation8 + $0x488] sm:$0xff]
    %v470 = vld [vmem:[#allocation8 + $0x490] sm:$0xff]
    %v471 = vld [vmem:[#allocation8 + $0x498] sm:$0xff]
    %v472 = vld [vmem:[#allocation8 + $0x4a0] sm:$0xff]
    %v473 = vld [vmem:[#allocation8 + $0x4a8] sm:$0xff]
    %v474 = vld [vmem:[#allocation8 + $0x4b0] sm:$0xff]
    %v475 = vld [vmem:[#allocation8 + $0x4b8] sm:$0xff]
    %v476 = vld [vmem:[#allocation8 + $0x4c0] sm:$0xff]
    %v477 = vld [vmem:[#allocation8 + $0x4c8] sm:$0xff]
    %v478 = vld [vmem:[#allocation8 + $0x4d0] sm:$0xff]
    %v479 = vld [vmem:[#allocation8 + $0x4d8] sm:$0xff]
    %v480 = vld [vmem:[#allocation8 + $0x4e0] sm:$0xff]
    %v481 = vld [vmem:[#allocation8 + $0x4e8] sm:$0xff]
    %v482 = vld [vmem:[#allocation8 + $0x4f0] sm:$0xff]
    %v483 = vld [vmem:[#allocation8 + $0x4f8] sm:$0xff]
    %v484 = vld [vmem:[#allocation8 + $0x500] sm:$0xff]
    %v485 = vld [vmem:[#allocation8 + $0x508] sm:$0xff]
    %v486 = vld [vmem:[#allocation8 + $0x510] sm:$0xff]
    %v487 = vld [vmem:[#allocation8 + $0x518] sm:$0xff]
    %v488 = vld [vmem:[#allocation8 + $0x520] sm:$0xff]
    %v489 = vld [vmem:[#allocation8 + $0x528] sm:$0xff]
    %v490 = vld [vmem:[#allocation8 + $0x530] sm:$0xff]
    %v491 = vld [vmem:[#allocation8 + $0x538] sm:$0xff]
    %v492 = vld [vmem:[#allocation8 + $0x540] sm:$0xff]
    %v493 = vld [vmem:[#allocation8 + $0x548] sm:$0xff]
    %v494 = vld [vmem:[#allocation8 + $0x550] sm:$0xff]
    %v495 = vld [vmem:[#allocation8 + $0x558] sm:$0xff]
    %v496 = vld [vmem:[#allocation8 + $0x560] sm:$0xff]
    %v497 = vld [vmem:[#allocation8 + $0x568] sm:$0xff]
    %v498 = vld [vmem:[#allocation8 + $0x570] sm:$0xff]
    %v499 = vld [vmem:[#allocation8 + $0x578] sm:$0xff]
    %v500 = vld [vmem:[#allocation8 + $0x580] sm:$0xff]
    %v501 = vld [vmem:[#allocation8 + $0x588] sm:$0xff]
    %v502 = vld [vmem:[#allocation8 + $0x590] sm:$0xff]
    %v503 = vld [vmem:[#allocation8 + $0x598] sm:$0xff]
    %v504 = vld [vmem:[#allocation8 + $0x5a0] sm:$0xff]
    %v505 = vld [vmem:[#allocation8 + $0x5a8] sm:$0xff]
    %v506 = vld [vmem:[#allocation8 + $0x5b0] sm:$0xff]
    %v507 = vld [vmem:[#allocation8 + $0x5b8] sm:$0xff]
    %v508 = vld [vmem:[#allocation8 + $0x5c0] sm:$0xff]
    %v509 = vld [vmem:[#allocation8 + $0x5c8] sm:$0xff]
    %v510 = vld [vmem:[#allocation8 + $0x5d0] sm:$0xff]
    %v511 = vld [vmem:[#allocation8 + $0x5d8] sm:$0xff]
    %v512 = vld [vmem:[#allocation8 + $0x5e0] sm:$0xff]
    %v513 = vld [vmem:[#allocation8 + $0x5e8] sm:$0xff]
    %v514 = vld [vmem:[#allocation8 + $0x5f0] sm:$0xff]
    %v515 = vld [vmem:[#allocation8 + $0x5f8] sm:$0xff]
    %v516 = vld [vmem:[#allocation10] sm:$0xff]
    %v517 = vld [vmem:[#allocation10 + $0x8] sm:$0xff]
    %v518 = vld [vmem:[#allocation10 + $0x10] sm:$0xff]
    %v519 = vld [vmem:[#allocation10 + $0x18] sm:$0xff]
    %v520 = vld [vmem:[#allocation10 + $0x20] sm:$0xff]
    %v521 = vld [vmem:[#allocation10 + $0x28] sm:$0xff]
    %v522 = vld [vmem:[#allocation10 + $0x30] sm:$0xff]
    %v523 = vld [vmem:[#allocation10 + $0x38] sm:$0xff]
    %v524 = vld [vmem:[#allocation10 + $0x40] sm:$0xff]
    %v525 = vld [vmem:[#allocation10 + $0x48] sm:$0xff]
    %v526 = vld [vmem:[#allocation10 + $0x50] sm:$0xff]
    %v527 = vld [vmem:[#allocation10 + $0x58] sm:$0xff]
    %v528 = vld [vmem:[#allocation10 + $0x60] sm:$0xff]
    %v529 = vld [vmem:[#allocation10 + $0x68] sm:$0xff]
    %v530 = vld [vmem:[#allocation10 + $0x70] sm:$0xff]
    %v531 = vld [vmem:[#allocation10 + $0x78] sm:$0xff]
    %v532 = vld [vmem:[#allocation10 + $0x80] sm:$0xff]
    %v533 = vld [vmem:[#allocation10 + $0x88] sm:$0xff]
    %v534 = vld [vmem:[#allocation10 + $0x90] sm:$0xff]
    %v535 = vld [vmem:[#allocation10 + $0x98] sm:$0xff]
    %v536 = vld [vmem:[#allocation10 + $0xa0] sm:$0xff]
    %v537 = vld [vmem:[#allocation10 + $0xa8] sm:$0xff]
    %v538 = vld [vmem:[#allocation10 + $0xb0] sm:$0xff]
    %v539 = vld [vmem:[#allocation10 + $0xb8] sm:$0xff]
    %v540 = vld [vmem:[#allocation10 + $0xc0] sm:$0xff]
    %v541 = vld [vmem:[#allocation10 + $0xc8] sm:$0xff]
    %v542 = vld [vmem:[#allocation10 + $0xd0] sm:$0xff]
    %v543 = vld [vmem:[#allocation10 + $0xd8] sm:$0xff]
    %v544 = vld [vmem:[#allocation10 + $0xe0] sm:$0xff]
    %v545 = vld [vmem:[#allocation10 + $0xe8] sm:$0xff]
    %v546 = vld [vmem:[#allocation10 + $0xf0] sm:$0xff]
    %v547 = vld [vmem:[#allocation10 + $0xf8] sm:$0xff]
    %v548 = vld [vmem:[#allocation10 + $0x100] sm:$0xff]
    %v549 = vld [vmem:[#allocation10 + $0x108] sm:$0xff]
    %v550 = vld [vmem:[#allocation10 + $0x110] sm:$0xff]
    %v551 = vld [vmem:[#allocation10 + $0x118] sm:$0xff]
    %v552 = vld [vmem:[#allocation10 + $0x120] sm:$0xff]
    %v553 = vld [vmem:[#allocation10 + $0x128] sm:$0xff]
    %v554 = vld [vmem:[#allocation10 + $0x130] sm:$0xff]
    %v555 = vld [vmem:[#allocation10 + $0x138] sm:$0xff]
    %v556 = vld [vmem:[#allocation10 + $0x140] sm:$0xff]
    %v557 = vld [vmem:[#allocation10 + $0x148] sm:$0xff]
    %v558 = vld [vmem:[#allocation10 + $0x150] sm:$0xff]
    %v559 = vld [vmem:[#allocation10 + $0x158] sm:$0xff]
    %v560 = vld [vmem:[#allocation10 + $0x160] sm:$0xff]
    %v561 = vld [vmem:[#allocation10 + $0x168] sm:$0xff]
    %v562 = vld [vmem:[#allocation10 + $0x170] sm:$0xff]
    %v563 = vld [vmem:[#allocation10 + $0x178] sm:$0xff]
    %v564 = vld [vmem:[#allocation10 + $0x180] sm:$0xff]
    %v565 = vld [vmem:[#allocation10 + $0x188] sm:$0xff]
    %v566 = vld [vmem:[#allocation10 + $0x190] sm:$0xff]
    %v567 = vld [vmem:[#allocation10 + $0x198] sm:$0xff]
    %v568 = vld [vmem:[#allocation10 + $0x1a0] sm:$0xff]
    %v569 = vld [vmem:[#allocation10 + $0x1a8] sm:$0xff]
    %v570 = vld [vmem:[#allocation10 + $0x1b0] sm:$0xff]
    %v571 = vld [vmem:[#allocation10 + $0x1b8] sm:$0xff]
    %v572 = vld [vmem:[#allocation10 + $0x1c0] sm:$0xff]
    %v573 = vld [vmem:[#allocation10 + $0x1c8] sm:$0xff]
    %v574 = vld [vmem:[#allocation10 + $0x1d0] sm:$0xff]
    %v575 = vld [vmem:[#allocation10 + $0x1d8] sm:$0xff]
    %v576 = vld [vmem:[#allocation10 + $0x1e0] sm:$0xff]
    %v577 = vld [vmem:[#allocation10 + $0x1e8] sm:$0xff]
    %v578 = vld [vmem:[#allocation10 + $0x1f0] sm:$0xff]
    %v579 = vld [vmem:[#allocation10 + $0x1f8] sm:$0xff]
    %v580 = vld [vmem:[#allocation10 + $0x200] sm:$0xff]
    %v581 = vld [vmem:[#allocation10 + $0x208] sm:$0xff]
    %v582 = vld [vmem:[#allocation10 + $0x210] sm:$0xff]
    %v583 = vld [vmem:[#allocation10 + $0x218] sm:$0xff]
    %v584 = vld [vmem:[#allocation10 + $0x220] sm:$0xff]
    %v585 = vld [vmem:[#allocation10 + $0x228] sm:$0xff]
    %v586 = vld [vmem:[#allocation10 + $0x230] sm:$0xff]
    %v587 = vld [vmem:[#allocation10 + $0x238] sm:$0xff]
    %v588 = vld [vmem:[#allocation10 + $0x240] sm:$0xff]
    %v589 = vld [vmem:[#allocation10 + $0x248] sm:$0xff]
    %v590 = vld [vmem:[#allocation10 + $0x250] sm:$0xff]
    %v591 = vld [vmem:[#allocation10 + $0x258] sm:$0xff]
    %v592 = vld [vmem:[#allocation10 + $0x260] sm:$0xff]
    %v593 = vld [vmem:[#allocation10 + $0x268] sm:$0xff]
    %v594 = vld [vmem:[#allocation10 + $0x270] sm:$0xff]
    %v595 = vld [vmem:[#allocation10 + $0x278] sm:$0xff]
    %v596 = vld [vmem:[#allocation10 + $0x280] sm:$0xff]
    %v597 = vld [vmem:[#allocation10 + $0x288] sm:$0xff]
    %v598 = vld [vmem:[#allocation10 + $0x290] sm:$0xff]
    %v599 = vld [vmem:[#allocation10 + $0x298] sm:$0xff]
    %v600 = vld [vmem:[#allocation10 + $0x2a0] sm:$0xff]
    %v601 = vld [vmem:[#allocation10 + $0x2a8] sm:$0xff]
    %v602 = vld [vmem:[#allocation10 + $0x2b0] sm:$0xff]
    %v603 = vld [vmem:[#allocation10 + $0x2b8] sm:$0xff]
    %v604 = vld [vmem:[#allocation10 + $0x2c0] sm:$0xff]
    %v605 = vld [vmem:[#allocation10 + $0x2c8] sm:$0xff]
    %v606 = vld [vmem:[#allocation10 + $0x2d0] sm:$0xff]
    %v607 = vld [vmem:[#allocation10 + $0x2d8] sm:$0xff]
    %v608 = vld [vmem:[#allocation10 + $0x2e0] sm:$0xff]
    %v609 = vld [vmem:[#allocation10 + $0x2e8] sm:$0xff]
    %v610 = vld [vmem:[#allocation10 + $0x2f0] sm:$0xff]
    %v611 = vld [vmem:[#allocation10 + $0x2f8] sm:$0xff]
    %v612 = vld [vmem:[#allocation10 + $0x300] sm:$0xff]
    %v613 = vld [vmem:[#allocation10 + $0x308] sm:$0xff]
    %v614 = vld [vmem:[#allocation10 + $0x310] sm:$0xff]
    %v615 = vld [vmem:[#allocation10 + $0x318] sm:$0xff]
    %v616 = vld [vmem:[#allocation10 + $0x320] sm:$0xff]
    %v617 = vld [vmem:[#allocation10 + $0x328] sm:$0xff]
    %v618 = vld [vmem:[#allocation10 + $0x330] sm:$0xff]
    %v619 = vld [vmem:[#allocation10 + $0x338] sm:$0xff]
    %v620 = vld [vmem:[#allocation10 + $0x340] sm:$0xff]
    %v621 = vld [vmem:[#allocation10 + $0x348] sm:$0xff]
    %v622 = vld [vmem:[#allocation10 + $0x350] sm:$0xff]
    %v623 = vld [vmem:[#allocation10 + $0x358] sm:$0xff]
    %v624 = vld [vmem:[#allocation10 + $0x360] sm:$0xff]
    %v625 = vld [vmem:[#allocation10 + $0x368] sm:$0xff]
    %v626 = vld [vmem:[#allocation10 + $0x370] sm:$0xff]
    %v627 = vld [vmem:[#allocation10 + $0x378] sm:$0xff]
    %v628 = vld [vmem:[#allocation10 + $0x380] sm:$0xff]
    %v629 = vld [vmem:[#allocation10 + $0x388] sm:$0xff]
    %v630 = vld [vmem:[#allocation10 + $0x390] sm:$0xff]
    %v631 = vld [vmem:[#allocation10 + $0x398] sm:$0xff]
    %v632 = vld [vmem:[#allocation10 + $0x3a0] sm:$0xff]
    %v633 = vld [vmem:[#allocation10 + $0x3a8] sm:$0xff]
    %v634 = vld [vmem:[#allocation10 + $0x3b0] sm:$0xff]
    %v635 = vld [vmem:[#allocation10 + $0x3b8] sm:$0xff]
    %v636 = vld [vmem:[#allocation10 + $0x3c0] sm:$0xff]
    %v637 = vld [vmem:[#allocation10 + $0x3c8] sm:$0xff]
    %v638 = vld [vmem:[#allocation10 + $0x3d0] sm:$0xff]
    %v639 = vld [vmem:[#allocation10 + $0x3d8] sm:$0xff]
    %v640 = vld [vmem:[#allocation10 + $0x3e0] sm:$0xff]
    %v641 = vld [vmem:[#allocation10 + $0x3e8] sm:$0xff]
    %v642 = vld [vmem:[#allocation10 + $0x3f0] sm:$0xff]
    %v643 = vld [vmem:[#allocation10 + $0x3f8] sm:$0xff]
    %v644 = vld [vmem:[#allocation10 + $0x400] sm:$0xff]
    %v645 = vld [vmem:[#allocation10 + $0x408] sm:$0xff]
    %v646 = vld [vmem:[#allocation10 + $0x410] sm:$0xff]
    %v647 = vld [vmem:[#allocation10 + $0x418] sm:$0xff]
    %v648 = vld [vmem:[#allocation10 + $0x420] sm:$0xff]
    %v649 = vld [vmem:[#allocation10 + $0x428] sm:$0xff]
    %v650 = vld [vmem:[#allocation10 + $0x430] sm:$0xff]
    %v651 = vld [vmem:[#allocation10 + $0x438] sm:$0xff]
    %v652 = vld [vmem:[#allocation10 + $0x440] sm:$0xff]
    %v653 = vld [vmem:[#allocation10 + $0x448] sm:$0xff]
    %v654 = vld [vmem:[#allocation10 + $0x450] sm:$0xff]
    %v655 = vld [vmem:[#allocation10 + $0x458] sm:$0xff]
    %v656 = vld [vmem:[#allocation10 + $0x460] sm:$0xff]
    %v657 = vld [vmem:[#allocation10 + $0x468] sm:$0xff]
    %v658 = vld [vmem:[#allocation10 + $0x470] sm:$0xff]
    %v659 = vld [vmem:[#allocation10 + $0x478] sm:$0xff]
    %v660 = vld [vmem:[#allocation10 + $0x480] sm:$0xff]
    %v661 = vld [vmem:[#allocation10 + $0x488] sm:$0xff]
    %v662 = vld [vmem:[#allocation10 + $0x490] sm:$0xff]
    %v663 = vld [vmem:[#allocation10 + $0x498] sm:$0xff]
    %v664 = vld [vmem:[#allocation10 + $0x4a0] sm:$0xff]
    %v665 = vld [vmem:[#allocation10 + $0x4a8] sm:$0xff]
    %v666 = vld [vmem:[#allocation10 + $0x4b0] sm:$0xff]
    %v667 = vld [vmem:[#allocation10 + $0x4b8] sm:$0xff]
    %v668 = vld [vmem:[#allocation10 + $0x4c0] sm:$0xff]
    %v669 = vld [vmem:[#allocation10 + $0x4c8] sm:$0xff]
    %v670 = vld [vmem:[#allocation10 + $0x4d0] sm:$0xff]
    %v671 = vld [vmem:[#allocation10 + $0x4d8] sm:$0xff]
    %v672 = vld [vmem:[#allocation10 + $0x4e0] sm:$0xff]
    %v673 = vld [vmem:[#allocation10 + $0x4e8] sm:$0xff]
    %v674 = vld [vmem:[#allocation10 + $0x4f0] sm:$0xff]
    %v675 = vld [vmem:[#allocation10 + $0x4f8] sm:$0xff]
    %v676 = vld [vmem:[#allocation10 + $0x500] sm:$0xff]
    %v677 = vld [vmem:[#allocation10 + $0x508] sm:$0xff]
    %v678 = vld [vmem:[#allocation10 + $0x510] sm:$0xff]
    %v679 = vld [vmem:[#allocation10 + $0x518] sm:$0xff]
    %v680 = vld [vmem:[#allocation10 + $0x520] sm:$0xff]
    %v681 = vld [vmem:[#allocation10 + $0x528] sm:$0xff]
    %v682 = vld [vmem:[#allocation10 + $0x530] sm:$0xff]
    %v683 = vld [vmem:[#allocation10 + $0x538] sm:$0xff]
    %v684 = vld [vmem:[#allocation10 + $0x540] sm:$0xff]
    %v685 = vld [vmem:[#allocation10 + $0x548] sm:$0xff]
    %v686 = vld [vmem:[#allocation10 + $0x550] sm:$0xff]
    %v687 = vld [vmem:[#allocation10 + $0x558] sm:$0xff]
    %v688 = vld [vmem:[#allocation10 + $0x560] sm:$0xff]
    %v689 = vld [vmem:[#allocation10 + $0x568] sm:$0xff]
    %v690 = vld [vmem:[#allocation10 + $0x570] sm:$0xff]
    %v691 = vld [vmem:[#allocation10 + $0x578] sm:$0xff]
    %v692 = vld [vmem:[#allocation10 + $0x580] sm:$0xff]
    %v693 = vld [vmem:[#allocation10 + $0x588] sm:$0xff]
    %v694 = vld [vmem:[#allocation10 + $0x590] sm:$0xff]
    %v695 = vld [vmem:[#allocation10 + $0x598] sm:$0xff]
    %v696 = vld [vmem:[#allocation10 + $0x5a0] sm:$0xff]
    %v697 = vld [vmem:[#allocation10 + $0x5a8] sm:$0xff]
    %v698 = vld [vmem:[#allocation10 + $0x5b0] sm:$0xff]
    %v699 = vld [vmem:[#allocation10 + $0x5b8] sm:$0xff]
    %v700 = vld [vmem:[#allocation10 + $0x5c0] sm:$0xff]
    %v701 = vld [vmem:[#allocation10 + $0x5c8] sm:$0xff]
    %v702 = vld [vmem:[#allocation10 + $0x5d0] sm:$0xff]
    %v703 = vld [vmem:[#allocation10 + $0x5d8] sm:$0xff]
    %v704 = vld [vmem:[#allocation10 + $0x5e0] sm:$0xff]
    %v705 = vld [vmem:[#allocation10 + $0x5e8] sm:$0xff]
    %v706 = vld [vmem:[#allocation10 + $0x5f0] sm:$0xff]
    %v707 = vld [vmem:[#allocation10 + $0x5f8] sm:$0xff]
    %v900 = vunpack.c.l.b16 %v516
    %v901 = vunpack.c.h.b16 %v516
    %v902 = vunpack.c.l.b16 %v517
    %v903 = vunpack.c.h.b16 %v517
    %v904 = vunpack.c.l.b16 %v518
    %v905 = vunpack.c.h.b16 %v518
    %v906 = vunpack.c.l.b16 %v519
    %v907 = vunpack.c.h.b16 %v519
    %v908 = vunpack.c.l.b16 %v520
    %v909 = vunpack.c.h.b16 %v520
    %v910 = vunpack.c.l.b16 %v521
    %v911 = vunpack.c.h.b16 %v521
    %v912 = vunpack.c.l.b16 %v522
    %v913 = vunpack.c.h.b16 %v522
    %v914 = vunpack.c.l.b16 %v523
    %v915 = vunpack.c.h.b16 %v523
    %v916 = vunpack.c.l.b16 %v524
    %v917 = vunpack.c.h.b16 %v524
    %v918 = vunpack.c.l.b16 %v525
    %v919 = vunpack.c.h.b16 %v525
    %v920 = vunpack.c.l.b16 %v526
    %v921 = vunpack.c.h.b16 %v526
    %v922 = vunpack.c.l.b16 %v527
    %v923 = vunpack.c.h.b16 %v527
    %v924 = vunpack.c.l.b16 %v528
    %v925 = vunpack.c.h.b16 %v528
    %v926 = vunpack.c.l.b16 %v529
    %v927 = vunpack.c.h.b16 %v529
    %v928 = vunpack.c.l.b16 %v530
    %v929 = vunpack.c.h.b16 %v530
    %v930 = vunpack.c.l.b16 %v531
    %v931 = vunpack.c.h.b16 %v531
    %v932 = vunpack.c.l.b16 %v532
    %v933 = vunpack.c.h.b16 %v532
    %v934 = vunpack.c.l.b16 %v533
    %v935 = vunpack.c.h.b16 %v533
    %v936 = vunpack.c.l.b16 %v534
    %v937 = vunpack.c.h.b16 %v534
    %v938 = vunpack.c.l.b16 %v535
    %v939 = vunpack.c.h.b16 %v535
    %v940 = vunpack.c.l.b16 %v536
    %v941 = vunpack.c.h.b16 %v536
    %v942 = vunpack.c.l.b16 %v537
    %v943 = vunpack.c.h.b16 %v537
    %v944 = vunpack.c.l.b16 %v538
    %v945 = vunpack.c.h.b16 %v538
    %v946 = vunpack.c.l.b16 %v539
    %v947 = vunpack.c.h.b16 %v539
    %v948 = vunpack.c.l.b16 %v540
    %v949 = vunpack.c.h.b16 %v540
    %v950 = vunpack.c.l.b16 %v541
    %v951 = vunpack.c.h.b16 %v541
    %v952 = vunpack.c.l.b16 %v542
    %v953 = vunpack.c.h.b16 %v542
    %v954 = vunpack.c.l.b16 %v543
    %v955 = vunpack.c.h.b16 %v543
    %v956 = vunpack.c.l.b16 %v544
    %v957 = vunpack.c.h.b16 %v544
    %v958 = vunpack.c.l.b16 %v545
    %v959 = vunpack.c.h.b16 %v545
    %v960 = vunpack.c.l.b16 %v546
    %v961 = vunpack.c.h.b16 %v546
    %v962 = vunpack.c.l.b16 %v547
    %v963 = vunpack.c.h.b16 %v547
    %v964 = vunpack.c.l.b16 %v548
    %v965 = vunpack.c.h.b16 %v548
    %v966 = vunpack.c.l.b16 %v549
    %v967 = vunpack.c.h.b16 %v549
    %v968 = vunpack.c.l.b16 %v550
    %v969 = vunpack.c.h.b16 %v550
    %v970 = vunpack.c.l.b16 %v551
    %v971 = vunpack.c.h.b16 %v551
    %v972 = vunpack.c.l.b16 %v552
    %v973 = vunpack.c.h.b16 %v552
    %v974 = vunpack.c.l.b16 %v553
    %v975 = vunpack.c.h.b16 %v553
    %v976 = vunpack.c.l.b16 %v554
    %v977 = vunpack.c.h.b16 %v554
    %v978 = vunpack.c.l.b16 %v555
    %v979 = vunpack.c.h.b16 %v555
    %v980 = vunpack.c.l.b16 %v556
    %v981 = vunpack.c.h.b16 %v556
    %v982 = vunpack.c.l.b16 %v557
    %v983 = vunpack.c.h.b16 %v557
    %v984 = vunpack.c.l.b16 %v558
    %v985 = vunpack.c.h.b16 %v558
    %v986 = vunpack.c.l.b16 %v559
    %v987 = vunpack.c.h.b16 %v559
    %v988 = vunpack.c.l.b16 %v560
    %v989 = vunpack.c.h.b16 %v560
    %v990 = vunpack.c.l.b16 %v561
    %v991 = vunpack.c.h.b16 %v561
    %v992 = vunpack.c.l.b16 %v562
    %v993 = vunpack.c.h.b16 %v562
    %v994 = vunpack.c.l.b16 %v563
    %v995 = vunpack.c.h.b16 %v563
    %v996 = vunpack.c.l.b16 %v564
    %v997 = vunpack.c.h.b16 %v564
    %v998 = vunpack.c.l.b16 %v565
    %v999 = vunpack.c.h.b16 %v565
    %v1000 = vunpack.c.l.b16 %v566
    %v1001 = vunpack.c.h.b16 %v566
    %v1002 = vunpack.c.l.b16 %v567
    %v1003 = vunpack.c.h.b16 %v567
    %v1004 = vunpack.c.l.b16 %v568
    %v1005 = vunpack.c.h.b16 %v568
    %v1006 = vunpack.c.l.b16 %v569
    %v1007 = vunpack.c.h.b16 %v569
    %v1008 = vunpack.c.l.b16 %v570
    %v1009 = vunpack.c.h.b16 %v570
    %v1010 = vunpack.c.l.b16 %v571
    %v1011 = vunpack.c.h.b16 %v571
    %v1012 = vunpack.c.l.b16 %v572
    %v1013 = vunpack.c.h.b16 %v572
    %v1014 = vunpack.c.l.b16 %v573
    %v1015 = vunpack.c.h.b16 %v573
    %v1016 = vunpack.c.l.b16 %v574
    %v1017 = vunpack.c.h.b16 %v574
    %v1018 = vunpack.c.l.b16 %v575
    %v1019 = vunpack.c.h.b16 %v575
    %v1020 = vunpack.c.l.b16 %v576
    %v1021 = vunpack.c.h.b16 %v576
    %v1022 = vunpack.c.l.b16 %v577
    %v1023 = vunpack.c.h.b16 %v577
    %v1024 = vunpack.c.l.b16 %v578
    %v1025 = vunpack.c.h.b16 %v578
    %v1026 = vunpack.c.l.b16 %v579
    %v1027 = vunpack.c.h.b16 %v579
    %v1028 = vunpack.c.l.b16 %v580
    %v1029 = vunpack.c.h.b16 %v580
    %v1030 = vunpack.c.l.b16 %v581
    %v1031 = vunpack.c.h.b16 %v581
    %v1032 = vunpack.c.l.b16 %v582
    %v1033 = vunpack.c.h.b16 %v582
    %v1034 = vunpack.c.l.b16 %v583
    %v1035 = vunpack.c.h.b16 %v583
    %v1036 = vunpack.c.l.b16 %v584
    %v1037 = vunpack.c.h.b16 %v584
    %v1038 = vunpack.c.l.b16 %v585
    %v1039 = vunpack.c.h.b16 %v585
    %v1040 = vunpack.c.l.b16 %v586
    %v1041 = vunpack.c.h.b16 %v586
    %v1042 = vunpack.c.l.b16 %v587
    %v1043 = vunpack.c.h.b16 %v587
    %v1044 = vunpack.c.l.b16 %v588
    %v1045 = vunpack.c.h.b16 %v588
    %v1046 = vunpack.c.l.b16 %v589
    %v1047 = vunpack.c.h.b16 %v589
    %v1048 = vunpack.c.l.b16 %v590
    %v1049 = vunpack.c.h.b16 %v590
    %v1050 = vunpack.c.l.b16 %v591
    %v1051 = vunpack.c.h.b16 %v591
    %v1052 = vunpack.c.l.b16 %v592
    %v1053 = vunpack.c.h.b16 %v592
    %v1054 = vunpack.c.l.b16 %v593
    %v1055 = vunpack.c.h.b16 %v593
    %v1056 = vunpack.c.l.b16 %v594
    %v1057 = vunpack.c.h.b16 %v594
    %v1058 = vunpack.c.l.b16 %v595
    %v1059 = vunpack.c.h.b16 %v595
    %v1060 = vunpack.c.l.b16 %v596
    %v1061 = vunpack.c.h.b16 %v596
    %v1062 = vunpack.c.l.b16 %v597
    %v1063 = vunpack.c.h.b16 %v597
    %v1064 = vunpack.c.l.b16 %v598
    %v1065 = vunpack.c.h.b16 %v598
    %v1066 = vunpack.c.l.b16 %v599
    %v1067 = vunpack.c.h.b16 %v599
    %v1068 = vunpack.c.l.b16 %v600
    %v1069 = vunpack.c.h.b16 %v600
    %v1070 = vunpack.c.l.b16 %v601
    %v1071 = vunpack.c.h.b16 %v601
    %v1072 = vunpack.c.l.b16 %v602
    %v1073 = vunpack.c.h.b16 %v602
    %v1074 = vunpack.c.l.b16 %v603
    %v1075 = vunpack.c.h.b16 %v603
    %v1076 = vunpack.c.l.b16 %v604
    %v1077 = vunpack.c.h.b16 %v604
    %v1078 = vunpack.c.l.b16 %v605
    %v1079 = vunpack.c.h.b16 %v605
    %v1080 = vunpack.c.l.b16 %v606
    %v1081 = vunpack.c.h.b16 %v606
    %v1082 = vunpack.c.l.b16 %v607
    %v1083 = vunpack.c.h.b16 %v607
    %v1084 = vunpack.c.l.b16 %v608
    %v1085 = vunpack.c.h.b16 %v608
    %v1086 = vunpack.c.l.b16 %v609
    %v1087 = vunpack.c.h.b16 %v609
    %v1088 = vunpack.c.l.b16 %v610
    %v1089 = vunpack.c.h.b16 %v610
    %v1090 = vunpack.c.l.b16 %v611
    %v1091 = vunpack.c.h.b16 %v611
    %v1092 = vunpack.c.l.b16 %v612
    %v1093 = vunpack.c.h.b16 %v612
    %v1094 = vunpack.c.l.b16 %v613
    %v1095 = vunpack.c.h.b16 %v613
    %v1096 = vunpack.c.l.b16 %v614
    %v1097 = vunpack.c.h.b16 %v614
    %v1098 = vunpack.c.l.b16 %v615
    %v1099 = vunpack.c.h.b16 %v615
    %v1100 = vunpack.c.l.b16 %v616
    %v1101 = vunpack.c.h.b16 %v616
    %v1102 = vunpack.c.l.b16 %v617
    %v1103 = vunpack.c.h.b16 %v617
    %v1104 = vunpack.c.l.b16 %v618
    %v1105 = vunpack.c.h.b16 %v618
    %v1106 = vunpack.c.l.b16 %v619
    %v1107 = vunpack.c.h.b16 %v619
    %v1108 = vunpack.c.l.b16 %v620
    %v1109 = vunpack.c.h.b16 %v620
    %v1110 = vunpack.c.l.b16 %v621
    %v1111 = vunpack.c.h.b16 %v621
    %v1112 = vunpack.c.l.b16 %v622
    %v1113 = vunpack.c.h.b16 %v622
    %v1114 = vunpack.c.l.b16 %v623
    %v1115 = vunpack.c.h.b16 %v623
    %v1116 = vunpack.c.l.b16 %v624
    %v1117 = vunpack.c.h.b16 %v624
    %v1118 = vunpack.c.l.b16 %v625
    %v1119 = vunpack.c.h.b16 %v625
    %v1120 = vunpack.c.l.b16 %v626
    %v1121 = vunpack.c.h.b16 %v626
    %v1122 = vunpack.c.l.b16 %v627
    %v1123 = vunpack.c.h.b16 %v627
    %v1124 = vunpack.c.l.b16 %v628
    %v1125 = vunpack.c.h.b16 %v628
    %v1126 = vunpack.c.l.b16 %v629
    %v1127 = vunpack.c.h.b16 %v629
    %v1128 = vunpack.c.l.b16 %v630
    %v1129 = vunpack.c.h.b16 %v630
    %v1130 = vunpack.c.l.b16 %v631
    %v1131 = vunpack.c.h.b16 %v631
    %v1132 = vunpack.c.l.b16 %v632
    %v1133 = vunpack.c.h.b16 %v632
    %v1134 = vunpack.c.l.b16 %v633
    %v1135 = vunpack.c.h.b16 %v633
    %v1136 = vunpack.c.l.b16 %v634
    %v1137 = vunpack.c.h.b16 %v634
    %v1138 = vunpack.c.l.b16 %v635
    %v1139 = vunpack.c.h.b16 %v635
    %v1140 = vunpack.c.l.b16 %v636
    %v1141 = vunpack.c.h.b16 %v636
    %v1142 = vunpack.c.l.b16 %v637
    %v1143 = vunpack.c.h.b16 %v637
    %v1144 = vunpack.c.l.b16 %v638
    %v1145 = vunpack.c.h.b16 %v638
    %v1146 = vunpack.c.l.b16 %v639
    %v1147 = vunpack.c.h.b16 %v639
    %v1148 = vunpack.c.l.b16 %v640
    %v1149 = vunpack.c.h.b16 %v640
    %v1150 = vunpack.c.l.b16 %v641
    %v1151 = vunpack.c.h.b16 %v641
    %v1152 = vunpack.c.l.b16 %v642
    %v1153 = vunpack.c.h.b16 %v642
    %v1154 = vunpack.c.l.b16 %v643
    %v1155 = vunpack.c.h.b16 %v643
    %v1156 = vunpack.c.l.b16 %v644
    %v1157 = vunpack.c.h.b16 %v644
    %v1158 = vunpack.c.l.b16 %v645
    %v1159 = vunpack.c.h.b16 %v645
    %v1160 = vunpack.c.l.b16 %v646
    %v1161 = vunpack.c.h.b16 %v646
    %v1162 = vunpack.c.l.b16 %v647
    %v1163 = vunpack.c.h.b16 %v647
    %v1164 = vunpack.c.l.b16 %v648
    %v1165 = vunpack.c.h.b16 %v648
    %v1166 = vunpack.c.l.b16 %v649
    %v1167 = vunpack.c.h.b16 %v649
    %v1168 = vunpack.c.l.b16 %v650
    %v1169 = vunpack.c.h.b16 %v650
    %v1170 = vunpack.c.l.b16 %v651
    %v1171 = vunpack.c.h.b16 %v651
    %v1172 = vunpack.c.l.b16 %v652
    %v1173 = vunpack.c.h.b16 %v652
    %v1174 = vunpack.c.l.b16 %v653
    %v1175 = vunpack.c.h.b16 %v653
    %v1176 = vunpack.c.l.b16 %v654
    %v1177 = vunpack.c.h.b16 %v654
    %v1178 = vunpack.c.l.b16 %v655
    %v1179 = vunpack.c.h.b16 %v655
    %v1180 = vunpack.c.l.b16 %v656
    %v1181 = vunpack.c.h.b16 %v656
    %v1182 = vunpack.c.l.b16 %v657
    %v1183 = vunpack.c.h.b16 %v657
    %v1184 = vunpack.c.l.b16 %v658
    %v1185 = vunpack.c.h.b16 %v658
    %v1186 = vunpack.c.l.b16 %v659
    %v1187 = vunpack.c.h.b16 %v659
    %v1188 = vunpack.c.l.b16 %v660
    %v1189 = vunpack.c.h.b16 %v660
    %v1190 = vunpack.c.l.b16 %v661
    %v1191 = vunpack.c.h.b16 %v661
    %v1192 = vunpack.c.l.b16 %v662
    %v1193 = vunpack.c.h.b16 %v662
    %v1194 = vunpack.c.l.b16 %v663
    %v1195 = vunpack.c.h.b16 %v663
    %v1196 = vunpack.c.l.b16 %v664
    %v1197 = vunpack.c.h.b16 %v664
    %v1198 = vunpack.c.l.b16 %v665
    %v1199 = vunpack.c.h.b16 %v665
    %v1200 = vunpack.c.l.b16 %v666
    %v1201 = vunpack.c.h.b16 %v666
    %v1202 = vunpack.c.l.b16 %v667
    %v1203 = vunpack.c.h.b16 %v667
    %v1204 = vunpack.c.l.b16 %v668
    %v1205 = vunpack.c.h.b16 %v668
    %v1206 = vunpack.c.l.b16 %v669
    %v1207 = vunpack.c.h.b16 %v669
    %v1208 = vunpack.c.l.b16 %v670
    %v1209 = vunpack.c.h.b16 %v670
    %v1210 = vunpack.c.l.b16 %v671
    %v1211 = vunpack.c.h.b16 %v671
    %v1212 = vunpack.c.l.b16 %v672
    %v1213 = vunpack.c.h.b16 %v672
    %v1214 = vunpack.c.l.b16 %v673
    %v1215 = vunpack.c.h.b16 %v673
    %v1216 = vunpack.c.l.b16 %v674
    %v1217 = vunpack.c.h.b16 %v674
    %v1218 = vunpack.c.l.b16 %v675
    %v1219 = vunpack.c.h.b16 %v675
    %v1220 = vunpack.c.l.b16 %v676
    %v1221 = vunpack.c.h.b16 %v676
    %v1222 = vunpack.c.l.b16 %v677
    %v1223 = vunpack.c.h.b16 %v677
    %v1224 = vunpack.c.l.b16 %v678
    %v1225 = vunpack.c.h.b16 %v678
    %v1226 = vunpack.c.l.b16 %v679
    %v1227 = vunpack.c.h.b16 %v679
    %v1228 = vunpack.c.l.b16 %v680
    %v1229 = vunpack.c.h.b16 %v680
    %v1230 = vunpack.c.l.b16 %v681
    %v1231 = vunpack.c.h.b16 %v681
    %v1232 = vunpack.c.l.b16 %v682
    %v1233 = vunpack.c.h.b16 %v682
    %v1234 = vunpack.c.l.b16 %v683
    %v1235 = vunpack.c.h.b16 %v683
    %v1236 = vunpack.c.l.b16 %v684
    %v1237 = vunpack.c.h.b16 %v684
    %v1238 = vunpack.c.l.b16 %v685
    %v1239 = vunpack.c.h.b16 %v685
    %v1240 = vunpack.c.l.b16 %v686
    %v1241 = vunpack.c.h.b16 %v686
    %v1242 = vunpack.c.l.b16 %v687
    %v1243 = vunpack.c.h.b16 %v687
    %v1244 = vunpack.c.l.b16 %v688
    %v1245 = vunpack.c.h.b16 %v688
    %v1246 = vunpack.c.l.b16 %v689
    %v1247 = vunpack.c.h.b16 %v689
    %v1248 = vunpack.c.l.b16 %v690
    %v1249 = vunpack.c.h.b16 %v690
    %v1250 = vunpack.c.l.b16 %v691
    %v1251 = vunpack.c.h.b16 %v691
    %v1252 = vunpack.c.l.b16 %v692
    %v1253 = vunpack.c.h.b16 %v692
    %v1254 = vunpack.c.l.b16 %v693
    %v1255 = vunpack.c.h.b16 %v693
    %v1256 = vunpack.c.l.b16 %v694
    %v1257 = vunpack.c.h.b16 %v694
    %v1258 = vunpack.c.l.b16 %v695
    %v1259 = vunpack.c.h.b16 %v695
    %v1260 = vunpack.c.l.b16 %v696
    %v1261 = vunpack.c.h.b16 %v696
    %v1262 = vunpack.c.l.b16 %v697
    %v1263 = vunpack.c.h.b16 %v697
    %v1264 = vunpack.c.l.b16 %v698
    %v1265 = vunpack.c.h.b16 %v698
    %v1266 = vunpack.c.l.b16 %v699
    %v1267 = vunpack.c.h.b16 %v699
    %v1268 = vunpack.c.l.b16 %v700
    %v1269 = vunpack.c.h.b16 %v700
    %v1270 = vunpack.c.l.b16 %v701
    %v1271 = vunpack.c.h.b16 %v701
    %v1272 = vunpack.c.l.b16 %v702
    %v1273 = vunpack.c.h.b16 %v702
    %v1274 = vunpack.c.l.b16 %v703
    %v1275 = vunpack.c.h.b16 %v703
    %v1276 = vunpack.c.l.b16 %v704
    %v1277 = vunpack.c.h.b16 %v704
    %v1278 = vunpack.c.l.b16 %v705
    %v1279 = vunpack.c.h.b16 %v705
    %v1280 = vunpack.c.l.b16 %v706
    %v1281 = vunpack.c.h.b16 %v706
    %v1282 = vunpack.c.l.b16 %v707
    %v1283 = vunpack.c.h.b16 %v707
    %v1284 = vpack.c.b16 %v904, %v900
    %v1285 = vpack.c.b16 %v905, %v901
    %v1286 = vpack.c.b16 %v906, %v902
    %v1287 = vpack.c.b16 %v907, %v903
    %v1288 = vpack.c.b16 %v912, %v908
    %v1289 = vpack.c.b16 %v913, %v909
    %v1290 = vpack.c.b16 %v914, %v910
    %v1291 = vpack.c.b16 %v915, %v911
    %v1292 = vpack.c.b16 %v920, %v916
    %v1293 = vpack.c.b16 %v921, %v917
    %v1294 = vpack.c.b16 %v922, %v918
    %v1295 = vpack.c.b16 %v923, %v919
    %v1296 = vpack.c.b16 %v928, %v924
    %v1297 = vpack.c.b16 %v929, %v925
    %v1298 = vpack.c.b16 %v930, %v926
    %v1299 = vpack.c.b16 %v931, %v927
    %v1300 = vpack.c.b16 %v936, %v932
    %v1301 = vpack.c.b16 %v937, %v933
    %v1302 = vpack.c.b16 %v938, %v934
    %v1303 = vpack.c.b16 %v939, %v935
    %v1304 = vpack.c.b16 %v944, %v940
    %v1305 = vpack.c.b16 %v945, %v941
    %v1306 = vpack.c.b16 %v946, %v942
    %v1307 = vpack.c.b16 %v947, %v943
    %v1308 = vpack.c.b16 %v952, %v948
    %v1309 = vpack.c.b16 %v953, %v949
    %v1310 = vpack.c.b16 %v954, %v950
    %v1311 = vpack.c.b16 %v955, %v951
    %v1312 = vpack.c.b16 %v960, %v956
    %v1313 = vpack.c.b16 %v961, %v957
    %v1314 = vpack.c.b16 %v962, %v958
    %v1315 = vpack.c.b16 %v963, %v959
    %v1316 = vpack.c.b16 %v968, %v964
    %v1317 = vpack.c.b16 %v969, %v965
    %v1318 = vpack.c.b16 %v970, %v966
    %v1319 = vpack.c.b16 %v971, %v967
    %v1320 = vpack.c.b16 %v976, %v972
    %v1321 = vpack.c.b16 %v977, %v973
    %v1322 = vpack.c.b16 %v978, %v974
    %v1323 = vpack.c.b16 %v979, %v975
    %v1324 = vpack.c.b16 %v984, %v980
    %v1325 = vpack.c.b16 %v985, %v981
    %v1326 = vpack.c.b16 %v986, %v982
    %v1327 = vpack.c.b16 %v987, %v983
    %v1328 = vpack.c.b16 %v992, %v988
    %v1329 = vpack.c.b16 %v993, %v989
    %v1330 = vpack.c.b16 %v994, %v990
    %v1331 = vpack.c.b16 %v995, %v991
    %v1332 = vpack.c.b16 %v1000, %v996
    %v1333 = vpack.c.b16 %v1001, %v997
    %v1334 = vpack.c.b16 %v1002, %v998
    %v1335 = vpack.c.b16 %v1003, %v999
    %v1336 = vpack.c.b16 %v1008, %v1004
    %v1337 = vpack.c.b16 %v1009, %v1005
    %v1338 = vpack.c.b16 %v1010, %v1006
    %v1339 = vpack.c.b16 %v1011, %v1007
    %v1340 = vpack.c.b16 %v1016, %v1012
    %v1341 = vpack.c.b16 %v1017, %v1013
    %v1342 = vpack.c.b16 %v1018, %v1014
    %v1343 = vpack.c.b16 %v1019, %v1015
    %v1344 = vpack.c.b16 %v1024, %v1020
    %v1345 = vpack.c.b16 %v1025, %v1021
    %v1346 = vpack.c.b16 %v1026, %v1022
    %v1347 = vpack.c.b16 %v1027, %v1023
    %v1348 = vpack.c.b16 %v1032, %v1028
    %v1349 = vpack.c.b16 %v1033, %v1029
    %v1350 = vpack.c.b16 %v1034, %v1030
    %v1351 = vpack.c.b16 %v1035, %v1031
    %v1352 = vpack.c.b16 %v1040, %v1036
    %v1353 = vpack.c.b16 %v1041, %v1037
    %v1354 = vpack.c.b16 %v1042, %v1038
    %v1355 = vpack.c.b16 %v1043, %v1039
    %v1356 = vpack.c.b16 %v1048, %v1044
    %v1357 = vpack.c.b16 %v1049, %v1045
    %v1358 = vpack.c.b16 %v1050, %v1046
    %v1359 = vpack.c.b16 %v1051, %v1047
    %v1360 = vpack.c.b16 %v1056, %v1052
    %v1361 = vpack.c.b16 %v1057, %v1053
    %v1362 = vpack.c.b16 %v1058, %v1054
    %v1363 = vpack.c.b16 %v1059, %v1055
    %v1364 = vpack.c.b16 %v1064, %v1060
    %v1365 = vpack.c.b16 %v1065, %v1061
    %v1366 = vpack.c.b16 %v1066, %v1062
    %v1367 = vpack.c.b16 %v1067, %v1063
    %v1368 = vpack.c.b16 %v1072, %v1068
    %v1369 = vpack.c.b16 %v1073, %v1069
    %v1370 = vpack.c.b16 %v1074, %v1070
    %v1371 = vpack.c.b16 %v1075, %v1071
    %v1372 = vpack.c.b16 %v1080, %v1076
    %v1373 = vpack.c.b16 %v1081, %v1077
    %v1374 = vpack.c.b16 %v1082, %v1078
    %v1375 = vpack.c.b16 %v1083, %v1079
    %v1376 = vpack.c.b16 %v1088, %v1084
    %v1377 = vpack.c.b16 %v1089, %v1085
    %v1378 = vpack.c.b16 %v1090, %v1086
    %v1379 = vpack.c.b16 %v1091, %v1087
    %v1380 = vpack.c.b16 %v1096, %v1092
    %v1381 = vpack.c.b16 %v1097, %v1093
    %v1382 = vpack.c.b16 %v1098, %v1094
    %v1383 = vpack.c.b16 %v1099, %v1095
    %v1384 = vpack.c.b16 %v1104, %v1100
    %v1385 = vpack.c.b16 %v1105, %v1101
    %v1386 = vpack.c.b16 %v1106, %v1102
    %v1387 = vpack.c.b16 %v1107, %v1103
    %v1388 = vpack.c.b16 %v1112, %v1108
    %v1389 = vpack.c.b16 %v1113, %v1109
    %v1390 = vpack.c.b16 %v1114, %v1110
    %v1391 = vpack.c.b16 %v1115, %v1111
    %v1392 = vpack.c.b16 %v1120, %v1116
    %v1393 = vpack.c.b16 %v1121, %v1117
    %v1394 = vpack.c.b16 %v1122, %v1118
    %v1395 = vpack.c.b16 %v1123, %v1119
    %v1396 = vpack.c.b16 %v1128, %v1124
    %v1397 = vpack.c.b16 %v1129, %v1125
    %v1398 = vpack.c.b16 %v1130, %v1126
    %v1399 = vpack.c.b16 %v1131, %v1127
    %v1400 = vpack.c.b16 %v1136, %v1132
    %v1401 = vpack.c.b16 %v1137, %v1133
    %v1402 = vpack.c.b16 %v1138, %v1134
    %v1403 = vpack.c.b16 %v1139, %v1135
    %v1404 = vpack.c.b16 %v1144, %v1140
    %v1405 = vpack.c.b16 %v1145, %v1141
    %v1406 = vpack.c.b16 %v1146, %v1142
    %v1407 = vpack.c.b16 %v1147, %v1143
    %v1408 = vpack.c.b16 %v1152, %v1148
    %v1409 = vpack.c.b16 %v1153, %v1149
    %v1410 = vpack.c.b16 %v1154, %v1150
    %v1411 = vpack.c.b16 %v1155, %v1151
    %v1412 = vpack.c.b16 %v1160, %v1156
    %v1413 = vpack.c.b16 %v1161, %v1157
    %v1414 = vpack.c.b16 %v1162, %v1158
    %v1415 = vpack.c.b16 %v1163, %v1159
    %v1416 = vpack.c.b16 %v1168, %v1164
    %v1417 = vpack.c.b16 %v1169, %v1165
    %v1418 = vpack.c.b16 %v1170, %v1166
    %v1419 = vpack.c.b16 %v1171, %v1167
    %v1420 = vpack.c.b16 %v1176, %v1172
    %v1421 = vpack.c.b16 %v1177, %v1173
    %v1422 = vpack.c.b16 %v1178, %v1174
    %v1423 = vpack.c.b16 %v1179, %v1175
    %v1424 = vpack.c.b16 %v1184, %v1180
    %v1425 = vpack.c.b16 %v1185, %v1181
    %v1426 = vpack.c.b16 %v1186, %v1182
    %v1427 = vpack.c.b16 %v1187, %v1183
    %v1428 = vpack.c.b16 %v1192, %v1188
    %v1429 = vpack.c.b16 %v1193, %v1189
    %v1430 = vpack.c.b16 %v1194, %v1190
    %v1431 = vpack.c.b16 %v1195, %v1191
    %v1432 = vpack.c.b16 %v1200, %v1196
    %v1433 = vpack.c.b16 %v1201, %v1197
    %v1434 = vpack.c.b16 %v1202, %v1198
    %v1435 = vpack.c.b16 %v1203, %v1199
    %v1436 = vpack.c.b16 %v1208, %v1204
    %v1437 = vpack.c.b16 %v1209, %v1205
    %v1438 = vpack.c.b16 %v1210, %v1206
    %v1439 = vpack.c.b16 %v1211, %v1207
    %v1440 = vpack.c.b16 %v1216, %v1212
    %v1441 = vpack.c.b16 %v1217, %v1213
    %v1442 = vpack.c.b16 %v1218, %v1214
    %v1443 = vpack.c.b16 %v1219, %v1215
    %v1444 = vpack.c.b16 %v1224, %v1220
    %v1445 = vpack.c.b16 %v1225, %v1221
    %v1446 = vpack.c.b16 %v1226, %v1222
    %v1447 = vpack.c.b16 %v1227, %v1223
    %v1448 = vpack.c.b16 %v1232, %v1228
    %v1449 = vpack.c.b16 %v1233, %v1229
    %v1450 = vpack.c.b16 %v1234, %v1230
    %v1451 = vpack.c.b16 %v1235, %v1231
    %v1452 = vpack.c.b16 %v1240, %v1236
    %v1453 = vpack.c.b16 %v1241, %v1237
    %v1454 = vpack.c.b16 %v1242, %v1238
    %v1455 = vpack.c.b16 %v1243, %v1239
    %v1456 = vpack.c.b16 %v1248, %v1244
    %v1457 = vpack.c.b16 %v1249, %v1245
    %v1458 = vpack.c.b16 %v1250, %v1246
    %v1459 = vpack.c.b16 %v1251, %v1247
    %v1460 = vpack.c.b16 %v1256, %v1252
    %v1461 = vpack.c.b16 %v1257, %v1253
    %v1462 = vpack.c.b16 %v1258, %v1254
    %v1463 = vpack.c.b16 %v1259, %v1255
    %v1464 = vpack.c.b16 %v1264, %v1260
    %v1465 = vpack.c.b16 %v1265, %v1261
    %v1466 = vpack.c.b16 %v1266, %v1262
    %v1467 = vpack.c.b16 %v1267, %v1263
    %v1468 = vpack.c.b16 %v1272, %v1268
    %v1469 = vpack.c.b16 %v1273, %v1269
    %v1470 = vpack.c.b16 %v1274, %v1270
    %v1471 = vpack.c.b16 %v1275, %v1271
    %v1472 = vpack.c.b16 %v1280, %v1276
    %v1473 = vpack.c.b16 %v1281, %v1277
    %v1474 = vpack.c.b16 %v1282, %v1278
    %v1475 = vpack.c.b16 %v1283, %v1279
    %1668 = vmatprep.subr.bf16.mxu0 %v1285
    %1669 = vmatpush1.bf16.msra.mxu0 %v1284
    %1670 = vmatprep.subr.bf16.mxu0 %v1289
    %1671 = vmatpush1.bf16.msra.mxu0 %v1288
    %1672 = vmatprep.subr.bf16.mxu0 %v1293
    %1673 = vmatpush1.bf16.msra.mxu0 %v1292
    %1674 = vmatprep.subr.bf16.mxu0 %v1297
    %1675 = vmatpush1.bf16.msra.mxu0 %v1296
    %1676 = vmatprep.subr.bf16.mxu0 %v1301
    %1677 = vmatpush1.bf16.msra.mxu0 %v1300
    %1678 = vmatprep.subr.bf16.mxu0 %v1305
    %1679 = vmatpush1.bf16.msra.mxu0 %v1304
    %1680 = vmatprep.subr.bf16.mxu0 %v1309
    %1681 = vmatpush1.bf16.msra.mxu0 %v1308
    %1682 = vmatprep.subr.bf16.mxu0 %v1313
    %1683 = vmatpush1.bf16.msra.mxu0 %v1312
    %1684 = vmatprep.subr.bf16.mxu0 %v1317
    %1685 = vmatpush1.bf16.msra.mxu0 %v1316
    %1686 = vmatprep.subr.bf16.mxu0 %v1321
    %1687 = vmatpush1.bf16.msra.mxu0 %v1320
    %1688 = vmatprep.subr.bf16.mxu0 %v1325
    %1689 = vmatpush1.bf16.msra.mxu0 %v1324
    %1690 = vmatprep.subr.bf16.mxu0 %v1329
    %1691 = vmatpush1.bf16.msra.mxu0 %v1328
    %1692 = vmatprep.subr.bf16.mxu0 %v1333
    %1693 = vmatpush1.bf16.msra.mxu0 %v1332
    %1694 = vmatprep.subr.bf16.mxu0 %v1337
    %1695 = vmatpush1.bf16.msra.mxu0 %v1336
    %1696 = vmatprep.subr.bf16.mxu0 %v1341
    %1697 = vmatpush1.bf16.msra.mxu0 %v1340
    %1698 = vmatprep.subr.bf16.mxu0 %v1345
    %1699 = vmatpush1.bf16.msra.mxu0 %v1344
    %1700 = vmatprep.mubr.bf16.mxu0 %v205
    %1701 = vmatmul.mubr.bf16.gmra.mrb[0].mxu0 %v204
    %v1702 = vpop.f32.mrb[0].mxu0
    %v1703 = vadd.f32 0.0, %v1702
    %v1704 = vpop.f32.mrb[0].mxu0
    %v1705 = vadd.f32 0.0, %v1704
    %v1706 = vpop.f32.mrb[0].mxu0
    %v1707 = vpop.f32.mrb[0].mxu0
    %1708 = vdwg.mxu0
    %1709 = vmatprep.subr.bf16.mxu0 %v1349
    %1710 = vmatpush1.bf16.msra.mxu0 %v1348
    %1711 = vmatprep.subr.bf16.mxu0 %v1353
    %1712 = vmatpush1.bf16.msra.mxu0 %v1352
    %1713 = vmatprep.subr.bf16.mxu0 %v1357
    %1714 = vmatpush1.bf16.msra.mxu0 %v1356
    %1715 = vmatprep.subr.bf16.mxu0 %v1361
    %1716 = vmatpush1.bf16.msra.mxu0 %v1360
    %1717 = vmatprep.subr.bf16.mxu0 %v1365
    %1718 = vmatpush1.bf16.msra.mxu0 %v1364
    %1719 = vmatprep.subr.bf16.mxu0 %v1369
    %1720 = vmatpush1.bf16.msra.mxu0 %v1368
    %1721 = vmatprep.subr.bf16.mxu0 %v1373
    %1722 = vmatpush1.bf16.msra.mxu0 %v1372
    %1723 = vmatprep.subr.bf16.mxu0 %v1377
    %1724 = vmatpush1.bf16.msra.mxu0 %v1376
    %1725 = vmatprep.subr.bf16.mxu0 %v1381
    %1726 = vmatpush1.bf16.msra.mxu0 %v1380
    %1727 = vmatprep.subr.bf16.mxu0 %v1385
    %1728 = vmatpush1.bf16.msra.mxu0 %v1384
    %1729 = vmatprep.subr.bf16.mxu0 %v1389
    %1730 = vmatpush1.bf16.msra.mxu0 %v1388
    %1731 = vmatprep.subr.bf16.mxu0 %v1393
    %1732 = vmatpush1.bf16.msra.mxu0 %v1392
    %1733 = vmatprep.subr.bf16.mxu0 %v1397
    %1734 = vmatpush1.bf16.msra.mxu0 %v1396
    %1735 = vmatprep.subr.bf16.mxu0 %v1401
    %1736 = vmatpush1.bf16.msra.mxu0 %v1400
    %1737 = vmatprep.subr.bf16.mxu0 %v1405
    %1738 = vmatpush1.bf16.msra.mxu0 %v1404
    %1739 = vmatprep.subr.bf16.mxu0 %v1409
    %1740 = vmatpush1.bf16.msra.mxu0 %v1408
    %1741 = vmatprep.mubr.bf16.mxu0 %v207
    %1742 = vmatmul.mubr.bf16.gmra.mrb[0].mxu0 %v206
    %v1743 = vpop.f32.mrb[0].mxu0
    %v1744 = vadd.f32 %v1703, %v1743
    %v1745 = vpop.f32.mrb[0].mxu0
    %v1746 = vadd.f32 %v1705, %v1745
    %v1747 = vpop.f32.mrb[0].mxu0
    %v1748 = vpop.f32.mrb[0].mxu0
    %1749 = vdwg.mxu0
    %1750 = vmatprep.subr.bf16.mxu0 %v1413
    %1751 = vmatpush1.bf16.msra.mxu0 %v1412
    %1752 = vmatprep.subr.bf16.mxu0 %v1417
    %1753 = vmatpush1.bf16.msra.mxu0 %v1416
    %1754 = vmatprep.subr.bf16.mxu0 %v1421
    %1755 = vmatpush1.bf16.msra.mxu0 %v1420
    %1756 = vmatprep.subr.bf16.mxu0 %v1425
    %1757 = vmatpush1.bf16.msra.mxu0 %v1424
    %1758 = vmatprep.subr.bf16.mxu0 %v1429
    %1759 = vmatpush1.bf16.msra.mxu0 %v1428
    %1760 = vmatprep.subr.bf16.mxu0 %v1433
    %1761 = vmatpush1.bf16.msra.mxu0 %v1432
    %1762 = vmatprep.subr.bf16.mxu0 %v1437
    %1763 = vmatpush1.bf16.msra.mxu0 %v1436
    %1764 = vmatprep.subr.bf16.mxu0 %v1441
    %1765 = vmatpush1.bf16.msra.mxu0 %v1440
    %1766 = vmatprep.subr.bf16.mxu0 %v1445
    %1767 = vmatpush1.bf16.msra.mxu0 %v1444
    %1768 = vmatprep.subr.bf16.mxu0 %v1449
    %1769 = vmatpush1.bf16.msra.mxu0 %v1448
    %1770 = vmatprep.subr.bf16.mxu0 %v1453
    %1771 = vmatpush1.bf16.msra.mxu0 %v1452
    %1772 = vmatprep.subr.bf16.mxu0 %v1457
    %1773 = vmatpush1.bf16.msra.mxu0 %v1456
    %1774 = vmatprep.subr.bf16.mxu0 %v1461
    %1775 = vmatpush1.bf16.msra.mxu0 %v1460
    %1776 = vmatprep.subr.bf16.mxu0 %v1465
    %1777 = vmatpush1.bf16.msra.mxu0 %v1464
    %1778 = vmatprep.subr.bf16.mxu0 %v1469
    %1779 = vmatpush1.bf16.msra.mxu0 %v1468
    %1780 = vmatprep.subr.bf16.mxu0 %v1473
    %1781 = vmatpush1.bf16.msra.mxu0 %v1472
    %1782 = vmatprep.mubr.bf16.mxu0 %v209
    %1783 = vmatmul.mubr.bf16.gmra.mrb[0].mxu0 %v208
    %v1784 = vpop.f32.mrb[0].mxu0
    %v1785 = vadd.f32 %v1744, %v1784
    %v1786 = vpop.f32.mrb[0].mxu0
    %v1787 = vadd.f32 %v1746, %v1786
    %v1788 = vpop.f32.mrb[0].mxu0
    %v1789 = vpop.f32.mrb[0].mxu0
    %1790 = vdwg.mxu0
    %1791 = vmatprep.subr.bf16.mxu0 %v1287
    %1792 = vmatpush1.bf16.msra.mxu0 %v1286
    %1793 = vmatprep.subr.bf16.mxu0 %v1291
    %1794 = vmatpush1.bf16.msra.mxu0 %v1290
    %1795 = vmatprep.subr.bf16.mxu0 %v1295
    %1796 = vmatpush1.bf16.msra.mxu0 %v1294
    %1797 = vmatprep.subr.bf16.mxu0 %v1299
    %1798 = vmatpush1.bf16.msra.mxu0 %v1298
    %1799 = vmatprep.subr.bf16.mxu0 %v1303
    %1800 = vmatpush1.bf16.msra.mxu0 %v1302
    %1801 = vmatprep.subr.bf16.mxu0 %v1307
    %1802 = vmatpush1.bf16.msra.mxu0 %v1306
    %1803 = vmatprep.subr.bf16.mxu0 %v1311
    %1804 = vmatpush1.bf16.msra.mxu0 %v1310
    %1805 = vmatprep.subr.bf16.mxu0 %v1315
    %1806 = vmatpush1.bf16.msra.mxu0 %v1314
    %1807 = vmatprep.subr.bf16.mxu0 %v1319
    %1808 = vmatpush1.bf16.msra.mxu0 %v1318
    %1809 = vmatprep.subr.bf16.mxu0 %v1323
    %1810 = vmatpush1.bf16.msra.mxu0 %v1322
    %1811 = vmatprep.subr.bf16.mxu0 %v1327
    %1812 = vmatpush1.bf16.msra.mxu0 %v1326
    %1813 = vmatprep.subr.bf16.mxu0 %v1331
    %1814 = vmatpush1.bf16.msra.mxu0 %v1330
    %1815 = vmatprep.subr.bf16.mxu0 %v1335
    %1816 = vmatpush1.bf16.msra.mxu0 %v1334
    %1817 = vmatprep.subr.bf16.mxu0 %v1339
    %1818 = vmatpush1.bf16.msra.mxu0 %v1338
    %1819 = vmatprep.subr.bf16.mxu0 %v1343
    %1820 = vmatpush1.bf16.msra.mxu0 %v1342
    %1821 = vmatprep.subr.bf16.mxu0 %v1347
    %1822 = vmatpush1.bf16.msra.mxu0 %v1346
    %1823 = vmatprep.mubr.bf16.mxu0 %v205
    %1824 = vmatmul.mubr.bf16.gmra.mrb[0].mxu0 %v204
    %v1825 = vpop.f32.mrb[0].mxu0
    %v1826 = vadd.f32 0.0, %v1825
    %v1827 = vpop.f32.mrb[0].mxu0
    %v1828 = vadd.f32 0.0, %v1827
    %v1829 = vpop.f32.mrb[0].mxu0
    %v1830 = vpop.f32.mrb[0].mxu0
    %1831 = vdwg.mxu0
    %1832 = vmatprep.subr.bf16.mxu0 %v1351
    %1833 = vmatpush1.bf16.msra.mxu0 %v1350
    %1834 = vmatprep.subr.bf16.mxu0 %v1355
    %1835 = vmatpush1.bf16.msra.mxu0 %v1354
    %1836 = vmatprep.subr.bf16.mxu0 %v1359
    %1837 = vmatpush1.bf16.msra.mxu0 %v1358
    %1838 = vmatprep.subr.bf16.mxu0 %v1363
    %1839 = vmatpush1.bf16.msra.mxu0 %v1362
    %1840 = vmatprep.subr.bf16.mxu0 %v1367
    %1841 = vmatpush1.bf16.msra.mxu0 %v1366
    %1842 = vmatprep.subr.bf16.mxu0 %v1371
    %1843 = vmatpush1.bf16.msra.mxu0 %v1370
    %1844 = vmatprep.subr.bf16.mxu0 %v1375
    %1845 = vmatpush1.bf16.msra.mxu0 %v1374
    %1846 = vmatprep.subr.bf16.mxu0 %v1379
    %1847 = vmatpush1.bf16.msra.mxu0 %v1378
    %1848 = vmatprep.subr.bf16.mxu0 %v1383
    %1849 = vmatpush1.bf16.msra.mxu0 %v1382
    %1850 = vmatprep.subr.bf16.mxu0 %v1387
    %1851 = vmatpush1.bf16.msra.mxu0 %v1386
    %1852 = vmatprep.subr.bf16.mxu0 %v1391
    %1853 = vmatpush1.bf16.msra.mxu0 %v1390
    %1854 = vmatprep.subr.bf16.mxu0 %v1395
    %1855 = vmatpush1.bf16.msra.mxu0 %v1394
    %1856 = vmatprep.subr.bf16.mxu0 %v1399
    %1857 = vmatpush1.bf16.msra.mxu0 %v1398
    %1858 = vmatprep.subr.bf16.mxu0 %v1403
    %1859 = vmatpush1.bf16.msra.mxu0 %v1402
    %1860 = vmatprep.subr.bf16.mxu0 %v1407
    %1861 = vmatpush1.bf16.msra.mxu0 %v1406
    %1862 = vmatprep.subr.bf16.mxu0 %v1411
    %1863 = vmatpush1.bf16.msra.mxu0 %v1410
    %1864 = vmatprep.mubr.bf16.mxu0 %v207
    %1865 = vmatmul.mubr.bf16.gmra.mrb[0].mxu0 %v206
    %v1866 = vpop.f32.mrb[0].mxu0
    %v1867 = vadd.f32 %v1826, %v1866
    %v1868 = vpop.f32.mrb[0].mxu0
    %v1869 = vadd.f32 %v1828, %v1868
    %v1870 = vpop.f32.mrb[0].mxu0
    %v1871 = vpop.f32.mrb[0].mxu0
    %1872 = vdwg.mxu0
    %1873 = vmatprep.subr.bf16.mxu0 %v1415
    %1874 = vmatpush1.bf16.msra.mxu0 %v1414
    %1875 = vmatprep.subr.bf16.mxu0 %v1419
    %1876 = vmatpush1.bf16.msra.mxu0 %v1418
    %1877 = vmatprep.subr.bf16.mxu0 %v1423
    %1878 = vmatpush1.bf16.msra.mxu0 %v1422
    %1879 = vmatprep.subr.bf16.mxu0 %v1427
    %1880 = vmatpush1.bf16.msra.mxu0 %v1426
    %1881 = vmatprep.subr.bf16.mxu0 %v1431
    %1882 = vmatpush1.bf16.msra.mxu0 %v1430
    %1883 = vmatprep.subr.bf16.mxu0 %v1435
    %1884 = vmatpush1.bf16.msra.mxu0 %v1434
    %1885 = vmatprep.subr.bf16.mxu0 %v1439
    %1886 = vmatpush1.bf16.msra.mxu0 %v1438
    %1887 = vmatprep.subr.bf16.mxu0 %v1443
    %1888 = vmatpush1.bf16.msra.mxu0 %v1442
    %1889 = vmatprep.subr.bf16.mxu0 %v1447
    %1890 = vmatpush1.bf16.msra.mxu0 %v1446
    %1891 = vmatprep.subr.bf16.mxu0 %v1451
    %1892 = vmatpush1.bf16.msra.mxu0 %v1450
    %1893 = vmatprep.subr.bf16.mxu0 %v1455
    %1894 = vmatpush1.bf16.msra.mxu0 %v1454
    %1895 = vmatprep.subr.bf16.mxu0 %v1459
    %1896 = vmatpush1.bf16.msra.mxu0 %v1458
    %1897 = vmatprep.subr.bf16.mxu0 %v1463
    %1898 = vmatpush1.bf16.msra.mxu0 %v1462
    %1899 = vmatprep.subr.bf16.mxu0 %v1467
    %1900 = vmatpush1.bf16.msra.mxu0 %v1466
    %1901 = vmatprep.subr.bf16.mxu0 %v1471
    %1902 = vmatpush1.bf16.msra.mxu0 %v1470
    %1903 = vmatprep.subr.bf16.mxu0 %v1475
    %1904 = vmatpush1.bf16.msra.mxu0 %v1474
    %1905 = vmatprep.mubr.bf16.mxu0 %v209
    %1906 = vmatmul.mubr.bf16.gmra.mrb[0].mxu0 %v208
    %v1907 = vpop.f32.mrb[0].mxu0
    %v1908 = vadd.f32 %v1867, %v1907
    %v1909 = vpop.f32.mrb[0].mxu0
    %v1910 = vadd.f32 %v1869, %v1909
    %v1911 = vpop.f32.mrb[0].mxu0
    %v1912 = vpop.f32.mrb[0].mxu0
    %1913 = vdwg.mxu0
    %v2106 = vunpack.c.l.b16 %v324
    %v2107 = vunpack.c.h.b16 %v324
    %v2108 = vunpack.c.l.b16 %v325
    %v2109 = vunpack.c.h.b16 %v325
    %v2110 = vunpack.c.l.b16 %v326
    %v2111 = vunpack.c.h.b16 %v326
    %v2112 = vunpack.c.l.b16 %v327
    %v2113 = vunpack.c.h.b16 %v327
    %v2114 = vunpack.c.l.b16 %v328
    %v2115 = vunpack.c.h.b16 %v328
    %v2116 = vunpack.c.l.b16 %v329
    %v2117 = vunpack.c.h.b16 %v329
    %v2118 = vunpack.c.l.b16 %v330
    %v2119 = vunpack.c.h.b16 %v330
    %v2120 = vunpack.c.l.b16 %v331
    %v2121 = vunpack.c.h.b16 %v331
    %v2122 = vunpack.c.l.b16 %v332
    %v2123 = vunpack.c.h.b16 %v332
    %v2124 = vunpack.c.l.b16 %v333
    %v2125 = vunpack.c.h.b16 %v333
    %v2126 = vunpack.c.l.b16 %v334
    %v2127 = vunpack.c.h.b16 %v334
    %v2128 = vunpack.c.l.b16 %v335
    %v2129 = vunpack.c.h.b16 %v335
    %v2130 = vunpack.c.l.b16 %v336
    %v2131 = vunpack.c.h.b16 %v336
    %v2132 = vunpack.c.l.b16 %v337
    %v2133 = vunpack.c.h.b16 %v337
    %v2134 = vunpack.c.l.b16 %v338
    %v2135 = vunpack.c.h.b16 %v338
    %v2136 = vunpack.c.l.b16 %v339
    %v2137 = vunpack.c.h.b16 %v339
    %v2138 = vunpack.c.l.b16 %v340
    %v2139 = vunpack.c.h.b16 %v340
    %v2140 = vunpack.c.l.b16 %v341
    %v2141 = vunpack.c.h.b16 %v341
    %v2142 = vunpack.c.l.b16 %v342
    %v2143 = vunpack.c.h.b16 %v342
    %v2144 = vunpack.c.l.b16 %v343
    %v2145 = vunpack.c.h.b16 %v343
    %v2146 = vunpack.c.l.b16 %v344
    %v2147 = vunpack.c.h.b16 %v344
    %v2148 = vunpack.c.l.b16 %v345
    %v2149 = vunpack.c.h.b16 %v345
    %v2150 = vunpack.c.l.b16 %v346
    %v2151 = vunpack.c.h.b16 %v346
    %v2152 = vunpack.c.l.b16 %v347
    %v2153 = vunpack.c.h.b16 %v347
    %v2154 = vunpack.c.l.b16 %v348
    %v2155 = vunpack.c.h.b16 %v348
    %v2156 = vunpack.c.l.b16 %v349
    %v2157 = vunpack.c.h.b16 %v349
    %v2158 = vunpack.c.l.b16 %v350
    %v2159 = vunpack.c.h.b16 %v350
    %v2160 = vunpack.c.l.b16 %v351
    %v2161 = vunpack.c.h.b16 %v351
    %v2162 = vunpack.c.l.b16 %v352
    %v2163 = vunpack.c.h.b16 %v352
    %v2164 = vunpack.c.l.b16 %v353
    %v2165 = vunpack.c.h.b16 %v353
    %v2166 = vunpack.c.l.b16 %v354
    %v2167 = vunpack.c.h.b16 %v354
    %v2168 = vunpack.c.l.b16 %v355
    %v2169 = vunpack.c.h.b16 %v355
    %v2170 = vunpack.c.l.b16 %v356
    %v2171 = vunpack.c.h.b16 %v356
    %v2172 = vunpack.c.l.b16 %v357
    %v2173 = vunpack.c.h.b16 %v357
    %v2174 = vunpack.c.l.b16 %v358
    %v2175 = vunpack.c.h.b16 %v358
    %v2176 = vunpack.c.l.b16 %v359
    %v2177 = vunpack.c.h.b16 %v359
    %v2178 = vunpack.c.l.b16 %v360
    %v2179 = vunpack.c.h.b16 %v360
    %v2180 = vunpack.c.l.b16 %v361
    %v2181 = vunpack.c.h.b16 %v361
    %v2182 = vunpack.c.l.b16 %v362
    %v2183 = vunpack.c.h.b16 %v362
    %v2184 = vunpack.c.l.b16 %v363
    %v2185 = vunpack.c.h.b16 %v363
    %v2186 = vunpack.c.l.b16 %v364
    %v2187 = vunpack.c.h.b16 %v364
    %v2188 = vunpack.c.l.b16 %v365
    %v2189 = vunpack.c.h.b16 %v365
    %v2190 = vunpack.c.l.b16 %v366
    %v2191 = vunpack.c.h.b16 %v366
    %v2192 = vunpack.c.l.b16 %v367
    %v2193 = vunpack.c.h.b16 %v367
    %v2194 = vunpack.c.l.b16 %v368
    %v2195 = vunpack.c.h.b16 %v368
    %v2196 = vunpack.c.l.b16 %v369
    %v2197 = vunpack.c.h.b16 %v369
    %v2198 = vunpack.c.l.b16 %v370
    %v2199 = vunpack.c.h.b16 %v370
    %v2200 = vunpack.c.l.b16 %v371
    %v2201 = vunpack.c.h.b16 %v371
    %v2202 = vunpack.c.l.b16 %v372
    %v2203 = vunpack.c.h.b16 %v372
    %v2204 = vunpack.c.l.b16 %v373
    %v2205 = vunpack.c.h.b16 %v373
    %v2206 = vunpack.c.l.b16 %v374
    %v2207 = vunpack.c.h.b16 %v374
    %v2208 = vunpack.c.l.b16 %v375
    %v2209 = vunpack.c.h.b16 %v375
    %v2210 = vunpack.c.l.b16 %v376
    %v2211 = vunpack.c.h.b16 %v376
    %v2212 = vunpack.c.l.b16 %v377
    %v2213 = vunpack.c.h.b16 %v377
    %v2214 = vunpack.c.l.b16 %v378
    %v2215 = vunpack.c.h.b16 %v378
    %v2216 = vunpack.c.l.b16 %v379
    %v2217 = vunpack.c.h.b16 %v379
    %v2218 = vunpack.c.l.b16 %v380
    %v2219 = vunpack.c.h.b16 %v380
    %v2220 = vunpack.c.l.b16 %v381
    %v2221 = vunpack.c.h.b16 %v381
    %v2222 = vunpack.c.l.b16 %v382
    %v2223 = vunpack.c.h.b16 %v382
    %v2224 = vunpack.c.l.b16 %v383
    %v2225 = vunpack.c.h.b16 %v383
    %v2226 = vunpack.c.l.b16 %v384
    %v2227 = vunpack.c.h.b16 %v384
    %v2228 = vunpack.c.l.b16 %v385
    %v2229 = vunpack.c.h.b16 %v385
    %v2230 = vunpack.c.l.b16 %v386
    %v2231 = vunpack.c.h.b16 %v386
    %v2232 = vunpack.c.l.b16 %v387
    %v2233 = vunpack.c.h.b16 %v387
    %v2234 = vunpack.c.l.b16 %v388
    %v2235 = vunpack.c.h.b16 %v388
    %v2236 = vunpack.c.l.b16 %v389
    %v2237 = vunpack.c.h.b16 %v389
    %v2238 = vunpack.c.l.b16 %v390
    %v2239 = vunpack.c.h.b16 %v390
    %v2240 = vunpack.c.l.b16 %v391
    %v2241 = vunpack.c.h.b16 %v391
    %v2242 = vunpack.c.l.b16 %v392
    %v2243 = vunpack.c.h.b16 %v392
    %v2244 = vunpack.c.l.b16 %v393
    %v2245 = vunpack.c.h.b16 %v393
    %v2246 = vunpack.c.l.b16 %v394
    %v2247 = vunpack.c.h.b16 %v394
    %v2248 = vunpack.c.l.b16 %v395
    %v2249 = vunpack.c.h.b16 %v395
    %v2250 = vunpack.c.l.b16 %v396
    %v2251 = vunpack.c.h.b16 %v396
    %v2252 = vunpack.c.l.b16 %v397
    %v2253 = vunpack.c.h.b16 %v397
    %v2254 = vunpack.c.l.b16 %v398
    %v2255 = vunpack.c.h.b16 %v398
    %v2256 = vunpack.c.l.b16 %v399
    %v2257 = vunpack.c.h.b16 %v399
    %v2258 = vunpack.c.l.b16 %v400
    %v2259 = vunpack.c.h.b16 %v400
    %v2260 = vunpack.c.l.b16 %v401
    %v2261 = vunpack.c.h.b16 %v401
    %v2262 = vunpack.c.l.b16 %v402
    %v2263 = vunpack.c.h.b16 %v402
    %v2264 = vunpack.c.l.b16 %v403
    %v2265 = vunpack.c.h.b16 %v403
    %v2266 = vunpack.c.l.b16 %v404
    %v2267 = vunpack.c.h.b16 %v404
    %v2268 = vunpack.c.l.b16 %v405
    %v2269 = vunpack.c.h.b16 %v405
    %v2270 = vunpack.c.l.b16 %v406
    %v2271 = vunpack.c.h.b16 %v406
    %v2272 = vunpack.c.l.b16 %v407
    %v2273 = vunpack.c.h.b16 %v407
    %v2274 = vunpack.c.l.b16 %v408
    %v2275 = vunpack.c.h.b16 %v408
    %v2276 = vunpack.c.l.b16 %v409
    %v2277 = vunpack.c.h.b16 %v409
    %v2278 = vunpack.c.l.b16 %v410
    %v2279 = vunpack.c.h.b16 %v410
    %v2280 = vunpack.c.l.b16 %v411
    %v2281 = vunpack.c.h.b16 %v411
    %v2282 = vunpack.c.l.b16 %v412
    %v2283 = vunpack.c.h.b16 %v412
    %v2284 = vunpack.c.l.b16 %v413
    %v2285 = vunpack.c.h.b16 %v413
    %v2286 = vunpack.c.l.b16 %v414
    %v2287 = vunpack.c.h.b16 %v414
    %v2288 = vunpack.c.l.b16 %v415
    %v2289 = vunpack.c.h.b16 %v415
    %v2290 = vunpack.c.l.b16 %v416
    %v2291 = vunpack.c.h.b16 %v416
    %v2292 = vunpack.c.l.b16 %v417
    %v2293 = vunpack.c.h.b16 %v417
    %v2294 = vunpack.c.l.b16 %v418
    %v2295 = vunpack.c.h.b16 %v418
    %v2296 = vunpack.c.l.b16 %v419
    %v2297 = vunpack.c.h.b16 %v419
    %v2298 = vunpack.c.l.b16 %v420
    %v2299 = vunpack.c.h.b16 %v420
    %v2300 = vunpack.c.l.b16 %v421
    %v2301 = vunpack.c.h.b16 %v421
    %v2302 = vunpack.c.l.b16 %v422
    %v2303 = vunpack.c.h.b16 %v422
    %v2304 = vunpack.c.l.b16 %v423
    %v2305 = vunpack.c.h.b16 %v423
    %v2306 = vunpack.c.l.b16 %v424
    %v2307 = vunpack.c.h.b16 %v424
    %v2308 = vunpack.c.l.b16 %v425
    %v2309 = vunpack.c.h.b16 %v425
    %v2310 = vunpack.c.l.b16 %v426
    %v2311 = vunpack.c.h.b16 %v426
    %v2312 = vunpack.c.l.b16 %v427
    %v2313 = vunpack.c.h.b16 %v427
    %v2314 = vunpack.c.l.b16 %v428
    %v2315 = vunpack.c.h.b16 %v428
    %v2316 = vunpack.c.l.b16 %v429
    %v2317 = vunpack.c.h.b16 %v429
    %v2318 = vunpack.c.l.b16 %v430
    %v2319 = vunpack.c.h.b16 %v430
    %v2320 = vunpack.c.l.b16 %v431
    %v2321 = vunpack.c.h.b16 %v431
    %v2322 = vunpack.c.l.b16 %v432
    %v2323 = vunpack.c.h.b16 %v432
    %v2324 = vunpack.c.l.b16 %v433
    %v2325 = vunpack.c.h.b16 %v433
    %v2326 = vunpack.c.l.b16 %v434
    %v2327 = vunpack.c.h.b16 %v434
    %v2328 = vunpack.c.l.b16 %v435
    %v2329 = vunpack.c.h.b16 %v435
    %v2330 = vunpack.c.l.b16 %v436
    %v2331 = vunpack.c.h.b16 %v436
    %v2332 = vunpack.c.l.b16 %v437
    %v2333 = vunpack.c.h.b16 %v437
    %v2334 = vunpack.c.l.b16 %v438
    %v2335 = vunpack.c.h.b16 %v438
    %v2336 = vunpack.c.l.b16 %v439
    %v2337 = vunpack.c.h.b16 %v439
    %v2338 = vunpack.c.l.b16 %v440
    %v2339 = vunpack.c.h.b16 %v440
    %v2340 = vunpack.c.l.b16 %v441
    %v2341 = vunpack.c.h.b16 %v441
    %v2342 = vunpack.c.l.b16 %v442
    %v2343 = vunpack.c.h.b16 %v442
    %v2344 = vunpack.c.l.b16 %v443
    %v2345 = vunpack.c.h.b16 %v443
    %v2346 = vunpack.c.l.b16 %v444
    %v2347 = vunpack.c.h.b16 %v444
    %v2348 = vunpack.c.l.b16 %v445
    %v2349 = vunpack.c.h.b16 %v445
    %v2350 = vunpack.c.l.b16 %v446
    %v2351 = vunpack.c.h.b16 %v446
    %v2352 = vunpack.c.l.b16 %v447
    %v2353 = vunpack.c.h.b16 %v447
    %v2354 = vunpack.c.l.b16 %v448
    %v2355 = vunpack.c.h.b16 %v448
    %v2356 = vunpack.c.l.b16 %v449
    %v2357 = vunpack.c.h.b16 %v449
    %v2358 = vunpack.c.l.b16 %v450
    %v2359 = vunpack.c.h.b16 %v450
    %v2360 = vunpack.c.l.b16 %v451
    %v2361 = vunpack.c.h.b16 %v451
    %v2362 = vunpack.c.l.b16 %v452
    %v2363 = vunpack.c.h.b16 %v452
    %v2364 = vunpack.c.l.b16 %v453
    %v2365 = vunpack.c.h.b16 %v453
    %v2366 = vunpack.c.l.b16 %v454
    %v2367 = vunpack.c.h.b16 %v454
    %v2368 = vunpack.c.l.b16 %v455
    %v2369 = vunpack.c.h.b16 %v455
    %v2370 = vunpack.c.l.b16 %v456
    %v2371 = vunpack.c.h.b16 %v456
    %v2372 = vunpack.c.l.b16 %v457
    %v2373 = vunpack.c.h.b16 %v457
    %v2374 = vunpack.c.l.b16 %v458
    %v2375 = vunpack.c.h.b16 %v458
    %v2376 = vunpack.c.l.b16 %v459
    %v2377 = vunpack.c.h.b16 %v459
    %v2378 = vunpack.c.l.b16 %v460
    %v2379 = vunpack.c.h.b16 %v460
    %v2380 = vunpack.c.l.b16 %v461
    %v2381 = vunpack.c.h.b16 %v461
    %v2382 = vunpack.c.l.b16 %v462
    %v2383 = vunpack.c.h.b16 %v462
    %v2384 = vunpack.c.l.b16 %v463
    %v2385 = vunpack.c.h.b16 %v463
    %v2386 = vunpack.c.l.b16 %v464
    %v2387 = vunpack.c.h.b16 %v464
    %v2388 = vunpack.c.l.b16 %v465
    %v2389 = vunpack.c.h.b16 %v465
    %v2390 = vunpack.c.l.b16 %v466
    %v2391 = vunpack.c.h.b16 %v466
    %v2392 = vunpack.c.l.b16 %v467
    %v2393 = vunpack.c.h.b16 %v467
    %v2394 = vunpack.c.l.b16 %v468
    %v2395 = vunpack.c.h.b16 %v468
    %v2396 = vunpack.c.l.b16 %v469
    %v2397 = vunpack.c.h.b16 %v469
    %v2398 = vunpack.c.l.b16 %v470
    %v2399 = vunpack.c.h.b16 %v470
    %v2400 = vunpack.c.l.b16 %v471
    %v2401 = vunpack.c.h.b16 %v471
    %v2402 = vunpack.c.l.b16 %v472
    %v2403 = vunpack.c.h.b16 %v472
    %v2404 = vunpack.c.l.b16 %v473
    %v2405 = vunpack.c.h.b16 %v473
    %v2406 = vunpack.c.l.b16 %v474
    %v2407 = vunpack.c.h.b16 %v474
    %v2408 = vunpack.c.l.b16 %v475
    %v2409 = vunpack.c.h.b16 %v475
    %v2410 = vunpack.c.l.b16 %v476
    %v2411 = vunpack.c.h.b16 %v476
    %v2412 = vunpack.c.l.b16 %v477
    %v2413 = vunpack.c.h.b16 %v477
    %v2414 = vunpack.c.l.b16 %v478
    %v2415 = vunpack.c.h.b16 %v478
    %v2416 = vunpack.c.l.b16 %v479
    %v2417 = vunpack.c.h.b16 %v479
    %v2418 = vunpack.c.l.b16 %v480
    %v2419 = vunpack.c.h.b16 %v480
    %v2420 = vunpack.c.l.b16 %v481
    %v2421 = vunpack.c.h.b16 %v481
    %v2422 = vunpack.c.l.b16 %v482
    %v2423 = vunpack.c.h.b16 %v482
    %v2424 = vunpack.c.l.b16 %v483
    %v2425 = vunpack.c.h.b16 %v483
    %v2426 = vunpack.c.l.b16 %v484
    %v2427 = vunpack.c.h.b16 %v484
    %v2428 = vunpack.c.l.b16 %v485
    %v2429 = vunpack.c.h.b16 %v485
    %v2430 = vunpack.c.l.b16 %v486
    %v2431 = vunpack.c.h.b16 %v486
    %v2432 = vunpack.c.l.b16 %v487
    %v2433 = vunpack.c.h.b16 %v487
    %v2434 = vunpack.c.l.b16 %v488
    %v2435 = vunpack.c.h.b16 %v488
    %v2436 = vunpack.c.l.b16 %v489
    %v2437 = vunpack.c.h.b16 %v489
    %v2438 = vunpack.c.l.b16 %v490
    %v2439 = vunpack.c.h.b16 %v490
    %v2440 = vunpack.c.l.b16 %v491
    %v2441 = vunpack.c.h.b16 %v491
    %v2442 = vunpack.c.l.b16 %v492
    %v2443 = vunpack.c.h.b16 %v492
    %v2444 = vunpack.c.l.b16 %v493
    %v2445 = vunpack.c.h.b16 %v493
    %v2446 = vunpack.c.l.b16 %v494
    %v2447 = vunpack.c.h.b16 %v494
    %v2448 = vunpack.c.l.b16 %v495
    %v2449 = vunpack.c.h.b16 %v495
    %v2450 = vunpack.c.l.b16 %v496
    %v2451 = vunpack.c.h.b16 %v496
    %v2452 = vunpack.c.l.b16 %v497
    %v2453 = vunpack.c.h.b16 %v497
    %v2454 = vunpack.c.l.b16 %v498
    %v2455 = vunpack.c.h.b16 %v498
    %v2456 = vunpack.c.l.b16 %v499
    %v2457 = vunpack.c.h.b16 %v499
    %v2458 = vunpack.c.l.b16 %v500
    %v2459 = vunpack.c.h.b16 %v500
    %v2460 = vunpack.c.l.b16 %v501
    %v2461 = vunpack.c.h.b16 %v501
    %v2462 = vunpack.c.l.b16 %v502
    %v2463 = vunpack.c.h.b16 %v502
    %v2464 = vunpack.c.l.b16 %v503
    %v2465 = vunpack.c.h.b16 %v503
    %v2466 = vunpack.c.l.b16 %v504
    %v2467 = vunpack.c.h.b16 %v504
    %v2468 = vunpack.c.l.b16 %v505
    %v2469 = vunpack.c.h.b16 %v505
    %v2470 = vunpack.c.l.b16 %v506
    %v2471 = vunpack.c.h.b16 %v506
    %v2472 = vunpack.c.l.b16 %v507
    %v2473 = vunpack.c.h.b16 %v507
    %v2474 = vunpack.c.l.b16 %v508
    %v2475 = vunpack.c.h.b16 %v508
    %v2476 = vunpack.c.l.b16 %v509
    %v2477 = vunpack.c.h.b16 %v509
    %v2478 = vunpack.c.l.b16 %v510
    %v2479 = vunpack.c.h.b16 %v510
    %v2480 = vunpack.c.l.b16 %v511
    %v2481 = vunpack.c.h.b16 %v511
    %v2482 = vunpack.c.l.b16 %v512
    %v2483 = vunpack.c.h.b16 %v512
    %v2484 = vunpack.c.l.b16 %v513
    %v2485 = vunpack.c.h.b16 %v513
    %v2486 = vunpack.c.l.b16 %v514
    %v2487 = vunpack.c.h.b16 %v514
    %v2488 = vunpack.c.l.b16 %v515
    %v2489 = vunpack.c.h.b16 %v515
    %v2490 = vpack.c.b16 %v2110, %v2106
    %v2491 = vpack.c.b16 %v2111, %v2107
    %v2492 = vpack.c.b16 %v2112, %v2108
    %v2493 = vpack.c.b16 %v2113, %v2109
    %v2494 = vpack.c.b16 %v2118, %v2114
    %v2495 = vpack.c.b16 %v2119, %v2115
    %v2496 = vpack.c.b16 %v2120, %v2116
    %v2497 = vpack.c.b16 %v2121, %v2117
    %v2498 = vpack.c.b16 %v2126, %v2122
    %v2499 = vpack.c.b16 %v2127, %v2123
    %v2500 = vpack.c.b16 %v2128, %v2124
    %v2501 = vpack.c.b16 %v2129, %v2125
    %v2502 = vpack.c.b16 %v2134, %v2130
    %v2503 = vpack.c.b16 %v2135, %v2131
    %v2504 = vpack.c.b16 %v2136, %v2132
    %v2505 = vpack.c.b16 %v2137, %v2133
    %v2506 = vpack.c.b16 %v2142, %v2138
    %v2507 = vpack.c.b16 %v2143, %v2139
    %v2508 = vpack.c.b16 %v2144, %v2140
    %v2509 = vpack.c.b16 %v2145, %v2141
    %v2510 = vpack.c.b16 %v2150, %v2146
    %v2511 = vpack.c.b16 %v2151, %v2147
    %v2512 = vpack.c.b16 %v2152, %v2148
    %v2513 = vpack.c.b16 %v2153, %v2149
    %v2514 = vpack.c.b16 %v2158, %v2154
    %v2515 = vpack.c.b16 %v2159, %v2155
    %v2516 = vpack.c.b16 %v2160, %v2156
    %v2517 = vpack.c.b16 %v2161, %v2157
    %v2518 = vpack.c.b16 %v2166, %v2162
    %v2519 = vpack.c.b16 %v2167, %v2163
    %v2520 = vpack.c.b16 %v2168, %v2164
    %v2521 = vpack.c.b16 %v2169, %v2165
    %v2522 = vpack.c.b16 %v2174, %v2170
    %v2523 = vpack.c.b16 %v2175, %v2171
    %v2524 = vpack.c.b16 %v2176, %v2172
    %v2525 = vpack.c.b16 %v2177, %v2173
    %v2526 = vpack.c.b16 %v2182, %v2178
    %v2527 = vpack.c.b16 %v2183, %v2179
    %v2528 = vpack.c.b16 %v2184, %v2180
    %v2529 = vpack.c.b16 %v2185, %v2181
    %v2530 = vpack.c.b16 %v2190, %v2186
    %v2531 = vpack.c.b16 %v2191, %v2187
    %v2532 = vpack.c.b16 %v2192, %v2188
    %v2533 = vpack.c.b16 %v2193, %v2189
    %v2534 = vpack.c.b16 %v2198, %v2194
    %v2535 = vpack.c.b16 %v2199, %v2195
    %v2536 = vpack.c.b16 %v2200, %v2196
    %v2537 = vpack.c.b16 %v2201, %v2197
    %v2538 = vpack.c.b16 %v2206, %v2202
    %v2539 = vpack.c.b16 %v2207, %v2203
    %v2540 = vpack.c.b16 %v2208, %v2204
    %v2541 = vpack.c.b16 %v2209, %v2205
    %v2542 = vpack.c.b16 %v2214, %v2210
    %v2543 = vpack.c.b16 %v2215, %v2211
    %v2544 = vpack.c.b16 %v2216, %v2212
    %v2545 = vpack.c.b16 %v2217, %v2213
    %v2546 = vpack.c.b16 %v2222, %v2218
    %v2547 = vpack.c.b16 %v2223, %v2219
    %v2548 = vpack.c.b16 %v2224, %v2220
    %v2549 = vpack.c.b16 %v2225, %v2221
    %v2550 = vpack.c.b16 %v2230, %v2226
    %v2551 = vpack.c.b16 %v2231, %v2227
    %v2552 = vpack.c.b16 %v2232, %v2228
    %v2553 = vpack.c.b16 %v2233, %v2229
    %v2554 = vpack.c.b16 %v2238, %v2234
    %v2555 = vpack.c.b16 %v2239, %v2235
    %v2556 = vpack.c.b16 %v2240, %v2236
    %v2557 = vpack.c.b16 %v2241, %v2237
    %v2558 = vpack.c.b16 %v2246, %v2242
    %v2559 = vpack.c.b16 %v2247, %v2243
    %v2560 = vpack.c.b16 %v2248, %v2244
    %v2561 = vpack.c.b16 %v2249, %v2245
    %v2562 = vpack.c.b16 %v2254, %v2250
    %v2563 = vpack.c.b16 %v2255, %v2251
    %v2564 = vpack.c.b16 %v2256, %v2252
    %v2565 = vpack.c.b16 %v2257, %v2253
    %v2566 = vpack.c.b16 %v2262, %v2258
    %v2567 = vpack.c.b16 %v2263, %v2259
    %v2568 = vpack.c.b16 %v2264, %v2260
    %v2569 = vpack.c.b16 %v2265, %v2261
    %v2570 = vpack.c.b16 %v2270, %v2266
    %v2571 = vpack.c.b16 %v2271, %v2267
    %v2572 = vpack.c.b16 %v2272, %v2268
    %v2573 = vpack.c.b16 %v2273, %v2269
    %v2574 = vpack.c.b16 %v2278, %v2274
    %v2575 = vpack.c.b16 %v2279, %v2275
    %v2576 = vpack.c.b16 %v2280, %v2276
    %v2577 = vpack.c.b16 %v2281, %v2277
    %v2578 = vpack.c.b16 %v2286, %v2282
    %v2579 = vpack.c.b16 %v2287, %v2283
    %v2580 = vpack.c.b16 %v2288, %v2284
    %v2581 = vpack.c.b16 %v2289, %v2285
    %v2582 = vpack.c.b16 %v2294, %v2290
    %v2583 = vpack.c.b16 %v2295, %v2291
    %v2584 = vpack.c.b16 %v2296, %v2292
    %v2585 = vpack.c.b16 %v2297, %v2293
    %v2586 = vpack.c.b16 %v2302, %v2298
    %v2587 = vpack.c.b16 %v2303, %v2299
    %v2588 = vpack.c.b16 %v2304, %v2300
    %v2589 = vpack.c.b16 %v2305, %v2301
    %v2590 = vpack.c.b16 %v2310, %v2306
    %v2591 = vpack.c.b16 %v2311, %v2307
    %v2592 = vpack.c.b16 %v2312, %v2308
    %v2593 = vpack.c.b16 %v2313, %v2309
    %v2594 = vpack.c.b16 %v2318, %v2314
    %v2595 = vpack.c.b16 %v2319, %v2315
    %v2596 = vpack.c.b16 %v2320, %v2316
    %v2597 = vpack.c.b16 %v2321, %v2317
    %v2598 = vpack.c.b16 %v2326, %v2322
    %v2599 = vpack.c.b16 %v2327, %v2323
    %v2600 = vpack.c.b16 %v2328, %v2324
    %v2601 = vpack.c.b16 %v2329, %v2325
    %v2602 = vpack.c.b16 %v2334, %v2330
    %v2603 = vpack.c.b16 %v2335, %v2331
    %v2604 = vpack.c.b16 %v2336, %v2332
    %v2605 = vpack.c.b16 %v2337, %v2333
    %v2606 = vpack.c.b16 %v2342, %v2338
    %v2607 = vpack.c.b16 %v2343, %v2339
    %v2608 = vpack.c.b16 %v2344, %v2340
    %v2609 = vpack.c.b16 %v2345, %v2341
    %v2610 = vpack.c.b16 %v2350, %v2346
    %v2611 = vpack.c.b16 %v2351, %v2347
    %v2612 = vpack.c.b16 %v2352, %v2348
    %v2613 = vpack.c.b16 %v2353, %v2349
    %v2614 = vpack.c.b16 %v2358, %v2354
    %v2615 = vpack.c.b16 %v2359, %v2355
    %v2616 = vpack.c.b16 %v2360, %v2356
    %v2617 = vpack.c.b16 %v2361, %v2357
    %v2618 = vpack.c.b16 %v2366, %v2362
    %v2619 = vpack.c.b16 %v2367, %v2363
    %v2620 = vpack.c.b16 %v2368, %v2364
    %v2621 = vpack.c.b16 %v2369, %v2365
    %v2622 = vpack.c.b16 %v2374, %v2370
    %v2623 = vpack.c.b16 %v2375, %v2371
    %v2624 = vpack.c.b16 %v2376, %v2372
    %v2625 = vpack.c.b16 %v2377, %v2373
    %v2626 = vpack.c.b16 %v2382, %v2378
    %v2627 = vpack.c.b16 %v2383, %v2379
    %v2628 = vpack.c.b16 %v2384, %v2380
    %v2629 = vpack.c.b16 %v2385, %v2381
    %v2630 = vpack.c.b16 %v2390, %v2386
    %v2631 = vpack.c.b16 %v2391, %v2387
    %v2632 = vpack.c.b16 %v2392, %v2388
    %v2633 = vpack.c.b16 %v2393, %v2389
    %v2634 = vpack.c.b16 %v2398, %v2394
    %v2635 = vpack.c.b16 %v2399, %v2395
    %v2636 = vpack.c.b16 %v2400, %v2396
    %v2637 = vpack.c.b16 %v2401, %v2397
    %v2638 = vpack.c.b16 %v2406, %v2402
    %v2639 = vpack.c.b16 %v2407, %v2403
    %v2640 = vpack.c.b16 %v2408, %v2404
    %v2641 = vpack.c.b16 %v2409, %v2405
    %v2642 = vpack.c.b16 %v2414, %v2410
    %v2643 = vpack.c.b16 %v2415, %v2411
    %v2644 = vpack.c.b16 %v2416, %v2412
    %v2645 = vpack.c.b16 %v2417, %v2413
    %v2646 = vpack.c.b16 %v2422, %v2418
    %v2647 = vpack.c.b16 %v2423, %v2419
    %v2648 = vpack.c.b16 %v2424, %v2420
    %v2649 = vpack.c.b16 %v2425, %v2421
    %v2650 = vpack.c.b16 %v2430, %v2426
    %v2651 = vpack.c.b16 %v2431, %v2427
    %v2652 = vpack.c.b16 %v2432, %v2428
    %v2653 = vpack.c.b16 %v2433, %v2429
    %v2654 = vpack.c.b16 %v2438, %v2434
    %v2655 = vpack.c.b16 %v2439, %v2435
    %v2656 = vpack.c.b16 %v2440, %v2436
    %v2657 = vpack.c.b16 %v2441, %v2437
    %v2658 = vpack.c.b16 %v2446, %v2442
    %v2659 = vpack.c.b16 %v2447, %v2443
    %v2660 = vpack.c.b16 %v2448, %v2444
    %v2661 = vpack.c.b16 %v2449, %v2445
    %v2662 = vpack.c.b16 %v2454, %v2450
    %v2663 = vpack.c.b16 %v2455, %v2451
    %v2664 = vpack.c.b16 %v2456, %v2452
    %v2665 = vpack.c.b16 %v2457, %v2453
    %v2666 = vpack.c.b16 %v2462, %v2458
    %v2667 = vpack.c.b16 %v2463, %v2459
    %v2668 = vpack.c.b16 %v2464, %v2460
    %v2669 = vpack.c.b16 %v2465, %v2461
    %v2670 = vpack.c.b16 %v2470, %v2466
    %v2671 = vpack.c.b16 %v2471, %v2467
    %v2672 = vpack.c.b16 %v2472, %v2468
    %v2673 = vpack.c.b16 %v2473, %v2469
    %v2674 = vpack.c.b16 %v2478, %v2474
    %v2675 = vpack.c.b16 %v2479, %v2475
    %v2676 = vpack.c.b16 %v2480, %v2476
    %v2677 = vpack.c.b16 %v2481, %v2477
    %v2678 = vpack.c.b16 %v2486, %v2482
    %v2679 = vpack.c.b16 %v2487, %v2483
    %v2680 = vpack.c.b16 %v2488, %v2484
    %v2681 = vpack.c.b16 %v2489, %v2485
    %2874 = vmatprep.subr.bf16.mxu0 %v2491
    %2875 = vmatpush1.bf16.msra.mxu0 %v2490
    %2876 = vmatprep.subr.bf16.mxu0 %v2495
    %2877 = vmatpush1.bf16.msra.mxu0 %v2494
    %2878 = vmatprep.subr.bf16.mxu0 %v2499
    %2879 = vmatpush1.bf16.msra.mxu0 %v2498
    %2880 = vmatprep.subr.bf16.mxu0 %v2503
    %2881 = vmatpush1.bf16.msra.mxu0 %v2502
    %2882 = vmatprep.subr.bf16.mxu0 %v2507
    %2883 = vmatpush1.bf16.msra.mxu0 %v2506
    %2884 = vmatprep.subr.bf16.mxu0 %v2511
    %2885 = vmatpush1.bf16.msra.mxu0 %v2510
    %2886 = vmatprep.subr.bf16.mxu0 %v2515
    %2887 = vmatpush1.bf16.msra.mxu0 %v2514
    %2888 = vmatprep.subr.bf16.mxu0 %v2519
    %2889 = vmatpush1.bf16.msra.mxu0 %v2518
    %2890 = vmatprep.subr.bf16.mxu0 %v2523
    %2891 = vmatpush1.bf16.msra.mxu0 %v2522
    %2892 = vmatprep.subr.bf16.mxu0 %v2527
    %2893 = vmatpush1.bf16.msra.mxu0 %v2526
    %2894 = vmatprep.subr.bf16.mxu0 %v2531
    %2895 = vmatpush1.bf16.msra.mxu0 %v2530
    %2896 = vmatprep.subr.bf16.mxu0 %v2535
    %2897 = vmatpush1.bf16.msra.mxu0 %v2534
    %2898 = vmatprep.subr.bf16.mxu0 %v2539
    %2899 = vmatpush1.bf16.msra.mxu0 %v2538
    %2900 = vmatprep.subr.bf16.mxu0 %v2543
    %2901 = vmatpush1.bf16.msra.mxu0 %v2542
    %2902 = vmatprep.subr.bf16.mxu0 %v2547
    %2903 = vmatpush1.bf16.msra.mxu0 %v2546
    %2904 = vmatprep.subr.bf16.mxu0 %v2551
    %2905 = vmatpush1.bf16.msra.mxu0 %v2550
    %2906 = vmatprep.mubr.bf16.mxu0 %v164
    %2907 = vmatmul.mubr.bf16.gmra.mrb[0].mxu0 %v163
    %v2908 = vpop.f32.mrb[0].mxu0
    %v2909 = vadd.f32 %v1785, %v2908
    %v2910 = vpop.f32.mrb[0].mxu0
    %v2911 = vadd.f32 %v1787, %v2910
    %v2912 = vpop.f32.mrb[0].mxu0
    %v2913 = vpop.f32.mrb[0].mxu0
    %2914 = vdwg.mxu0
    %2915 = vmatprep.subr.bf16.mxu0 %v2555
    %2916 = vmatpush1.bf16.msra.mxu0 %v2554
    %2917 = vmatprep.subr.bf16.mxu0 %v2559
    %2918 = vmatpush1.bf16.msra.mxu0 %v2558
    %2919 = vmatprep.subr.bf16.mxu0 %v2563
    %2920 = vmatpush1.bf16.msra.mxu0 %v2562
    %2921 = vmatprep.subr.bf16.mxu0 %v2567
    %2922 = vmatpush1.bf16.msra.mxu0 %v2566
    %2923 = vmatprep.subr.bf16.mxu0 %v2571
    %2924 = vmatpush1.bf16.msra.mxu0 %v2570
    %2925 = vmatprep.subr.bf16.mxu0 %v2575
    %2926 = vmatpush1.bf16.msra.mxu0 %v2574
    %2927 = vmatprep.subr.bf16.mxu0 %v2579
    %2928 = vmatpush1.bf16.msra.mxu0 %v2578
    %2929 = vmatprep.subr.bf16.mxu0 %v2583
    %2930 = vmatpush1.bf16.msra.mxu0 %v2582
    %2931 = vmatprep.subr.bf16.mxu0 %v2587
    %2932 = vmatpush1.bf16.msra.mxu0 %v2586
    %2933 = vmatprep.subr.bf16.mxu0 %v2591
    %2934 = vmatpush1.bf16.msra.mxu0 %v2590
    %2935 = vmatprep.subr.bf16.mxu0 %v2595
    %2936 = vmatpush1.bf16.msra.mxu0 %v2594
    %2937 = vmatprep.subr.bf16.mxu0 %v2599
    %2938 = vmatpush1.bf16.msra.mxu0 %v2598
    %2939 = vmatprep.subr.bf16.mxu0 %v2603
    %2940 = vmatpush1.bf16.msra.mxu0 %v2602
    %2941 = vmatprep.subr.bf16.mxu0 %v2607
    %2942 = vmatpush1.bf16.msra.mxu0 %v2606
    %2943 = vmatprep.subr.bf16.mxu0 %v2611
    %2944 = vmatpush1.bf16.msra.mxu0 %v2610
    %2945 = vmatprep.subr.bf16.mxu0 %v2615
    %2946 = vmatpush1.bf16.msra.mxu0 %v2614
    %2947 = vmatprep.mubr.bf16.mxu0 %v166
    %2948 = vmatmul.mubr.bf16.gmra.mrb[0].mxu0 %v165
    %v2949 = vpop.f32.mrb[0].mxu0
    %v2950 = vadd.f32 %v2909, %v2949
    %v2951 = vpop.f32.mrb[0].mxu0
    %v2952 = vadd.f32 %v2911, %v2951
    %v2953 = vpop.f32.mrb[0].mxu0
    %v2954 = vpop.f32.mrb[0].mxu0
    %2955 = vdwg.mxu0
    %2956 = vmatprep.subr.bf16.mxu0 %v2619
    %2957 = vmatpush1.bf16.msra.mxu0 %v2618
    %2958 = vmatprep.subr.bf16.mxu0 %v2623
    %2959 = vmatpush1.bf16.msra.mxu0 %v2622
    %2960 = vmatprep.subr.bf16.mxu0 %v2627
    %2961 = vmatpush1.bf16.msra.mxu0 %v2626
    %2962 = vmatprep.subr.bf16.mxu0 %v2631
    %2963 = vmatpush1.bf16.msra.mxu0 %v2630
    %2964 = vmatprep.subr.bf16.mxu0 %v2635
    %2965 = vmatpush1.bf16.msra.mxu0 %v2634
    %2966 = vmatprep.subr.bf16.mxu0 %v2639
    %2967 = vmatpush1.bf16.msra.mxu0 %v2638
    %2968 = vmatprep.subr.bf16.mxu0 %v2643
    %2969 = vmatpush1.bf16.msra.mxu0 %v2642
    %2970 = vmatprep.subr.bf16.mxu0 %v2647
    %2971 = vmatpush1.bf16.msra.mxu0 %v2646
    %2972 = vmatprep.subr.bf16.mxu0 %v2651
    %2973 = vmatpush1.bf16.msra.mxu0 %v2650
    %2974 = vmatprep.subr.bf16.mxu0 %v2655
    %2975 = vmatpush1.bf16.msra.mxu0 %v2654
    %2976 = vmatprep.subr.bf16.mxu0 %v2659
    %2977 = vmatpush1.bf16.msra.mxu0 %v2658
    %2978 = vmatprep.subr.bf16.mxu0 %v2663
    %2979 = vmatpush1.bf16.msra.mxu0 %v2662
    %2980 = vmatprep.subr.bf16.mxu0 %v2667
    %2981 = vmatpush1.bf16.msra.mxu0 %v2666
    %2982 = vmatprep.subr.bf16.mxu0 %v2671
    %2983 = vmatpush1.bf16.msra.mxu0 %v2670
    %2984 = vmatprep.subr.bf16.mxu0 %v2675
    %2985 = vmatpush1.bf16.msra.mxu0 %v2674
    %2986 = vmatprep.subr.bf16.mxu0 %v2679
    %2987 = vmatpush1.bf16.msra.mxu0 %v2678
    %2988 = vmatprep.mubr.bf16.mxu0 %v168
    %2989 = vmatmul.mubr.bf16.gmra.mrb[0].mxu0 %v167
    %v2990 = vpop.f32.mrb[0].mxu0
    %v2991 = vadd.f32 %v2950, %v2990
    %v2992 = vpop.f32.mrb[0].mxu0
    %v2993 = vadd.f32 %v2952, %v2992
    %v2994 = vpop.f32.mrb[0].mxu0
    %v2995 = vpop.f32.mrb[0].mxu0
    %2996 = vdwg.mxu0
    %2997 = vmatprep.subr.bf16.mxu0 %v2493
    %2998 = vmatpush1.bf16.msra.mxu0 %v2492
    %2999 = vmatprep.subr.bf16.mxu0 %v2497
    %3000 = vmatpush1.bf16.msra.mxu0 %v2496
    %3001 = vmatprep.subr.bf16.mxu0 %v2501
    %3002 = vmatpush1.bf16.msra.mxu0 %v2500
    %3003 = vmatprep.subr.bf16.mxu0 %v2505
    %3004 = vmatpush1.bf16.msra.mxu0 %v2504
    %3005 = vmatprep.subr.bf16.mxu0 %v2509
    %3006 = vmatpush1.bf16.msra.mxu0 %v2508
    %3007 = vmatprep.subr.bf16.mxu0 %v2513
    %3008 = vmatpush1.bf16.msra.mxu0 %v2512
    %3009 = vmatprep.subr.bf16.mxu0 %v2517
    %3010 = vmatpush1.bf16.msra.mxu0 %v2516
    %3011 = vmatprep.subr.bf16.mxu0 %v2521
    %3012 = vmatpush1.bf16.msra.mxu0 %v2520
    %3013 = vmatprep.subr.bf16.mxu0 %v2525
    %3014 = vmatpush1.bf16.msra.mxu0 %v2524
    %3015 = vmatprep.subr.bf16.mxu0 %v2529
    %3016 = vmatpush1.bf16.msra.mxu0 %v2528
    %3017 = vmatprep.subr.bf16.mxu0 %v2533
    %3018 = vmatpush1.bf16.msra.mxu0 %v2532
    %3019 = vmatprep.subr.bf16.mxu0 %v2537
    %3020 = vmatpush1.bf16.msra.mxu0 %v2536
    %3021 = vmatprep.subr.bf16.mxu0 %v2541
    %3022 = vmatpush1.bf16.msra.mxu0 %v2540
    %3023 = vmatprep.subr.bf16.mxu0 %v2545
    %3024 = vmatpush1.bf16.msra.mxu0 %v2544
    %3025 = vmatprep.subr.bf16.mxu0 %v2549
    %3026 = vmatpush1.bf16.msra.mxu0 %v2548
    %3027 = vmatprep.subr.bf16.mxu0 %v2553
    %3028 = vmatpush1.bf16.msra.mxu0 %v2552
    %3029 = vmatprep.mubr.bf16.mxu0 %v164
    %3030 = vmatmul.mubr.bf16.gmra.mrb[0].mxu0 %v163
    %v3031 = vpop.f32.mrb[0].mxu0
    %v3032 = vadd.f32 %v1908, %v3031
    %v3033 = vpop.f32.mrb[0].mxu0
    %v3034 = vadd.f32 %v1910, %v3033
    %v3035 = vpop.f32.mrb[0].mxu0
    %v3036 = vpop.f32.mrb[0].mxu0
    %3037 = vdwg.mxu0
    %3038 = vmatprep.subr.bf16.mxu0 %v2557
    %3039 = vmatpush1.bf16.msra.mxu0 %v2556
    %3040 = vmatprep.subr.bf16.mxu0 %v2561
    %3041 = vmatpush1.bf16.msra.mxu0 %v2560
    %3042 = vmatprep.subr.bf16.mxu0 %v2565
    %3043 = vmatpush1.bf16.msra.mxu0 %v2564
    %3044 = vmatprep.subr.bf16.mxu0 %v2569
    %3045 = vmatpush1.bf16.msra.mxu0 %v2568
    %3046 = vmatprep.subr.bf16.mxu0 %v2573
    %3047 = vmatpush1.bf16.msra.mxu0 %v2572
    %3048 = vmatprep.subr.bf16.mxu0 %v2577
    %3049 = vmatpush1.bf16.msra.mxu0 %v2576
    %3050 = vmatprep.subr.bf16.mxu0 %v2581
    %3051 = vmatpush1.bf16.msra.mxu0 %v2580
    %3052 = vmatprep.subr.bf16.mxu0 %v2585
    %3053 = vmatpush1.bf16.msra.mxu0 %v2584
    %3054 = vmatprep.subr.bf16.mxu0 %v2589
    %3055 = vmatpush1.bf16.msra.mxu0 %v2588
    %3056 = vmatprep.subr.bf16.mxu0 %v2593
    %3057 = vmatpush1.bf16.msra.mxu0 %v2592
    %3058 = vmatprep.subr.bf16.mxu0 %v2597
    %3059 = vmatpush1.bf16.msra.mxu0 %v2596
    %3060 = vmatprep.subr.bf16.mxu0 %v2601
    %3061 = vmatpush1.bf16.msra.mxu0 %v2600
    %3062 = vmatprep.subr.bf16.mxu0 %v2605
    %3063 = vmatpush1.bf16.msra.mxu0 %v2604
    %3064 = vmatprep.subr.bf16.mxu0 %v2609
    %3065 = vmatpush1.bf16.msra.mxu0 %v2608
    %3066 = vmatprep.subr.bf16.mxu0 %v2613
    %3067 = vmatpush1.bf16.msra.mxu0 %v2612
    %3068 = vmatprep.subr.bf16.mxu0 %v2617
    %3069 = vmatpush1.bf16.msra.mxu0 %v2616
    %3070 = vmatprep.mubr.bf16.mxu0 %v166
    %3071 = vmatmul.mubr.bf16.gmra.mrb[0].mxu0 %v165
    %v3072 = vpop.f32.mrb[0].mxu0
    %v3073 = vadd.f32 %v3032, %v3072
    %v3074 = vpop.f32.mrb[0].mxu0
    %v3075 = vadd.f32 %v3034, %v3074
    %v3076 = vpop.f32.mrb[0].mxu0
    %v3077 = vpop.f32.mrb[0].mxu0
    %3078 = vdwg.mxu0
    %3079 = vmatprep.subr.bf16.mxu0 %v2621
    %3080 = vmatpush1.bf16.msra.mxu0 %v2620
    %3081 = vmatprep.subr.bf16.mxu0 %v2625
    %3082 = vmatpush1.bf16.msra.mxu0 %v2624
    %3083 = vmatprep.subr.bf16.mxu0 %v2629
    %3084 = vmatpush1.bf16.msra.mxu0 %v2628
    %3085 = vmatprep.subr.bf16.mxu0 %v2633
    %3086 = vmatpush1.bf16.msra.mxu0 %v2632
    %3087 = vmatprep.subr.bf16.mxu0 %v2637
    %3088 = vmatpush1.bf16.msra.mxu0 %v2636
    %3089 = vmatprep.subr.bf16.mxu0 %v2641
    %3090 = vmatpush1.bf16.msra.mxu0 %v2640
    %3091 = vmatprep.subr.bf16.mxu0 %v2645
    %3092 = vmatpush1.bf16.msra.mxu0 %v2644
    %3093 = vmatprep.subr.bf16.mxu0 %v2649
    %3094 = vmatpush1.bf16.msra.mxu0 %v2648
    %3095 = vmatprep.subr.bf16.mxu0 %v2653
    %3096 = vmatpush1.bf16.msra.mxu0 %v2652
    %3097 = vmatprep.subr.bf16.mxu0 %v2657
    %3098 = vmatpush1.bf16.msra.mxu0 %v2656
    %3099 = vmatprep.subr.bf16.mxu0 %v2661
    %3100 = vmatpush1.bf16.msra.mxu0 %v2660
    %3101 = vmatprep.subr.bf16.mxu0 %v2665
    %3102 = vmatpush1.bf16.msra.mxu0 %v2664
    %3103 = vmatprep.subr.bf16.mxu0 %v2669
    %3104 = vmatpush1.bf16.msra.mxu0 %v2668
    %3105 = vmatprep.subr.bf16.mxu0 %v2673
    %3106 = vmatpush1.bf16.msra.mxu0 %v2672
    %3107 = vmatprep.subr.bf16.mxu0 %v2677
    %3108 = vmatpush1.bf16.msra.mxu0 %v2676
    %3109 = vmatprep.subr.bf16.mxu0 %v2681
    %3110 = vmatpush1.bf16.msra.mxu0 %v2680
    %3111 = vmatprep.mubr.bf16.mxu0 %v168
    %3112 = vmatmul.mubr.bf16.gmra.mrb[0].mxu0 %v167
    %v3113 = vpop.f32.mrb[0].mxu0
    %v3114 = vadd.f32 %v3073, %v3113
    %v3115 = vpop.f32.mrb[0].mxu0
    %v3116 = vadd.f32 %v3075, %v3115
    %v3117 = vpop.f32.mrb[0].mxu0
    %v3118 = vpop.f32.mrb[0].mxu0
    %3119 = vdwg.mxu0
    %v3120 = vld [vmem:[#allocation11] sm:$0xff]
    %v3121 = vld [vmem:[#allocation11 + $0x8] sm:$0xff]
    %v3122 = vld [vmem:[#allocation11 + $0x10] sm:$0xff]
    %v3123 = vld [vmem:[#allocation11 + $0x18] sm:$0xff]
    %v3124 = vld [vmem:[#allocation11 + $0x20] sm:$0xff]
    %v3125 = vld [vmem:[#allocation11 + $0x28] sm:$0xff]
    %v3126 = vld [vmem:[#allocation11 + $0x30] sm:$0xff]
    %v3127 = vld [vmem:[#allocation11 + $0x38] sm:$0xff]
    %v3128 = vld [vmem:[#allocation11 + $0x40] sm:$0xff]
    %v3129 = vld [vmem:[#allocation11 + $0x48] sm:$0xff]
    %v3130 = vld [vmem:[#allocation11 + $0x50] sm:$0xff]
    %v3131 = vld [vmem:[#allocation11 + $0x58] sm:$0xff]
    %v3132 = vld [vmem:[#allocation11 + $0x60] sm:$0xff]
    %v3133 = vld [vmem:[#allocation11 + $0x68] sm:$0xff]
    %v3134 = vld [vmem:[#allocation11 + $0x70] sm:$0xff]
    %v3135 = vld [vmem:[#allocation11 + $0x78] sm:$0xff]
    %v3136 = vld [vmem:[#allocation11 + $0x80] sm:$0xff]
    %v3137 = vld [vmem:[#allocation11 + $0x88] sm:$0xff]
    %v3138 = vld [vmem:[#allocation11 + $0x90] sm:$0xff]
    %v3139 = vld [vmem:[#allocation11 + $0x98] sm:$0xff]
    %v3140 = vld [vmem:[#allocation11 + $0xa0] sm:$0xff]
    %v3141 = vld [vmem:[#allocation11 + $0xa8] sm:$0xff]
    %v3142 = vld [vmem:[#allocation11 + $0xb0] sm:$0xff]
    %v3143 = vld [vmem:[#allocation11 + $0xb8] sm:$0xff]
    %v3144 = vld [vmem:[#allocation11 + $0xc0] sm:$0xff]
    %v3145 = vld [vmem:[#allocation11 + $0xc8] sm:$0xff]
    %v3146 = vld [vmem:[#allocation11 + $0xd0] sm:$0xff]
    %v3147 = vld [vmem:[#allocation11 + $0xd8] sm:$0xff]
    %v3148 = vld [vmem:[#allocation11 + $0xe0] sm:$0xff]
    %v3149 = vld [vmem:[#allocation11 + $0xe8] sm:$0xff]
    %v3150 = vld [vmem:[#allocation11 + $0xf0] sm:$0xff]
    %v3151 = vld [vmem:[#allocation11 + $0xf8] sm:$0xff]
    %v3184 = vunpack.c.l.b16 %v3120
    %v3185 = vunpack.c.h.b16 %v3120
    %v3186 = vunpack.c.l.b16 %v3121
    %v3187 = vunpack.c.h.b16 %v3121
    %v3188 = vunpack.c.l.b16 %v3122
    %v3189 = vunpack.c.h.b16 %v3122
    %v3190 = vunpack.c.l.b16 %v3123
    %v3191 = vunpack.c.h.b16 %v3123
    %v3192 = vunpack.c.l.b16 %v3124
    %v3193 = vunpack.c.h.b16 %v3124
    %v3194 = vunpack.c.l.b16 %v3125
    %v3195 = vunpack.c.h.b16 %v3125
    %v3196 = vunpack.c.l.b16 %v3126
    %v3197 = vunpack.c.h.b16 %v3126
    %v3198 = vunpack.c.l.b16 %v3127
    %v3199 = vunpack.c.h.b16 %v3127
    %v3200 = vunpack.c.l.b16 %v3128
    %v3201 = vunpack.c.h.b16 %v3128
    %v3202 = vunpack.c.l.b16 %v3129
    %v3203 = vunpack.c.h.b16 %v3129
    %v3204 = vunpack.c.l.b16 %v3130
    %v3205 = vunpack.c.h.b16 %v3130
    %v3206 = vunpack.c.l.b16 %v3131
    %v3207 = vunpack.c.h.b16 %v3131
    %v3208 = vunpack.c.l.b16 %v3132
    %v3209 = vunpack.c.h.b16 %v3132
    %v3210 = vunpack.c.l.b16 %v3133
    %v3211 = vunpack.c.h.b16 %v3133
    %v3212 = vunpack.c.l.b16 %v3134
    %v3213 = vunpack.c.h.b16 %v3134
    %v3214 = vunpack.c.l.b16 %v3135
    %v3215 = vunpack.c.h.b16 %v3135
    %v3216 = vunpack.c.l.b16 %v3136
    %v3217 = vunpack.c.h.b16 %v3136
    %v3218 = vunpack.c.l.b16 %v3137
    %v3219 = vunpack.c.h.b16 %v3137
    %v3220 = vunpack.c.l.b16 %v3138
    %v3221 = vunpack.c.h.b16 %v3138
    %v3222 = vunpack.c.l.b16 %v3139
    %v3223 = vunpack.c.h.b16 %v3139
    %v3224 = vunpack.c.l.b16 %v3140
    %v3225 = vunpack.c.h.b16 %v3140
    %v3226 = vunpack.c.l.b16 %v3141
    %v3227 = vunpack.c.h.b16 %v3141
    %v3228 = vunpack.c.l.b16 %v3142
    %v3229 = vunpack.c.h.b16 %v3142
    %v3230 = vunpack.c.l.b16 %v3143
    %v3231 = vunpack.c.h.b16 %v3143
    %v3232 = vunpack.c.l.b16 %v3144
    %v3233 = vunpack.c.h.b16 %v3144
    %v3234 = vunpack.c.l.b16 %v3145
    %v3235 = vunpack.c.h.b16 %v3145
    %v3236 = vunpack.c.l.b16 %v3146
    %v3237 = vunpack.c.h.b16 %v3146
    %v3238 = vunpack.c.l.b16 %v3147
    %v3239 = vunpack.c.h.b16 %v3147
    %v3240 = vunpack.c.l.b16 %v3148
    %v3241 = vunpack.c.h.b16 %v3148
    %v3242 = vunpack.c.l.b16 %v3149
    %v3243 = vunpack.c.h.b16 %v3149
    %v3244 = vunpack.c.l.b16 %v3150
    %v3245 = vunpack.c.h.b16 %v3150
    %v3246 = vunpack.c.l.b16 %v3151
    %v3247 = vunpack.c.h.b16 %v3151
    %v3248 = vpack.c.b16 %v3188, %v3184
    %v3249 = vpack.c.b16 %v3189, %v3185
    %v3250 = vpack.c.b16 %v3190, %v3186
    %v3251 = vpack.c.b16 %v3191, %v3187
    %v3252 = vpack.c.b16 %v3196, %v3192
    %v3253 = vpack.c.b16 %v3197, %v3193
    %v3254 = vpack.c.b16 %v3198, %v3194
    %v3255 = vpack.c.b16 %v3199, %v3195
    %v3256 = vpack.c.b16 %v3204, %v3200
    %v3257 = vpack.c.b16 %v3205, %v3201
    %v3258 = vpack.c.b16 %v3206, %v3202
    %v3259 = vpack.c.b16 %v3207, %v3203
    %v3260 = vpack.c.b16 %v3212, %v3208
    %v3261 = vpack.c.b16 %v3213, %v3209
    %v3262 = vpack.c.b16 %v3214, %v3210
    %v3263 = vpack.c.b16 %v3215, %v3211
    %v3264 = vpack.c.b16 %v3220, %v3216
    %v3265 = vpack.c.b16 %v3221, %v3217
    %v3266 = vpack.c.b16 %v3222, %v3218
    %v3267 = vpack.c.b16 %v3223, %v3219
    %v3268 = vpack.c.b16 %v3228, %v3224
    %v3269 = vpack.c.b16 %v3229, %v3225
    %v3270 = vpack.c.b16 %v3230, %v3226
    %v3271 = vpack.c.b16 %v3231, %v3227
    %v3272 = vpack.c.b16 %v3236, %v3232
    %v3273 = vpack.c.b16 %v3237, %v3233
    %v3274 = vpack.c.b16 %v3238, %v3234
    %v3275 = vpack.c.b16 %v3239, %v3235
    %v3276 = vpack.c.b16 %v3244, %v3240
    %v3277 = vpack.c.b16 %v3245, %v3241
    %v3278 = vpack.c.b16 %v3246, %v3242
    %v3279 = vpack.c.b16 %v3247, %v3243
    %3312 = vmatprep.subr.bf16.mxu0 %v3249
    %3313 = vmatpush1.bf16.msra.mxu0 %v3248
    %3314 = vmatprep.subr.bf16.mxu0 %v3253
    %3315 = vmatpush1.bf16.msra.mxu0 %v3252
    %3316 = vmatprep.subr.bf16.mxu0 %v3257
    %3317 = vmatpush1.bf16.msra.mxu0 %v3256
    %3318 = vmatprep.subr.bf16.mxu0 %v3261
    %3319 = vmatpush1.bf16.msra.mxu0 %v3260
    %3320 = vmatprep.subr.bf16.mxu0 %v3265
    %3321 = vmatpush1.bf16.msra.mxu0 %v3264
    %3322 = vmatprep.subr.bf16.mxu0 %v3269
    %3323 = vmatpush1.bf16.msra.mxu0 %v3268
    %3324 = vmatprep.subr.bf16.mxu0 %v3273
    %3325 = vmatpush1.bf16.msra.mxu0 %v3272
    %3326 = vmatprep.subr.bf16.mxu0 %v3277
    %3327 = vmatpush1.bf16.msra.mxu0 %v3276
    %3328 = vmatprep.subr.bf16.mxu0 0
    %3329 = vmatpush1.bf16.msra.mxu0 0
    %3330 = vmatprep.subr.bf16.mxu0 0
    %3331 = vmatpush1.bf16.msra.mxu0 0
    %3332 = vmatprep.subr.bf16.mxu0 0
    %3333 = vmatpush1.bf16.msra.mxu0 0
    %3334 = vmatprep.subr.bf16.mxu0 0
    %3335 = vmatpush1.bf16.msra.mxu0 0
    %3336 = vmatprep.subr.bf16.mxu0 0
    %3337 = vmatpush1.bf16.msra.mxu0 0
    %3338 = vmatprep.subr.bf16.mxu0 0
    %3339 = vmatpush1.bf16.msra.mxu0 0
    %3340 = vmatprep.subr.bf16.mxu0 0
    %3341 = vmatpush1.bf16.msra.mxu0 0
    %3342 = vmatprep.subr.bf16.mxu0 0
    %3343 = vmatpush1.bf16.msra.mxu0 0
    %3344 = vmatprep.mubr.bf16.mxu0 0
    %3345 = vmatmul.mubr.bf16.gmra.mrb[0].mxu0 %v323
    %v3346 = vpop.f32.mrb[0].mxu0
    %v3347 = vadd.f32 0.0, %v3346
    %v3348 = vpop.f32.mrb[0].mxu0
    %v3349 = vadd.f32 0.0, %v3348
    %v3350 = vpop.f32.mrb[0].mxu0
    %v3351 = vpop.f32.mrb[0].mxu0
    %3352 = vdwg.mxu0
    %3353 = vmatprep.subr.bf16.mxu0 %v3251
    %3354 = vmatpush1.bf16.msra.mxu0 %v3250
    %3355 = vmatprep.subr.bf16.mxu0 %v3255
    %3356 = vmatpush1.bf16.msra.mxu0 %v3254
    %3357 = vmatprep.subr.bf16.mxu0 %v3259
    %3358 = vmatpush1.bf16.msra.mxu0 %v3258
    %3359 = vmatprep.subr.bf16.mxu0 %v3263
    %3360 = vmatpush1.bf16.msra.mxu0 %v3262
    %3361 = vmatprep.subr.bf16.mxu0 %v3267
    %3362 = vmatpush1.bf16.msra.mxu0 %v3266
    %3363 = vmatprep.subr.bf16.mxu0 %v3271
    %3364 = vmatpush1.bf16.msra.mxu0 %v3270
    %3365 = vmatprep.subr.bf16.mxu0 %v3275
    %3366 = vmatpush1.bf16.msra.mxu0 %v3274
    %3367 = vmatprep.subr.bf16.mxu0 %v3279
    %3368 = vmatpush1.bf16.msra.mxu0 %v3278
    %3369 = vmatprep.subr.bf16.mxu0 0
    %3370 = vmatpush1.bf16.msra.mxu0 0
    %3371 = vmatprep.subr.bf16.mxu0 0
    %3372 = vmatpush1.bf16.msra.mxu0 0
    %3373 = vmatprep.subr.bf16.mxu0 0
    %3374 = vmatpush1.bf16.msra.mxu0 0
    %3375 = vmatprep.subr.bf16.mxu0 0
    %3376 = vmatpush1.bf16.msra.mxu0 0
    %3377 = vmatprep.subr.bf16.mxu0 0
    %3378 = vmatpush1.bf16.msra.mxu0 0
    %3379 = vmatprep.subr.bf16.mxu0 0
    %3380 = vmatpush1.bf16.msra.mxu0 0
    %3381 = vmatprep.subr.bf16.mxu0 0
    %3382 = vmatpush1.bf16.msra.mxu0 0
    %3383 = vmatprep.subr.bf16.mxu0 0
    %3384 = vmatpush1.bf16.msra.mxu0 0
    %3385 = vmatprep.mubr.bf16.mxu0 0
    %3386 = vmatmul.mubr.bf16.gmra.mrb[0].mxu0 %v323
    %v3387 = vpop.f32.mrb[0].mxu0
    %v3388 = vadd.f32 0.0, %v3387
    %v3389 = vpop.f32.mrb[0].mxu0
    %v3390 = vadd.f32 0.0, %v3389
    %v3391 = vpop.f32.mrb[0].mxu0
    %v3392 = vpop.f32.mrb[0].mxu0
    %3393 = vdwg.mxu0
    %v3394 = vadd.f32 %v2991, %v3347
    %v3395 = vadd.f32 %v2993, %v3349
    %v3396 = vadd.f32 %v3114, %v3388
    %v3397 = vadd.f32 %v3116, %v3390
    %v3398 = vld [vmem:[%s7] sm:$0xf]
    %v3400 = vlaneseq
    %v3401 = vshrl.u32 %v3400, 7
    %v3402 = vsub.s32 0, %v3401
    %v3403 = vrot.slane %v3398, %v3402
    %v3404 = vlaneseq
    %v3405 = vshrl.u32 %v3404, 7
    %v3406 = vsub.s32 1, %v3405
    %v3407 = vrot.slane %v3398, %v3406
    %v3408 = vlaneseq
    %v3409 = vshrl.u32 %v3408, 7
    %v3410 = vsub.s32 2, %v3409
    %v3411 = vrot.slane %v3398, %v3410
    %v3412 = vlaneseq
    %v3413 = vshrl.u32 %v3412, 7
    %v3414 = vsub.s32 3, %v3413
    %v3415 = vrot.slane %v3398, %v3414
    %v3420 = vadd.f32 %v3394, %v3403
    %v3421 = vadd.f32 %v3395, %v3407
    %v3422 = vadd.f32 %v3396, %v3411
    %v3423 = vadd.f32 %v3397, %v3415
    %v3424 = vmax.f32 %v3420, 0.0
    %v3425 = vmax.f32 %v3421, 0.0
    %v3426 = vmax.f32 %v3422, 0.0
    %v3427 = vmax.f32 %v3423, 0.0
    %v3428 = vpack.c.bf16 %v3424, %v3424
    %v3429 = vpack.c.bf16 %v3425, %v3425
    %v3430 = vpack.c.bf16 %v3426, %v3426
    %v3431 = vpack.c.bf16 %v3427, %v3427
    %v3432 = vld [vmem:[#allocation13] sm:$0xf]
    %v3433 = vld [vmem:[#allocation13 + $0x4] sm:$0xf]
    %v3434 = vld [vmem:[#allocation13 + $0x8] sm:$0xf]
    %v3435 = vld [vmem:[#allocation13 + $0xc] sm:$0xf]
    %v3436 = vld [vmem:[#allocation13 + $0x10] sm:$0xf]
    %v3437 = vld [vmem:[#allocation13 + $0x14] sm:$0xf]
    %v3438 = vld [vmem:[#allocation13 + $0x18] sm:$0xf]
    %v3439 = vld [vmem:[#allocation13 + $0x1c] sm:$0xf]
    %v3440 = vld [vmem:[#allocation13 + $0x20] sm:$0xf]
    %v3441 = vld [vmem:[#allocation13 + $0x24] sm:$0xf]
    %v3442 = vld [vmem:[#allocation13 + $0x28] sm:$0xf]
    %v3443 = vld [vmem:[#allocation13 + $0x2c] sm:$0xf]
    %v3444 = vld [vmem:[#allocation13 + $0x30] sm:$0xf]
    %v3445 = vld [vmem:[#allocation13 + $0x34] sm:$0xf]
    %v3446 = vld [vmem:[#allocation13 + $0x38] sm:$0xf]
    %v3447 = vld [vmem:[#allocation13 + $0x3c] sm:$0xf]
    %v3448 = vld [vmem:[#allocation13 + $0x40] sm:$0xf]
    %v3449 = vld [vmem:[#allocation13 + $0x44] sm:$0xf]
    %v3450 = vld [vmem:[#allocation13 + $0x48] sm:$0xf]
    %v3451 = vld [vmem:[#allocation13 + $0x4c] sm:$0xf]
    %v3452 = vld [vmem:[#allocation13 + $0x50] sm:$0xf]
    %v3453 = vld [vmem:[#allocation13 + $0x54] sm:$0xf]
    %v3454 = vld [vmem:[#allocation13 + $0x58] sm:$0xf]
    %v3455 = vld [vmem:[#allocation13 + $0x5c] sm:$0xf]
    %v3456 = vld [vmem:[#allocation13 + $0x60] sm:$0xf]
    %v3457 = vld [vmem:[#allocation13 + $0x64] sm:$0xf]
    %v3458 = vld [vmem:[#allocation13 + $0x68] sm:$0xf]
    %v3459 = vld [vmem:[#allocation13 + $0x6c] sm:$0xf]
    %v3460 = vld [vmem:[#allocation13 + $0x70] sm:$0xf]
    %v3461 = vld [vmem:[#allocation13 + $0x74] sm:$0xf]
    %v3462 = vld [vmem:[#allocation13 + $0x78] sm:$0xf]
    %v3463 = vld [vmem:[#allocation13 + $0x7c] sm:$0xf]
    %v3464 = vld [vmem:[#allocation13 + $0x80] sm:$0xf]
    %v3465 = vld [vmem:[#allocation13 + $0x84] sm:$0xf]
    %v3466 = vld [vmem:[#allocation13 + $0x88] sm:$0xf]
    %v3467 = vld [vmem:[#allocation13 + $0x8c] sm:$0xf]
    %v3468 = vld [vmem:[#allocation13 + $0x90] sm:$0xf]
    %v3469 = vld [vmem:[#allocation13 + $0x94] sm:$0xf]
    %v3470 = vld [vmem:[#allocation13 + $0x98] sm:$0xf]
    %v3471 = vld [vmem:[#allocation13 + $0x9c] sm:$0xf]
    %v3472 = vld [vmem:[#allocation13 + $0xa0] sm:$0xf]
    %v3473 = vld [vmem:[#allocation13 + $0xa4] sm:$0xf]
    %v3474 = vld [vmem:[#allocation13 + $0xa8] sm:$0xf]
    %v3475 = vld [vmem:[#allocation13 + $0xac] sm:$0xf]
    %v3476 = vld [vmem:[#allocation13 + $0xb0] sm:$0xf]
    %v3477 = vld [vmem:[#allocation13 + $0xb4] sm:$0xf]
    %v3478 = vld [vmem:[#allocation13 + $0xb8] sm:$0xf]
    %v3479 = vld [vmem:[#allocation13 + $0xbc] sm:$0xf]
    %v3480 = vld [vmem:[#allocation13 + $0xc0] sm:$0xf]
    %v3481 = vld [vmem:[#allocation13 + $0xc4] sm:$0xf]
    %v3482 = vld [vmem:[#allocation13 + $0xc8] sm:$0xf]
    %v3483 = vld [vmem:[#allocation13 + $0xcc] sm:$0xf]
    %v3484 = vld [vmem:[#allocation13 + $0xd0] sm:$0xf]
    %v3485 = vld [vmem:[#allocation13 + $0xd4] sm:$0xf]
    %v3486 = vld [vmem:[#allocation13 + $0xd8] sm:$0xf]
    %v3487 = vld [vmem:[#allocation13 + $0xdc] sm:$0xf]
    %v3488 = vld [vmem:[#allocation13 + $0xe0] sm:$0xf]
    %v3489 = vld [vmem:[#allocation13 + $0xe4] sm:$0xf]
    %v3490 = vld [vmem:[#allocation13 + $0xe8] sm:$0xf]
    %v3491 = vld [vmem:[#allocation13 + $0xec] sm:$0xf]
    %v3492 = vld [vmem:[#allocation13 + $0xf0] sm:$0xf]
    %v3493 = vld [vmem:[#allocation13 + $0xf4] sm:$0xf]
    %v3494 = vld [vmem:[#allocation13 + $0xf8] sm:$0xf]
    %v3495 = vld [vmem:[#allocation13 + $0xfc] sm:$0xf]
    %v3496 = vld [vmem:[%s9] sm:$0x1]
    %v3498 = vlaneseq
    %v3499 = vshrl.u32 %v3498, 7
    %v3500 = vsub.s32 0, %v3499
    %v3501 = vrot.slane %v3496, %v3500
    %v3567 = vunpack.c.l.b16 %v3432
    %v3568 = vunpack.c.l.b16 %v3433
    %v3569 = vunpack.c.l.b16 %v3434
    %v3570 = vunpack.c.l.b16 %v3435
    %v3571 = vunpack.c.l.b16 %v3436
    %v3572 = vunpack.c.l.b16 %v3437
    %v3573 = vunpack.c.l.b16 %v3438
    %v3574 = vunpack.c.l.b16 %v3439
    %v3575 = vunpack.c.l.b16 %v3440
    %v3576 = vunpack.c.l.b16 %v3441
    %v3577 = vunpack.c.l.b16 %v3442
    %v3578 = vunpack.c.l.b16 %v3443
    %v3579 = vunpack.c.l.b16 %v3444
    %v3580 = vunpack.c.l.b16 %v3445
    %v3581 = vunpack.c.l.b16 %v3446
    %v3582 = vunpack.c.l.b16 %v3447
    %v3583 = vunpack.c.l.b16 %v3448
    %v3584 = vunpack.c.l.b16 %v3449
    %v3585 = vunpack.c.l.b16 %v3450
    %v3586 = vunpack.c.l.b16 %v3451
    %v3587 = vunpack.c.l.b16 %v3452
    %v3588 = vunpack.c.l.b16 %v3453
    %v3589 = vunpack.c.l.b16 %v3454
    %v3590 = vunpack.c.l.b16 %v3455
    %v3591 = vunpack.c.l.b16 %v3456
    %v3592 = vunpack.c.l.b16 %v3457
    %v3593 = vunpack.c.l.b16 %v3458
    %v3594 = vunpack.c.l.b16 %v3459
    %v3595 = vunpack.c.l.b16 %v3460
    %v3596 = vunpack.c.l.b16 %v3461
    %v3597 = vunpack.c.l.b16 %v3462
    %v3598 = vunpack.c.l.b16 %v3463
    %v3599 = vunpack.c.l.b16 %v3464
    %v3600 = vunpack.c.l.b16 %v3465
    %v3601 = vunpack.c.l.b16 %v3466
    %v3602 = vunpack.c.l.b16 %v3467
    %v3603 = vunpack.c.l.b16 %v3468
    %v3604 = vunpack.c.l.b16 %v3469
    %v3605 = vunpack.c.l.b16 %v3470
    %v3606 = vunpack.c.l.b16 %v3471
    %v3607 = vunpack.c.l.b16 %v3472
    %v3608 = vunpack.c.l.b16 %v3473
    %v3609 = vunpack.c.l.b16 %v3474
    %v3610 = vunpack.c.l.b16 %v3475
    %v3611 = vunpack.c.l.b16 %v3476
    %v3612 = vunpack.c.l.b16 %v3477
    %v3613 = vunpack.c.l.b16 %v3478
    %v3614 = vunpack.c.l.b16 %v3479
    %v3615 = vunpack.c.l.b16 %v3480
    %v3616 = vunpack.c.l.b16 %v3481
    %v3617 = vunpack.c.l.b16 %v3482
    %v3618 = vunpack.c.l.b16 %v3483
    %v3619 = vunpack.c.l.b16 %v3484
    %v3620 = vunpack.c.l.b16 %v3485
    %v3621 = vunpack.c.l.b16 %v3486
    %v3622 = vunpack.c.l.b16 %v3487
    %v3623 = vunpack.c.l.b16 %v3488
    %v3624 = vunpack.c.l.b16 %v3489
    %v3625 = vunpack.c.l.b16 %v3490
    %v3626 = vunpack.c.l.b16 %v3491
    %v3627 = vunpack.c.l.b16 %v3492
    %v3628 = vunpack.c.l.b16 %v3493
    %v3629 = vunpack.c.l.b16 %v3494
    %v3630 = vunpack.c.l.b16 %v3495
    %v3631 = vpack.c.b16 %v3568, %v3567
    %v3632 = vpack.c.b16 %v3570, %v3569
    %v3633 = vpack.c.b16 %v3572, %v3571
    %v3634 = vpack.c.b16 %v3574, %v3573
    %v3635 = vpack.c.b16 %v3576, %v3575
    %v3636 = vpack.c.b16 %v3578, %v3577
    %v3637 = vpack.c.b16 %v3580, %v3579
    %v3638 = vpack.c.b16 %v3582, %v3581
    %v3639 = vpack.c.b16 %v3584, %v3583
    %v3640 = vpack.c.b16 %v3586, %v3585
    %v3641 = vpack.c.b16 %v3588, %v3587
    %v3642 = vpack.c.b16 %v3590, %v3589
    %v3643 = vpack.c.b16 %v3592, %v3591
    %v3644 = vpack.c.b16 %v3594, %v3593
    %v3645 = vpack.c.b16 %v3596, %v3595
    %v3646 = vpack.c.b16 %v3598, %v3597
    %v3647 = vpack.c.b16 %v3600, %v3599
    %v3648 = vpack.c.b16 %v3602, %v3601
    %v3649 = vpack.c.b16 %v3604, %v3603
    %v3650 = vpack.c.b16 %v3606, %v3605
    %v3651 = vpack.c.b16 %v3608, %v3607
    %v3652 = vpack.c.b16 %v3610, %v3609
    %v3653 = vpack.c.b16 %v3612, %v3611
    %v3654 = vpack.c.b16 %v3614, %v3613
    %v3655 = vpack.c.b16 %v3616, %v3615
    %v3656 = vpack.c.b16 %v3618, %v3617
    %v3657 = vpack.c.b16 %v3620, %v3619
    %v3658 = vpack.c.b16 %v3622, %v3621
    %v3659 = vpack.c.b16 %v3624, %v3623
    %v3660 = vpack.c.b16 %v3626, %v3625
    %v3661 = vpack.c.b16 %v3628, %v3627
    %v3662 = vpack.c.b16 %v3630, %v3629
    %3695 = vmatprep.subr.bf16.mxu0 0
    %3696 = vmatpush1.bf16.msra.mxu0 %v3631
    %3697 = vmatprep.subr.bf16.mxu0 0
    %3698 = vmatpush1.bf16.msra.mxu0 %v3632
    %3699 = vmatprep.subr.bf16.mxu0 0
    %3700 = vmatpush1.bf16.msra.mxu0 %v3633
    %3701 = vmatprep.subr.bf16.mxu0 0
    %3702 = vmatpush1.bf16.msra.mxu0 %v3634
    %3703 = vmatprep.subr.bf16.mxu0 0
    %3704 = vmatpush1.bf16.msra.mxu0 %v3635
    %3705 = vmatprep.subr.bf16.mxu0 0
    %3706 = vmatpush1.bf16.msra.mxu0 %v3636
    %3707 = vmatprep.subr.bf16.mxu0 0
    %3708 = vmatpush1.bf16.msra.mxu0 %v3637
    %3709 = vmatprep.subr.bf16.mxu0 0
    %3710 = vmatpush1.bf16.msra.mxu0 %v3638
    %3711 = vmatprep.subr.bf16.mxu0 0
    %3712 = vmatpush1.bf16.msra.mxu0 %v3639
    %3713 = vmatprep.subr.bf16.mxu0 0
    %3714 = vmatpush1.bf16.msra.mxu0 %v3640
    %3715 = vmatprep.subr.bf16.mxu0 0
    %3716 = vmatpush1.bf16.msra.mxu0 %v3641
    %3717 = vmatprep.subr.bf16.mxu0 0
    %3718 = vmatpush1.bf16.msra.mxu0 %v3642
    %3719 = vmatprep.subr.bf16.mxu0 0
    %3720 = vmatpush1.bf16.msra.mxu0 %v3643
    %3721 = vmatprep.subr.bf16.mxu0 0
    %3722 = vmatpush1.bf16.msra.mxu0 %v3644
    %3723 = vmatprep.subr.bf16.mxu0 0
    %3724 = vmatpush1.bf16.msra.mxu0 %v3645
    %3725 = vmatprep.subr.bf16.mxu0 0
    %3726 = vmatpush1.bf16.msra.mxu0 %v3646
    %3727 = vmatprep.mubr.bf16.mxu0 %v3429
    %3728 = vmatmul.mubr.bf16.gmra.mrb[0].mxu0 %v3428
    %v3729 = vpop.f32.mrb[0].mxu0
    %v3730 = vadd.f32 %v3501, %v3729
    %v3731 = vpop.f32.mrb[0].mxu0
    %v3732 = vpop.f32.mrb[0].mxu0
    %v3733 = vpop.f32.mrb[0].mxu0
    %3734 = vdwg.mxu0
    %3735 = vmatprep.subr.bf16.mxu0 0
    %3736 = vmatpush1.bf16.msra.mxu0 %v3647
    %3737 = vmatprep.subr.bf16.mxu0 0
    %3738 = vmatpush1.bf16.msra.mxu0 %v3648
    %3739 = vmatprep.subr.bf16.mxu0 0
    %3740 = vmatpush1.bf16.msra.mxu0 %v3649
    %3741 = vmatprep.subr.bf16.mxu0 0
    %3742 = vmatpush1.bf16.msra.mxu0 %v3650
    %3743 = vmatprep.subr.bf16.mxu0 0
    %3744 = vmatpush1.bf16.msra.mxu0 %v3651
    %3745 = vmatprep.subr.bf16.mxu0 0
    %3746 = vmatpush1.bf16.msra.mxu0 %v3652
    %3747 = vmatprep.subr.bf16.mxu0 0
    %3748 = vmatpush1.bf16.msra.mxu0 %v3653
    %3749 = vmatprep.subr.bf16.mxu0 0
    %3750 = vmatpush1.bf16.msra.mxu0 %v3654
    %3751 = vmatprep.subr.bf16.mxu0 0
    %3752 = vmatpush1.bf16.msra.mxu0 %v3655
    %3753 = vmatprep.subr.bf16.mxu0 0
    %3754 = vmatpush1.bf16.msra.mxu0 %v3656
    %3755 = vmatprep.subr.bf16.mxu0 0
    %3756 = vmatpush1.bf16.msra.mxu0 %v3657
    %3757 = vmatprep.subr.bf16.mxu0 0
    %3758 = vmatpush1.bf16.msra.mxu0 %v3658
    %3759 = vmatprep.subr.bf16.mxu0 0
    %3760 = vmatpush1.bf16.msra.mxu0 %v3659
    %3761 = vmatprep.subr.bf16.mxu0 0
    %3762 = vmatpush1.bf16.msra.mxu0 %v3660
    %3763 = vmatprep.subr.bf16.mxu0 0
    %3764 = vmatpush1.bf16.msra.mxu0 %v3661
    %3765 = vmatprep.subr.bf16.mxu0 0
    %3766 = vmatpush1.bf16.msra.mxu0 %v3662
    %3767 = vmatprep.mubr.bf16.mxu0 %v3431
    %3768 = vmatmul.mubr.bf16.gmra.mrb[0].mxu0 %v3430
    %v3769 = vpop.f32.mrb[0].mxu0
    %v3770 = vadd.f32 %v3730, %v3769
    %v3771 = vpop.f32.mrb[0].mxu0
    %v3772 = vpop.f32.mrb[0].mxu0
    %v3773 = vpop.f32.mrb[0].mxu0
    %3774 = vdwg.mxu0
    %v3775 = vpack.c.bf16 %v3770, %v3770
    %3776 = vst [vmem:[#allocation14] sm:$0x1] %v3775
    // Predicated region
    $region70: #{tpu_custom_call.1} parent=1 // pred_check
      _
    $region71: #{tpu_custom_call.1} parent=1 // pred_check_branch
      %3778 = sbr.rel (0) target = $region73
    $region72: #{tpu_custom_call.1} parent=1 // pred_region
      %s3780 = ssub.s32 16, 16
      %3781 = vsyncadd [#allocation4], %s3780
      %s3783 = sshll.u32 [#allocation14], 4
      %s3784 = int_to_ptr.vmem [resolvable:$true] %s3783
      %3786 = dma.vmem_to_hbm [thread:$0]  %s3784, 16, %s10, [#allocation4]
    $region73: #{tpu_custom_call.1} parent=1 // pred_fallthru
      _
    // Predicated region
    $region74: #{tpu_custom_call.1} parent=1 // pred_check
      _
    $region75: #{tpu_custom_call.1} parent=1 // pred_check_branch
      %3788 = sbr.rel (0) target = $region77
    $region76: #{tpu_custom_call.1} parent=1 // pred_region
      %3789 = dma.done [#allocation4], 16
    $region77: #{tpu_custom_call.1} parent=1 // pred_fallthru
      _
    %3790 = vsyncpa [#allocation3], 1
    %3791 = vsyncpa [#allocation6], 1
    %3792 = vsyncpa [#allocation9], 1
    %3793 = vsyncpa [#allocation12], 1
    %3794 = vsyncpa [#allocation4], 1

</llo_original>
